<compile_context>
chip_gen: v6e
topology: v6e:2x2x1
jax: 0.10.0
libtpu: 0.0.40
codegen_flags: <defaults>
</compile_context>

<pallas_src>
import functools

import jax
import jax.numpy as jnp
from jax import lax
from jax.experimental import pallas as pl
from jax.experimental.pallas import tpu as pltpu


def _knn_kernel(xtest_ref, xtrain_t_ref, xtrsq_ref, ytrain_ref, out_ref,
                best_d_ref, best_lab_ref, *, k, bf16_cross):
    j = pl.program_id(1)

    # Fresh running top-k state at the start of every N sweep.
    @pl.when(j == 0)
    def _():
        best_d_ref[...] = jnp.full(best_d_ref.shape, jnp.inf, jnp.float32)
        best_lab_ref[...] = jnp.zeros(best_lab_ref.shape, jnp.float32)

    xt = xtest_ref[...]          # (tm, D)  test-row tile
    xr_t = xtrain_t_ref[...]     # (D, tn)  lane-dense train chunk
    xr_sq = xtrsq_ref[...]       # (1, tn)  ||x_train||^2 (+inf on padded cols)
    y = ytrain_ref[...]          # (1, tn)  labels

    if bf16_cross:
        xt_mm, xr_mm = xt.astype(jnp.bfloat16), xr_t.astype(jnp.bfloat16)
    else:
        xt_mm, xr_mm = xt, xr_t
    # Squared-distance surrogate: ||b||^2 - 2 a.b  (MXU).
    cross = lax.dot_general(xt_mm, xr_mm, (((1,), (0,)), ((), ())),
                            preferred_element_type=jnp.float32)        # (tm, tn)
    d_chunk = xr_sq - 2.0 * cross

    tm, tn = d_chunk.shape
    ncol = tn + k
    # Candidate set = this chunk's columns followed by the carried top-k
    # (carry appended at a 128-aligned lane offset: the big slab is not shifted).
    d_all = jnp.concatenate([d_chunk, best_d_ref[...]], axis=-1)       # (tm, tn+k)
    lab_all = jnp.concatenate(
        [jnp.broadcast_to(y, (tm, tn)), best_lab_ref[...]], axis=-1)   # (tm, tn+k)
    col = lax.broadcasted_iota(jnp.int32, (tm, ncol), 1)

    new_d, new_lab = [], []
    for _ in range(k):                         # k is small: fully unrolled
        mn = jnp.min(d_all, axis=-1, keepdims=True)                    # (tm, 1)
        eq = d_all == mn
        idx = jnp.min(jnp.where(eq, col, ncol), axis=-1, keepdims=True)
        sel = col == idx                                               # exact one-hot
        lab = jnp.sum(jnp.where(sel, lab_all, 0.0), axis=-1, keepdims=True)
        new_d.append(mn)
        new_lab.append(lab)
        d_all = jnp.where(sel, jnp.inf, d_all)

    new_d = jnp.concatenate(new_d, axis=-1)            # (tm, k)
    new_lab = jnp.concatenate(new_lab, axis=-1)        # (tm, k)
    best_d_ref[...] = new_d
    best_lab_ref[...] = new_lab

    # Final chunk: mean of the k nearest labels, emitted lane-dense as (1, tm)
    # via a tiny (1,k) x (tm,k)^T contraction (no transpose of the result).
    @pl.when(j == pl.num_programs(1) - 1)
    def _():
        ones = jnp.ones((1, k), jnp.float32)
        pred = lax.dot_general(ones, new_lab, (((1,), (1,)), ((), ())),
                               preferred_element_type=jnp.float32)     # (1, tm)
        out_ref[...] = pred * (1.0 / k)


def knn_regressor_forward(x_train, x_test, y_train, *, n_neighbors=5,
                          tm=128, tn=512, bf16_cross=False):
    """KNN regression predictions for x_test. Returns shape (M,) float32."""
    n, d = x_train.shape
    m, d2 = x_test.shape
    if d != d2:
        raise ValueError("feature dims of x_train and x_test must match")
    k = int(n_neighbors)
    if not (1 <= k <= n):
        raise ValueError("n_neighbors must be in [1, n_train]")
    if tm % 128 != 0:
        raise ValueError("tm must be a multiple of 128")

    x_train = x_train.astype(jnp.float32)
    x_test = x_test.astype(jnp.float32)
    y_train = y_train.astype(jnp.float32)

    # N-chunk width: multiple of 128, no wider than the lane-padded train set.
    tn = max(128, (int(tn) // 128) * 128)
    tn = min(tn, pl.cdiv(n, 128) * 128)
    if k > tn:
        raise ValueError("n_neighbors must not exceed the N tile width")

    g_m = pl.cdiv(m, tm)
    g_n = pl.cdiv(n, tn)
    m_pad = g_m * tm
    n_pad = g_n * tn

    if m_pad != m:
        x_test = jnp.pad(x_test, ((0, m_pad - m), (0, 0)))

    # Lane-dense (D, N) train matrix, precomputed squared norms, (1, N) labels.
    x_train_t = x_train.T
    xr_sq = jnp.sum(x_train * x_train, axis=-1)
    if n_pad != n:
        x_train_t = jnp.pad(x_train_t, ((0, 0), (0, n_pad - n)))
        # +inf squared norm => padded columns can never be selected as neighbors.
        xr_sq = jnp.pad(xr_sq, (0, n_pad - n), constant_values=float("inf"))
        y_train = jnp.pad(y_train, (0, n_pad - n))
    xr_sq2d = xr_sq.reshape(1, n_pad)
    y2d = y_train.reshape(1, n_pad)

    # Train-side inputs are grid-invariant when there is a single N chunk:
    # don't double-buffer them (halves the largest VMEM consumer).
    def chunk_spec(shape, index_map):
        if g_n == 1 and hasattr(pl, "Buffered"):
            try:
                return pl.BlockSpec(shape, index_map,
                                    pipeline_mode=pl.Buffered(1))
            except TypeError:  # older BlockSpec without pipeline_mode kwarg
                pass
        return pl.BlockSpec(shape, index_map)

    # Scoped-VMEM budget: resident blocks + (tm, tn) working slabs, headroom.
    est = (2 * tm * d * 4            # x_test tile (double-buffered)
           + 2 * d * tn * 4          # x_train^T chunk
           + 2 * 2 * 8 * tn * 4      # xr_sq + y chunks (sublane-padded)
           + 2 * 8 * tm * 4          # output tile
           + 2 * tm * 128 * 4        # top-k scratch (lane-padded)
           + 12 * tm * (tn + 128) * 4)  # distance/label/iota/one-hot slabs
    vmem_limit = int(min(64 * 1024 * 1024, max(est, 16 * 1024 * 1024)))

    kernel = functools.partial(_knn_kernel, k=k, bf16_cross=bf16_cross)
    out = pl.pallas_call(
        kernel,
        out_shape=jax.ShapeDtypeStruct((1, m_pad), jnp.float32),
        grid_spec=pltpu.PrefetchScalarGridSpec(
            num_scalar_prefetch=0,
            grid=(g_m, g_n),          # test-row tiles (parallel) x N chunks (reduction)
            in_specs=[
                pl.BlockSpec((tm, d), lambda i, j: (i, 0)),     # X_test tile
                chunk_spec((d, tn), lambda i, j: (0, j)),       # X_train^T chunk
                chunk_spec((1, tn), lambda i, j: (0, j)),       # ||X_train||^2 chunk
                chunk_spec((1, tn), lambda i, j: (0, j)),       # y_train chunk
            ],
            out_specs=pl.BlockSpec((1, tm), lambda i, j: (0, i)),  # lane-dense
            scratch_shapes=[
                pltpu.VMEM((tm, k), jnp.float32),   # running top-k distances
                pltpu.VMEM((tm, k), jnp.float32),   # running top-k labels
            ],
        ),
        compiler_params=pltpu.CompilerParams(
            dimension_semantics=("parallel", "arbitrary"),
            vmem_limit_bytes=vmem_limit),
    )(x_test, x_train_t, xr_sq2d, y2d)

    return out.reshape(m_pad)[:m]


def _knn_reference(x_train, x_test, y_train, n_neighbors=5):
    dist = jnp.sqrt(jnp.maximum(
        jnp.sum(x_test ** 2, -1, keepdims=True)
        + jnp.sum(x_train ** 2, -1)[None, :]
        - 2.0 * x_test @ x_train.T, 0.0))
    _, idx = jax.lax.top_k(-dist, n_neighbors)
    return y_train[idx].mean(axis=-1)


if __name__ == "__main__":
    # Case 1: single N chunk (g_n == 1, single-buffered invariant train inputs).
    k1, k2, k3 = jax.random.split(jax.random.PRNGKey(0), 3)
    n_train, m_test, dim, kk = 128, 8, 32, 5
    x_train = jax.random.normal(k1, (n_train, dim), dtype=jnp.float32)
    x_test = jax.random.normal(k2, (m_test, dim), dtype=jnp.float32)
    y_train = jax.random.normal(k3, (n_train,), dtype=jnp.float32)

    preds = jax.block_until_ready(
        knn_regressor_forward(x_train, x_test, y_train, n_neighbors=kk))
    ref = _knn_reference(x_train, x_test, y_train, n_neighbors=kk)
    assert preds.shape == (m_test,)
    assert jnp.allclose(preds, ref, atol=1e-4, rtol=1e-4), (preds, ref)

    # Case 2: multiple N chunks (streaming top-k across the reduction axis,
    # train-set padding masked via +inf squared norms, test-row padding).
    k4, k5, k6 = jax.random.split(jax.random.PRNGKey(0), 3)
    n_train2, m_test2, dim2 = 200, 10, 16
    x_train2 = jax.random.normal(k4, (n_train2, dim2), dtype=jnp.float32)
    x_test2 = jax.random.normal(k5, (m_test2, dim2), dtype=jnp.float32)
    y_train2 = jax.random.normal(k6, (n_train2,), dtype=jnp.float32)

    preds2 = jax.block_until_ready(
        knn_regressor_forward(x_train2, x_test2, y_train2,
                              n_neighbors=3, tn=128))
    ref2 = _knn_reference(x_train2, x_test2, y_train2, n_neighbors=3)
    assert preds2.shape == (m_test2,)
    assert jnp.allclose(preds2, ref2, atol=1e-4, rtol=1e-4), (preds2, ref2)

    print("KERNEL_OK")
</pallas_src>

<mosaic_0001>
module attributes {stable_mosaic.version = 11 : i64} {
  func.func @_knn_kernel(%arg0: i32, %arg1: i32, %arg2: memref<128x32xf32, #tpu.memory_space<vmem>>, %arg3: memref<32x128xf32, #tpu.memory_space<vmem>>, %arg4: memref<1x128xf32, #tpu.memory_space<vmem>>, %arg5: memref<1x128xf32, #tpu.memory_space<vmem>>, %arg6: memref<1x128xf32, #tpu.memory_space<vmem>>, %arg7: memref<128x5xf32, #tpu.memory_space<vmem>>, %arg8: memref<128x5xf32, #tpu.memory_space<vmem>>) attributes {dimension_semantics = [#tpu.dimension_semantics<parallel>, #tpu.dimension_semantics<arbitrary>], iteration_bounds = array<i64: 1, 1>, scalar_prefetch = 0 : i64, scratch_operands = 2 : i64, tpu.core_type = #tpu.core_type<tc>, window_params = [{transform_indices = @transform_0, window_bounds = array<i64: 128, 32>}, {pipeline_mode = #tpu.pipeline_mode<synchronous>, transform_indices = @transform_1, window_bounds = array<i64: 32, 128>}, {pipeline_mode = #tpu.pipeline_mode<synchronous>, transform_indices = @transform_2, window_bounds = array<i64: 1, 128>}, {pipeline_mode = #tpu.pipeline_mode<synchronous>, transform_indices = @transform_3, window_bounds = array<i64: 1, 128>}, {transform_indices = @transform_4, window_bounds = array<i64: 1, 128>}]} {
    %c0_i32 = arith.constant 0 : i32
    %0 = arith.cmpi eq, %arg1, %c0_i32 : i32
    %1 = arith.extui %0 : i1 to i32
    %c0_i32_0 = arith.constant 0 : i32
    %2 = arith.cmpi ne, %1, %c0_i32_0 : i32
    scf.if %2 {
      %cst_47 = arith.constant 0x7F800000 : f32
      %104 = vector.broadcast %cst_47 : f32 to vector<128x5xf32>
      %c0_48 = arith.constant 0 : index
      %c0_49 = arith.constant 0 : index
      %105 = vector.load %arg7[%c0_48, %c0_49] : memref<128x5xf32, #tpu.memory_space<vmem>>, vector<128x5xf32>
      tpu.vector_store %arg7[%c0_48, %c0_49], %104 {strides = array<i32>} : memref<128x5xf32, #tpu.memory_space<vmem>>, vector<128x5xf32>,
      %cst_50 = arith.constant 0.000000e+00 : f32
      %106 = vector.broadcast %cst_50 : f32 to vector<128x5xf32>
      %c0_51 = arith.constant 0 : index
      %c0_52 = arith.constant 0 : index
      %107 = vector.load %arg8[%c0_51, %c0_52] : memref<128x5xf32, #tpu.memory_space<vmem>>, vector<128x5xf32>
      tpu.vector_store %arg8[%c0_51, %c0_52], %106 {strides = array<i32>} : memref<128x5xf32, #tpu.memory_space<vmem>>, vector<128x5xf32>,
    } else {
    }
    %c0 = arith.constant 0 : index
    %c0_1 = arith.constant 0 : index
    %3 = vector.load %arg2[%c0, %c0_1] : memref<128x32xf32, #tpu.memory_space<vmem>>, vector<128x32xf32>
    %c0_2 = arith.constant 0 : index
    %c0_3 = arith.constant 0 : index
    %4 = vector.load %arg3[%c0_2, %c0_3] : memref<32x128xf32, #tpu.memory_space<vmem>>, vector<32x128xf32>
    %c0_4 = arith.constant 0 : index
    %c0_5 = arith.constant 0 : index
    %5 = vector.load %arg4[%c0_4, %c0_5] : memref<1x128xf32, #tpu.memory_space<vmem>>, vector<1x128xf32>
    %c0_6 = arith.constant 0 : index
    %c0_7 = arith.constant 0 : index
    %6 = vector.load %arg5[%c0_6, %c0_7] : memref<1x128xf32, #tpu.memory_space<vmem>>, vector<1x128xf32>
    %cst = arith.constant dense<0.000000e+00> : vector<128x128xf32>
    %7 = tpu.matmul %3, %4, %cst {dimension_numbers = #tpu.dot_dimension_numbers<[1], [0], [0], [1], [0, 0, 1, 1], [], []>} : vector<128x32xf32>, vector<32x128xf32>, vector<128x128xf32> -> vector<128x128xf32>
    %cst_8 = arith.constant 2.000000e+00 : f32
    %8 = vector.broadcast %cst_8 : f32 to vector<128x128xf32>
    %9 = arith.mulf %8, %7 : vector<128x128xf32>
    %10 = vector.broadcast %5 : vector<1x128xf32> to vector<128x128xf32>
    %11 = arith.subf %10, %9 : vector<128x128xf32>
    %c0_9 = arith.constant 0 : index
    %c0_10 = arith.constant 0 : index
    %12 = vector.load %arg7[%c0_9, %c0_10] : memref<128x5xf32, #tpu.memory_space<vmem>>, vector<128x5xf32>
    %13 = tpu.concatenate %11, %12 in 1 : vector<128x128xf32>, vector<128x5xf32> -> vector<128x133xf32>
    %14 = vector.shape_cast %6 : vector<1x128xf32> to vector<1x128xf32>
    %15 = vector.broadcast %14 : vector<1x128xf32> to vector<128x128xf32>
    %c0_11 = arith.constant 0 : index
    %c0_12 = arith.constant 0 : index
    %16 = vector.load %arg8[%c0_11, %c0_12] : memref<128x5xf32, #tpu.memory_space<vmem>>, vector<128x5xf32>
    %17 = tpu.concatenate %15, %16 in 1 : vector<128x128xf32>, vector<128x5xf32> -> vector<128x133xf32>
    %18 = tpu.iota {dimensions = array<i32: 1>} : vector<128x133xi32>
    %cst_13 = arith.constant dense<0x7F800000> : vector<128xf32>
    %19 = vector.multi_reduction <minimumf>, %13, %cst_13 [1] : vector<128x133xf32> to vector<128xf32>
    %20 = vector.shape_cast %19 : vector<128xf32> to vector<128x1xf32>
    %21 = vector.broadcast %20 : vector<128x1xf32> to vector<128x133xf32>
    %22 = arith.cmpf oeq, %13, %21 : vector<128x133xf32>
    %c133_i32 = arith.constant 133 : i32
    %23 = vector.broadcast %c133_i32 : i32 to vector<128x133xi32>
    %24 = arith.select %22, %18, %23 : vector<128x133xi1>, vector<128x133xi32>
    %cst_14 = arith.constant dense<2147483647> : vector<128xi32>
    %25 = vector.multi_reduction <minsi>, %24, %cst_14 [1] : vector<128x133xi32> to vector<128xi32>
    %26 = vector.shape_cast %25 : vector<128xi32> to vector<128x1xi32>
    %27 = vector.broadcast %26 : vector<128x1xi32> to vector<128x133xi32>
    %28 = arith.cmpi eq, %18, %27 : vector<128x133xi32>
    %cst_15 = arith.constant 0.000000e+00 : f32
    %29 = vector.broadcast %cst_15 : f32 to vector<128x133xf32>
    %30 = arith.select %28, %17, %29 : vector<128x133xi1>, vector<128x133xf32>
    %cst_16 = arith.constant dense<0.000000e+00> : vector<128xf32>
    %31 = vector.multi_reduction <add>, %30, %cst_16 [1] : vector<128x133xf32> to vector<128xf32>
    %32 = vector.shape_cast %31 : vector<128xf32> to vector<128x1xf32>
    %cst_17 = arith.constant 0x7F800000 : f32
    %33 = vector.broadcast %cst_17 : f32 to vector<128x133xf32>
    %34 = arith.select %28, %33, %13 : vector<128x133xi1>, vector<128x133xf32>
    %cst_18 = arith.constant dense<0x7F800000> : vector<128xf32>
    %35 = vector.multi_reduction <minimumf>, %34, %cst_18 [1] : vector<128x133xf32> to vector<128xf32>
    %36 = vector.shape_cast %35 : vector<128xf32> to vector<128x1xf32>
    %37 = vector.broadcast %36 : vector<128x1xf32> to vector<128x133xf32>
    %38 = arith.cmpf oeq, %34, %37 : vector<128x133xf32>
    %c133_i32_19 = arith.constant 133 : i32
    %39 = vector.broadcast %c133_i32_19 : i32 to vector<128x133xi32>
    %40 = arith.select %38, %18, %39 : vector<128x133xi1>, vector<128x133xi32>
    %cst_20 = arith.constant dense<2147483647> : vector<128xi32>
    %41 = vector.multi_reduction <minsi>, %40, %cst_20 [1] : vector<128x133xi32> to vector<128xi32>
    %42 = vector.shape_cast %41 : vector<128xi32> to vector<128x1xi32>
    %43 = vector.broadcast %42 : vector<128x1xi32> to vector<128x133xi32>
    %44 = arith.cmpi eq, %18, %43 : vector<128x133xi32>
    %cst_21 = arith.constant 0.000000e+00 : f32
    %45 = vector.broadcast %cst_21 : f32 to vector<128x133xf32>
    %46 = arith.select %44, %17, %45 : vector<128x133xi1>, vector<128x133xf32>
    %cst_22 = arith.constant dense<0.000000e+00> : vector<128xf32>
    %47 = vector.multi_reduction <add>, %46, %cst_22 [1] : vector<128x133xf32> to vector<128xf32>
    %48 = vector.shape_cast %47 : vector<128xf32> to vector<128x1xf32>
    %cst_23 = arith.constant 0x7F800000 : f32
    %49 = vector.broadcast %cst_23 : f32 to vector<128x133xf32>
    %50 = arith.select %44, %49, %34 : vector<128x133xi1>, vector<128x133xf32>
    %cst_24 = arith.constant dense<0x7F800000> : vector<128xf32>
    %51 = vector.multi_reduction <minimumf>, %50, %cst_24 [1] : vector<128x133xf32> to vector<128xf32>
    %52 = vector.shape_cast %51 : vector<128xf32> to vector<128x1xf32>
    %53 = vector.broadcast %52 : vector<128x1xf32> to vector<128x133xf32>
    %54 = arith.cmpf oeq, %50, %53 : vector<128x133xf32>
    %c133_i32_25 = arith.constant 133 : i32
    %55 = vector.broadcast %c133_i32_25 : i32 to vector<128x133xi32>
    %56 = arith.select %54, %18, %55 : vector<128x133xi1>, vector<128x133xi32>
    %cst_26 = arith.constant dense<2147483647> : vector<128xi32>
    %57 = vector.multi_reduction <minsi>, %56, %cst_26 [1] : vector<128x133xi32> to vector<128xi32>
    %58 = vector.shape_cast %57 : vector<128xi32> to vector<128x1xi32>
    %59 = vector.broadcast %58 : vector<128x1xi32> to vector<128x133xi32>
    %60 = arith.cmpi eq, %18, %59 : vector<128x133xi32>
    %cst_27 = arith.constant 0.000000e+00 : f32
    %61 = vector.broadcast %cst_27 : f32 to vector<128x133xf32>
    %62 = arith.select %60, %17, %61 : vector<128x133xi1>, vector<128x133xf32>
    %cst_28 = arith.constant dense<0.000000e+00> : vector<128xf32>
    %63 = vector.multi_reduction <add>, %62, %cst_28 [1] : vector<128x133xf32> to vector<128xf32>
    %64 = vector.shape_cast %63 : vector<128xf32> to vector<128x1xf32>
    %cst_29 = arith.constant 0x7F800000 : f32
    %65 = vector.broadcast %cst_29 : f32 to vector<128x133xf32>
    %66 = arith.select %60, %65, %50 : vector<128x133xi1>, vector<128x133xf32>
    %cst_30 = arith.constant dense<0x7F800000> : vector<128xf32>
    %67 = vector.multi_reduction <minimumf>, %66, %cst_30 [1] : vector<128x133xf32> to vector<128xf32>
    %68 = vector.shape_cast %67 : vector<128xf32> to vector<128x1xf32>
    %69 = vector.broadcast %68 : vector<128x1xf32> to vector<128x133xf32>
    %70 = arith.cmpf oeq, %66, %69 : vector<128x133xf32>
    %c133_i32_31 = arith.constant 133 : i32
    %71 = vector.broadcast %c133_i32_31 : i32 to vector<128x133xi32>
    %72 = arith.select %70, %18, %71 : vector<128x133xi1>, vector<128x133xi32>
    %cst_32 = arith.constant dense<2147483647> : vector<128xi32>
    %73 = vector.multi_reduction <minsi>, %72, %cst_32 [1] : vector<128x133xi32> to vector<128xi32>
    %74 = vector.shape_cast %73 : vector<128xi32> to vector<128x1xi32>
    %75 = vector.broadcast %74 : vector<128x1xi32> to vector<128x133xi32>
    %76 = arith.cmpi eq, %18, %75 : vector<128x133xi32>
    %cst_33 = arith.constant 0.000000e+00 : f32
    %77 = vector.broadcast %cst_33 : f32 to vector<128x133xf32>
    %78 = arith.select %76, %17, %77 : vector<128x133xi1>, vector<128x133xf32>
    %cst_34 = arith.constant dense<0.000000e+00> : vector<128xf32>
    %79 = vector.multi_reduction <add>, %78, %cst_34 [1] : vector<128x133xf32> to vector<128xf32>
    %80 = vector.shape_cast %79 : vector<128xf32> to vector<128x1xf32>
    %cst_35 = arith.constant 0x7F800000 : f32
    %81 = vector.broadcast %cst_35 : f32 to vector<128x133xf32>
    %82 = arith.select %76, %81, %66 : vector<128x133xi1>, vector<128x133xf32>
    %cst_36 = arith.constant dense<0x7F800000> : vector<128xf32>
    %83 = vector.multi_reduction <minimumf>, %82, %cst_36 [1] : vector<128x133xf32> to vector<128xf32>
    %84 = vector.shape_cast %83 : vector<128xf32> to vector<128x1xf32>
    %85 = vector.broadcast %84 : vector<128x1xf32> to vector<128x133xf32>
    %86 = arith.cmpf oeq, %82, %85 : vector<128x133xf32>
    %c133_i32_37 = arith.constant 133 : i32
    %87 = vector.broadcast %c133_i32_37 : i32 to vector<128x133xi32>
    %88 = arith.select %86, %18, %87 : vector<128x133xi1>, vector<128x133xi32>
    %cst_38 = arith.constant dense<2147483647> : vector<128xi32>
    %89 = vector.multi_reduction <minsi>, %88, %cst_38 [1] : vector<128x133xi32> to vector<128xi32>
    %90 = vector.shape_cast %89 : vector<128xi32> to vector<128x1xi32>
    %91 = vector.broadcast %90 : vector<128x1xi32> to vector<128x133xi32>
    %92 = arith.cmpi eq, %18, %91 : vector<128x133xi32>
    %cst_39 = arith.constant 0.000000e+00 : f32
    %93 = vector.broadcast %cst_39 : f32 to vector<128x133xf32>
    %94 = arith.select %92, %17, %93 : vector<128x133xi1>, vector<128x133xf32>
    %cst_40 = arith.constant dense<0.000000e+00> : vector<128xf32>
    %95 = vector.multi_reduction <add>, %94, %cst_40 [1] : vector<128x133xf32> to vector<128xf32>
    %96 = vector.shape_cast %95 : vector<128xf32> to vector<128x1xf32>
    %97 = tpu.concatenate %20, %36, %52, %68, %84 in 1 : vector<128x1xf32>, vector<128x1xf32>, vector<128x1xf32>, vector<128x1xf32>, vector<128x1xf32> -> vector<128x5xf32>
    %98 = tpu.concatenate %32, %48, %64, %80, %96 in 1 : vector<128x1xf32>, vector<128x1xf32>, vector<128x1xf32>, vector<128x1xf32>, vector<128x1xf32> -> vector<128x5xf32>
    %c0_41 = arith.constant 0 : index
    %c0_42 = arith.constant 0 : index
    %99 = vector.load %arg7[%c0_41, %c0_42] : memref<128x5xf32, #tpu.memory_space<vmem>>, vector<128x5xf32>
    tpu.vector_store %arg7[%c0_41, %c0_42], %97 {strides = array<i32>} : memref<128x5xf32, #tpu.memory_space<vmem>>, vector<128x5xf32>,
    %c0_43 = arith.constant 0 : index
    %c0_44 = arith.constant 0 : index
    %100 = vector.load %arg8[%c0_43, %c0_44] : memref<128x5xf32, #tpu.memory_space<vmem>>, vector<128x5xf32>
    tpu.vector_store %arg8[%c0_43, %c0_44], %98 {strides = array<i32>} : memref<128x5xf32, #tpu.memory_space<vmem>>, vector<128x5xf32>,
    %c0_i32_45 = arith.constant 0 : i32
    %101 = arith.cmpi eq, %arg1, %c0_i32_45 : i32
    %102 = arith.extui %101 : i1 to i32
    %c0_i32_46 = arith.constant 0 : i32
    %103 = arith.cmpi ne, %102, %c0_i32_46 : i32
    scf.if %103 {
      %cst_47 = arith.constant 1.000000e+00 : f32
      %104 = vector.broadcast %cst_47 : f32 to vector<1x5xf32>
      %cst_48 = arith.constant dense<0.000000e+00> : vector<1x128xf32>
      %105 = tpu.matmul %104, %98, %cst_48 {dimension_numbers = #tpu.dot_dimension_numbers<[1], [1], [0], [0], [0, 0, 1, 0], [], []>} : vector<1x5xf32>, vector<128x5xf32>, vector<1x128xf32> -> vector<1x128xf32>
      %cst_49 = arith.constant 2.000000e-01 : f32
      %106 = vector.broadcast %cst_49 : f32 to vector<1x128xf32>
      %107 = arith.mulf %105, %106 : vector<1x128xf32>
      %c0_50 = arith.constant 0 : index
      %c0_51 = arith.constant 0 : index
      %108 = vector.load %arg6[%c0_50, %c0_51] : memref<1x128xf32, #tpu.memory_space<vmem>>, vector<1x128xf32>
      tpu.vector_store %arg6[%c0_50, %c0_51], %107 {strides = array<i32>} : memref<1x128xf32, #tpu.memory_space<vmem>>, vector<1x128xf32>,
    } else {
    }
    return
  }
  func.func @transform_0(%arg0: i32, %arg1: i32) -> (i32, i32) {
    %c0_i32 = arith.constant 0 : i32
    %c0_i32_0 = arith.constant 0 : i32
    return %arg0, %c0_i32 : i32, i32
  }
  func.func @transform_1(%arg0: i32, %arg1: i32) -> (i32, i32) {
    %c0_i32 = arith.constant 0 : i32
    %c0_i32_0 = arith.constant 0 : i32
    return %c0_i32, %arg1 : i32, i32
  }
  func.func @transform_2(%arg0: i32, %arg1: i32) -> (i32, i32) {
    %c0_i32 = arith.constant 0 : i32
    %c0_i32_0 = arith.constant 0 : i32
    return %c0_i32, %arg1 : i32, i32
  }
  func.func @transform_3(%arg0: i32, %arg1: i32) -> (i32, i32) {
    %c0_i32 = arith.constant 0 : i32
    %c0_i32_0 = arith.constant 0 : i32
    return %c0_i32, %arg1 : i32, i32
  }
  func.func @transform_4(%arg0: i32, %arg1: i32) -> (i32, i32) {
    %c0_i32 = arith.constant 0 : i32
    %c0_i32_0 = arith.constant 0 : i32
    return %c0_i32, %arg0 : i32, i32
  }
}

</mosaic_0001>

<llo_original>
// kernel: tpu_custom_call.1
$region0: #{tpu_custom_call.1}
  #allocation0 [shape = 'u32[]', space=smem, size = 0x4, offset = 0x4, fixed_abs, tag = 'smem constant byte address 0x4 - core index']
  #allocation1 [shape = 'u32[144,128]{1,0:T(1,128)}', space=vmem, size = 0x12000, scoped, tag = 'internal scratch']
  #allocation2 [shape = 'f32[128,5]{1,0:T(8,128)}', space=vmem, size = 0x10000, scoped, tag = 'scratch operand']
  #allocation3 [shape = 'f32[128,5]{1,0:T(8,128)}', space=vmem, size = 0x10000, scoped, tag = 'scratch operand']
  %s0 = inlined_call_operand.vmem [shape: f32[128,32], index: 0, kind: input, shape index: {}]
  %s1 = inlined_call_operand.vmem [shape: f32[32,128], index: 1, kind: input, shape index: {}]
  %s2 = inlined_call_operand.vmem [shape: f32[1,128], index: 2, kind: input, shape index: {}]
  %s3 = inlined_call_operand.vmem [shape: f32[1,128], index: 3, kind: input, shape index: {}]
  %s4 = inlined_call_operand.hbm [shape: f32[1,128], index: 4, kind: output, shape index: {}]
  %s5 = sld [smem:[#allocation0]]
  $region34: #{tpu_custom_call.1} parent=0
    _
  %s7 = ssub.s32 1, %s5
  %s8 = scalar_select 0, %s7, %s5
  $region1: #{tpu_custom_call.1} parent=0
    #allocation4 [shape = 'u8[512]{0}', space=vmem, size = 0x400, scoped, tag = 'output window, operand 0, single buffered']
    #allocation5 [shape = 's32[1]{0}', space=sflag, size = 0x4, scoped, tag = 'scoped memory for tpu_custom_call.1']
    %9 = vsyncpa [#allocation5], 0
    // Predicated region
    $region2: #{tpu_custom_call.1} parent=1 // pred_check
      _
    $region3: #{tpu_custom_call.1} parent=1 // pred_check_branch
      %11 = sbr.rel (0) target = $region5
    $region4: #{tpu_custom_call.1} parent=1 // pred_region
      _
    $region5: #{tpu_custom_call.1} parent=1 // pred_fallthru
      _
    // Predicated region
    $region6: #{tpu_custom_call.1} parent=1 // pred_check
      _
    $region7: #{tpu_custom_call.1} parent=1 // pred_check_branch
      %13 = sbr.rel (0) target = $region9
    $region8: #{tpu_custom_call.1} parent=1 // pred_region
      _
    $region9: #{tpu_custom_call.1} parent=1 // pred_fallthru
      _
    // Predicated region
    $region10: #{tpu_custom_call.1} parent=1 // pred_check
      _
    $region11: #{tpu_custom_call.1} parent=1 // pred_check_branch
      %15 = sbr.rel (0) target = $region13
    $region12: #{tpu_custom_call.1} parent=1 // pred_region
      _
    $region13: #{tpu_custom_call.1} parent=1 // pred_fallthru
      _
    // Predicated region
    $region14: #{tpu_custom_call.1} parent=1 // pred_check
      _
    $region15: #{tpu_custom_call.1} parent=1 // pred_check_branch
      %17 = sbr.rel (0) target = $region17
    $region16: #{tpu_custom_call.1} parent=1 // pred_region
      _
    $region17: #{tpu_custom_call.1} parent=1 // pred_fallthru
      _
    %p18 = scmp.eq.s32.totalorder 0, 0
    // Predicated region
    $region18: #{tpu_custom_call.1} parent=1 // pred_check
      %p19 = pneg %p18
    $region19: #{tpu_custom_call.1} parent=1 // pred_check_branch
      %21 = sbr.rel (%p19) target = $region21
    $region20: #{tpu_custom_call.1} parent=1 // pred_region
      %vm22 = vcmask 39936
      %23 = vst.msk [vmem:[#allocation2] sm:$0xff] %vm22, inf
      %24 = vst.msk [vmem:[#allocation2 + $0x8] sm:$0xff] %vm22, inf
      %25 = vst.msk [vmem:[#allocation2 + $0x10] sm:$0xff] %vm22, inf
      %26 = vst.msk [vmem:[#allocation2 + $0x18] sm:$0xff] %vm22, inf
      %27 = vst.msk [vmem:[#allocation2 + $0x20] sm:$0xff] %vm22, inf
      %28 = vst.msk [vmem:[#allocation2 + $0x28] sm:$0xff] %vm22, inf
      %29 = vst.msk [vmem:[#allocation2 + $0x30] sm:$0xff] %vm22, inf
      %30 = vst.msk [vmem:[#allocation2 + $0x38] sm:$0xff] %vm22, inf
      %31 = vst.msk [vmem:[#allocation2 + $0x40] sm:$0xff] %vm22, inf
      %32 = vst.msk [vmem:[#allocation2 + $0x48] sm:$0xff] %vm22, inf
      %33 = vst.msk [vmem:[#allocation2 + $0x50] sm:$0xff] %vm22, inf
      %34 = vst.msk [vmem:[#allocation2 + $0x58] sm:$0xff] %vm22, inf
      %35 = vst.msk [vmem:[#allocation2 + $0x60] sm:$0xff] %vm22, inf
      %36 = vst.msk [vmem:[#allocation2 + $0x68] sm:$0xff] %vm22, inf
      %37 = vst.msk [vmem:[#allocation2 + $0x70] sm:$0xff] %vm22, inf
      %38 = vst.msk [vmem:[#allocation2 + $0x78] sm:$0xff] %vm22, inf
      %39 = vst.msk [vmem:[#allocation3] sm:$0xff] %vm22, 0.0
      %40 = vst.msk [vmem:[#allocation3 + $0x8] sm:$0xff] %vm22, 0.0
      %41 = vst.msk [vmem:[#allocation3 + $0x10] sm:$0xff] %vm22, 0.0
      %42 = vst.msk [vmem:[#allocation3 + $0x18] sm:$0xff] %vm22, 0.0
      %43 = vst.msk [vmem:[#allocation3 + $0x20] sm:$0xff] %vm22, 0.0
      %44 = vst.msk [vmem:[#allocation3 + $0x28] sm:$0xff] %vm22, 0.0
      %45 = vst.msk [vmem:[#allocation3 + $0x30] sm:$0xff] %vm22, 0.0
      %46 = vst.msk [vmem:[#allocation3 + $0x38] sm:$0xff] %vm22, 0.0
      %47 = vst.msk [vmem:[#allocation3 + $0x40] sm:$0xff] %vm22, 0.0
      %48 = vst.msk [vmem:[#allocation3 + $0x48] sm:$0xff] %vm22, 0.0
      %49 = vst.msk [vmem:[#allocation3 + $0x50] sm:$0xff] %vm22, 0.0
      %50 = vst.msk [vmem:[#allocation3 + $0x58] sm:$0xff] %vm22, 0.0
      %51 = vst.msk [vmem:[#allocation3 + $0x60] sm:$0xff] %vm22, 0.0
      %52 = vst.msk [vmem:[#allocation3 + $0x68] sm:$0xff] %vm22, 0.0
      %53 = vst.msk [vmem:[#allocation3 + $0x70] sm:$0xff] %vm22, 0.0
      %54 = vst.msk [vmem:[#allocation3 + $0x78] sm:$0xff] %vm22, 0.0
    $region21: #{tpu_custom_call.1} parent=1 // pred_fallthru
      _
    %v55 = vld [vmem:[%s0] sm:$0xff]
    %v56 = vld [vmem:[%s0 + $0x8] sm:$0xff]
    %v57 = vld [vmem:[%s0 + $0x10] sm:$0xff]
    %v58 = vld [vmem:[%s0 + $0x18] sm:$0xff]
    %v59 = vld [vmem:[%s0 + $0x20] sm:$0xff]
    %v60 = vld [vmem:[%s0 + $0x28] sm:$0xff]
    %v61 = vld [vmem:[%s0 + $0x30] sm:$0xff]
    %v62 = vld [vmem:[%s0 + $0x38] sm:$0xff]
    %v63 = vld [vmem:[%s0 + $0x40] sm:$0xff]
    %v64 = vld [vmem:[%s0 + $0x48] sm:$0xff]
    %v65 = vld [vmem:[%s0 + $0x50] sm:$0xff]
    %v66 = vld [vmem:[%s0 + $0x58] sm:$0xff]
    %v67 = vld [vmem:[%s0 + $0x60] sm:$0xff]
    %v68 = vld [vmem:[%s0 + $0x68] sm:$0xff]
    %v69 = vld [vmem:[%s0 + $0x70] sm:$0xff]
    %v70 = vld [vmem:[%s0 + $0x78] sm:$0xff]
    %v71 = vld [vmem:[%s1] sm:$0xff]
    %v72 = vld [vmem:[%s1 + $0x8] sm:$0xff]
    %v73 = vld [vmem:[%s1 + $0x10] sm:$0xff]
    %v74 = vld [vmem:[%s1 + $0x18] sm:$0xff]
    %v75 = vld [vmem:[%s2] sm:$0x1]
    %v76 = vld [vmem:[%s3] sm:$0x1]
    %vm77 = vcmask 261120
    %v79 = vsel %vm77, %v55, 0
    %v82 = vsel %vm77, %v56, 0
    %v85 = vsel %vm77, %v57, 0
    %v88 = vsel %vm77, %v58, 0
    %v91 = vsel %vm77, %v59, 0
    %v94 = vsel %vm77, %v60, 0
    %v97 = vsel %vm77, %v61, 0
    %v100 = vsel %vm77, %v62, 0
    %v103 = vsel %vm77, %v63, 0
    %v106 = vsel %vm77, %v64, 0
    %v109 = vsel %vm77, %v65, 0
    %v112 = vsel %vm77, %v66, 0
    %v115 = vsel %vm77, %v67, 0
    %v118 = vsel %vm77, %v68, 0
    %v121 = vsel %vm77, %v69, 0
    %v124 = vsel %vm77, %v70, 0
    %126 = vmatprep.subr.mxu0 0.0
    %127 = vmatpush1.msra.mxu0 0.0
    %128 = vmatprep.subr.mxu0 0.0
    %129 = vmatpush1.msra.mxu0 0.0
    %130 = vmatprep.subr.mxu0 0.0
    %131 = vmatpush1.msra.mxu0 0.0
    %132 = vmatprep.subr.mxu0 0.0
    %133 = vmatpush1.msra.mxu0 0.0
    %134 = vmatprep.subr.mxu0 0.0
    %135 = vmatpush1.msra.mxu0 0.0
    %136 = vmatprep.subr.mxu0 0.0
    %137 = vmatpush1.msra.mxu0 0.0
    %138 = vmatprep.subr.mxu0 0.0
    %139 = vmatpush1.msra.mxu0 0.0
    %140 = vmatprep.subr.mxu0 0.0
    %141 = vmatpush1.msra.mxu0 0.0
    %142 = vmatprep.subr.mxu0 0.0
    %143 = vmatpush1.msra.mxu0 0.0
    %144 = vmatprep.subr.mxu0 0.0
    %145 = vmatpush1.msra.mxu0 0.0
    %146 = vmatprep.subr.mxu0 0.0
    %147 = vmatpush1.msra.mxu0 0.0
    %148 = vmatprep.subr.mxu0 0.0
    %149 = vmatpush1.msra.mxu0 0.0
    %150 = vmatprep.subr.mxu0 0.0
    %151 = vmatpush1.msra.mxu0 %v74
    %152 = vmatprep.subr.mxu0 0.0
    %153 = vmatpush1.msra.mxu0 %v73
    %154 = vmatprep.subr.mxu0 0.0
    %155 = vmatpush1.msra.mxu0 %v72
    %156 = vmatprep.subr.mxu0 0.0
    %157 = vmatpush1.msra.mxu0 %v71
    %158 = vmatprep.subr.mxu0 0.0
    %159 = vmatpush2.msra.mxu0 0.0
    %160 = vmatprep.subr.mxu0 0.0
    %161 = vmatpush2.msra.mxu0 0.0
    %162 = vmatprep.subr.mxu0 0.0
    %163 = vmatpush2.msra.mxu0 0.0
    %164 = vmatprep.subr.mxu0 0.0
    %165 = vmatpush2.msra.mxu0 0.0
    %166 = vmatprep.subr.mxu0 0.0
    %167 = vmatpush2.msra.mxu0 0.0
    %168 = vmatprep.subr.mxu0 0.0
    %169 = vmatpush2.msra.mxu0 0.0
    %170 = vmatprep.subr.mxu0 0.0
    %171 = vmatpush2.msra.mxu0 0.0
    %172 = vmatprep.subr.mxu0 0.0
    %173 = vmatpush2.msra.mxu0 0.0
    %174 = vmatprep.subr.mxu0 0.0
    %175 = vmatpush2.msra.mxu0 0.0
    %176 = vmatprep.subr.mxu0 0.0
    %177 = vmatpush2.msra.mxu0 0.0
    %178 = vmatprep.subr.mxu0 0.0
    %179 = vmatpush2.msra.mxu0 0.0
    %180 = vmatprep.subr.mxu0 0.0
    %181 = vmatpush2.msra.mxu0 0.0
    %182 = vmatprep.subr.mxu0 0.0
    %183 = vmatpush2.msra.mxu0 0.0
    %184 = vmatprep.subr.mxu0 0.0
    %185 = vmatpush2.msra.mxu0 0.0
    %186 = vmatprep.subr.mxu0 0.0
    %187 = vmatpush2.msra.mxu0 0.0
    %188 = vmatprep.subr.mxu0 0.0
    %189 = vmatpush2.msra.mxu0 0.0
    %190 = vmatprep.mubr.f32.mxu0 0.0
    %191 = vmatmul.mubr.f32.gmra.mxu0 %v79
    %v192 = vpop.f32.mrf.mxu0
    %v193 = vadd.f32 0.0, %v192
    %v194 = vpop.f32.mrf.mxu0
    %195 = vmatprep.mubr.f32.mxu0 0.0
    %196 = vmatmul.mubr.f32.gmra.mxu0 %v82
    %v197 = vpop.f32.mrf.mxu0
    %v198 = vadd.f32 0.0, %v197
    %v199 = vpop.f32.mrf.mxu0
    %200 = vmatprep.mubr.f32.mxu0 0.0
    %201 = vmatmul.mubr.f32.gmra.mxu0 %v85
    %v202 = vpop.f32.mrf.mxu0
    %v203 = vadd.f32 0.0, %v202
    %v204 = vpop.f32.mrf.mxu0
    %205 = vmatprep.mubr.f32.mxu0 0.0
    %206 = vmatmul.mubr.f32.gmra.mxu0 %v88
    %v207 = vpop.f32.mrf.mxu0
    %v208 = vadd.f32 0.0, %v207
    %v209 = vpop.f32.mrf.mxu0
    %210 = vmatprep.mubr.f32.mxu0 0.0
    %211 = vmatmul.mubr.f32.gmra.mxu0 %v91
    %v212 = vpop.f32.mrf.mxu0
    %v213 = vadd.f32 0.0, %v212
    %v214 = vpop.f32.mrf.mxu0
    %215 = vmatprep.mubr.f32.mxu0 0.0
    %216 = vmatmul.mubr.f32.gmra.mxu0 %v94
    %v217 = vpop.f32.mrf.mxu0
    %v218 = vadd.f32 0.0, %v217
    %v219 = vpop.f32.mrf.mxu0
    %220 = vmatprep.mubr.f32.mxu0 0.0
    %221 = vmatmul.mubr.f32.gmra.mxu0 %v97
    %v222 = vpop.f32.mrf.mxu0
    %v223 = vadd.f32 0.0, %v222
    %v224 = vpop.f32.mrf.mxu0
    %225 = vmatprep.mubr.f32.mxu0 0.0
    %226 = vmatmul.mubr.f32.gmra.mxu0 %v100
    %v227 = vpop.f32.mrf.mxu0
    %v228 = vadd.f32 0.0, %v227
    %v229 = vpop.f32.mrf.mxu0
    %230 = vmatprep.mubr.f32.mxu0 0.0
    %231 = vmatmul.mubr.f32.gmra.mxu0 %v103
    %v232 = vpop.f32.mrf.mxu0
    %v233 = vadd.f32 0.0, %v232
    %v234 = vpop.f32.mrf.mxu0
    %235 = vmatprep.mubr.f32.mxu0 0.0
    %236 = vmatmul.mubr.f32.gmra.mxu0 %v106
    %v237 = vpop.f32.mrf.mxu0
    %v238 = vadd.f32 0.0, %v237
    %v239 = vpop.f32.mrf.mxu0
    %240 = vmatprep.mubr.f32.mxu0 0.0
    %241 = vmatmul.mubr.f32.gmra.mxu0 %v109
    %v242 = vpop.f32.mrf.mxu0
    %v243 = vadd.f32 0.0, %v242
    %v244 = vpop.f32.mrf.mxu0
    %245 = vmatprep.mubr.f32.mxu0 0.0
    %246 = vmatmul.mubr.f32.gmra.mxu0 %v112
    %v247 = vpop.f32.mrf.mxu0
    %v248 = vadd.f32 0.0, %v247
    %v249 = vpop.f32.mrf.mxu0
    %250 = vmatprep.mubr.f32.mxu0 0.0
    %251 = vmatmul.mubr.f32.gmra.mxu0 %v115
    %v252 = vpop.f32.mrf.mxu0
    %v253 = vadd.f32 0.0, %v252
    %v254 = vpop.f32.mrf.mxu0
    %255 = vmatprep.mubr.f32.mxu0 0.0
    %256 = vmatmul.mubr.f32.gmra.mxu0 %v118
    %v257 = vpop.f32.mrf.mxu0
    %v258 = vadd.f32 0.0, %v257
    %v259 = vpop.f32.mrf.mxu0
    %260 = vmatprep.mubr.f32.mxu0 0.0
    %261 = vmatmul.mubr.f32.gmra.mxu0 %v121
    %v262 = vpop.f32.mrf.mxu0
    %v263 = vadd.f32 0.0, %v262
    %v264 = vpop.f32.mrf.mxu0
    %265 = vmatprep.mubr.f32.mxu0 0.0
    %266 = vmatmul.mubr.f32.gmra.mxu0 %v124
    %v267 = vpop.f32.mrf.mxu0
    %v268 = vadd.f32 0.0, %v267
    %v269 = vpop.f32.mrf.mxu0
    %270 = vdwg.mxu0
    %v271 = vmul.f32 %v193, 2.0
    %v272 = vmul.f32 %v198, 2.0
    %v273 = vmul.f32 %v203, 2.0
    %v274 = vmul.f32 %v208, 2.0
    %v275 = vmul.f32 %v213, 2.0
    %v276 = vmul.f32 %v218, 2.0
    %v277 = vmul.f32 %v223, 2.0
    %v278 = vmul.f32 %v228, 2.0
    %v279 = vmul.f32 %v233, 2.0
    %v280 = vmul.f32 %v238, 2.0
    %v281 = vmul.f32 %v243, 2.0
    %v282 = vmul.f32 %v248, 2.0
    %v283 = vmul.f32 %v253, 2.0
    %v284 = vmul.f32 %v258, 2.0
    %v285 = vmul.f32 %v263, 2.0
    %v286 = vmul.f32 %v268, 2.0
    %v288 = vlaneseq
    %v289 = vshrl.u32 %v288, 7
    %v290 = vsub.s32 0, %v289
    %v291 = vrot.slane %v75, %v290
    %v293 = vsub.f32 %v291, %v271
    %v294 = vsub.f32 %v291, %v272
    %v295 = vsub.f32 %v291, %v273
    %v296 = vsub.f32 %v291, %v274
    %v297 = vsub.f32 %v291, %v275
    %v298 = vsub.f32 %v291, %v276
    %v299 = vsub.f32 %v291, %v277
    %v300 = vsub.f32 %v291, %v278
    %v301 = vsub.f32 %v291, %v279
    %v302 = vsub.f32 %v291, %v280
    %v303 = vsub.f32 %v291, %v281
    %v304 = vsub.f32 %v291, %v282
    %v305 = vsub.f32 %v291, %v283
    %v306 = vsub.f32 %v291, %v284
    %v307 = vsub.f32 %v291, %v285
    %v308 = vsub.f32 %v291, %v286
    %v309 = vld [vmem:[#allocation2] sm:$0xff]
    %v310 = vld [vmem:[#allocation2 + $0x8] sm:$0xff]
    %v311 = vld [vmem:[#allocation2 + $0x10] sm:$0xff]
    %v312 = vld [vmem:[#allocation2 + $0x18] sm:$0xff]
    %v313 = vld [vmem:[#allocation2 + $0x20] sm:$0xff]
    %v314 = vld [vmem:[#allocation2 + $0x28] sm:$0xff]
    %v315 = vld [vmem:[#allocation2 + $0x30] sm:$0xff]
    %v316 = vld [vmem:[#allocation2 + $0x38] sm:$0xff]
    %v317 = vld [vmem:[#allocation2 + $0x40] sm:$0xff]
    %v318 = vld [vmem:[#allocation2 + $0x48] sm:$0xff]
    %v319 = vld [vmem:[#allocation2 + $0x50] sm:$0xff]
    %v320 = vld [vmem:[#allocation2 + $0x58] sm:$0xff]
    %v321 = vld [vmem:[#allocation2 + $0x60] sm:$0xff]
    %v322 = vld [vmem:[#allocation2 + $0x68] sm:$0xff]
    %v323 = vld [vmem:[#allocation2 + $0x70] sm:$0xff]
    %v324 = vld [vmem:[#allocation2 + $0x78] sm:$0xff]
    %v326 = vlaneseq
    %v327 = vshrl.u32 %v326, 7
    %v328 = vsub.s32 0, %v327
    %v329 = vrot.slane %v76, %v328
    %v331 = vld [vmem:[#allocation3] sm:$0xff]
    %v332 = vld [vmem:[#allocation3 + $0x8] sm:$0xff]
    %v333 = vld [vmem:[#allocation3 + $0x10] sm:$0xff]
    %v334 = vld [vmem:[#allocation3 + $0x18] sm:$0xff]
    %v335 = vld [vmem:[#allocation3 + $0x20] sm:$0xff]
    %v336 = vld [vmem:[#allocation3 + $0x28] sm:$0xff]
    %v337 = vld [vmem:[#allocation3 + $0x30] sm:$0xff]
    %v338 = vld [vmem:[#allocation3 + $0x38] sm:$0xff]
    %v339 = vld [vmem:[#allocation3 + $0x40] sm:$0xff]
    %v340 = vld [vmem:[#allocation3 + $0x48] sm:$0xff]
    %v341 = vld [vmem:[#allocation3 + $0x50] sm:$0xff]
    %v342 = vld [vmem:[#allocation3 + $0x58] sm:$0xff]
    %v343 = vld [vmem:[#allocation3 + $0x60] sm:$0xff]
    %v344 = vld [vmem:[#allocation3 + $0x68] sm:$0xff]
    %v345 = vld [vmem:[#allocation3 + $0x70] sm:$0xff]
    %v346 = vld [vmem:[#allocation3 + $0x78] sm:$0xff]
    %v347 = vlaneseq
    %v348 = vand.u32 %v347, 127
    %v349 = vadd.s32 %v348, 128
    %vm350 = vcmask 39936
    %v351 = vsel %vm350, %v309, inf
    %v352 = vmin.f32 %v293, %v351
    %353 = vmin.xlane.f32.xlu0 %v352
    %v354 = vpop.xlane.xlu0 %353
    %v355 = vsel %vm350, %v310, inf
    %v356 = vmin.f32 %v294, %v355
    %357 = vmin.xlane.f32.xlu0 %v356
    %v358 = vpop.xlane.xlu0 %357
    %v359 = vsel %vm350, %v311, inf
    %v360 = vmin.f32 %v295, %v359
    %361 = vmin.xlane.f32.xlu0 %v360
    %v362 = vpop.xlane.xlu0 %361
    %v363 = vsel %vm350, %v312, inf
    %v364 = vmin.f32 %v296, %v363
    %365 = vmin.xlane.f32.xlu0 %v364
    %v366 = vpop.xlane.xlu0 %365
    %v367 = vsel %vm350, %v313, inf
    %v368 = vmin.f32 %v297, %v367
    %369 = vmin.xlane.f32.xlu0 %v368
    %v370 = vpop.xlane.xlu0 %369
    %v371 = vsel %vm350, %v314, inf
    %v372 = vmin.f32 %v298, %v371
    %373 = vmin.xlane.f32.xlu0 %v372
    %v374 = vpop.xlane.xlu0 %373
    %v375 = vsel %vm350, %v315, inf
    %v376 = vmin.f32 %v299, %v375
    %377 = vmin.xlane.f32.xlu0 %v376
    %v378 = vpop.xlane.xlu0 %377
    %v379 = vsel %vm350, %v316, inf
    %v380 = vmin.f32 %v300, %v379
    %381 = vmin.xlane.f32.xlu0 %v380
    %v382 = vpop.xlane.xlu0 %381
    %v383 = vsel %vm350, %v317, inf
    %v384 = vmin.f32 %v301, %v383
    %385 = vmin.xlane.f32.xlu0 %v384
    %v386 = vpop.xlane.xlu0 %385
    %v387 = vsel %vm350, %v318, inf
    %v388 = vmin.f32 %v302, %v387
    %389 = vmin.xlane.f32.xlu0 %v388
    %v390 = vpop.xlane.xlu0 %389
    %v391 = vsel %vm350, %v319, inf
    %v392 = vmin.f32 %v303, %v391
    %393 = vmin.xlane.f32.xlu0 %v392
    %v394 = vpop.xlane.xlu0 %393
    %v395 = vsel %vm350, %v320, inf
    %v396 = vmin.f32 %v304, %v395
    %397 = vmin.xlane.f32.xlu0 %v396
    %v398 = vpop.xlane.xlu0 %397
    %v399 = vsel %vm350, %v321, inf
    %v400 = vmin.f32 %v305, %v399
    %401 = vmin.xlane.f32.xlu0 %v400
    %v402 = vpop.xlane.xlu0 %401
    %v403 = vsel %vm350, %v322, inf
    %v404 = vmin.f32 %v306, %v403
    %405 = vmin.xlane.f32.xlu0 %v404
    %v406 = vpop.xlane.xlu0 %405
    %v407 = vsel %vm350, %v323, inf
    %v408 = vmin.f32 %v307, %v407
    %409 = vmin.xlane.f32.xlu0 %v408
    %v410 = vpop.xlane.xlu0 %409
    %v411 = vsel %vm350, %v324, inf
    %v412 = vmin.f32 %v308, %v411
    %413 = vmin.xlane.f32.xlu0 %v412
    %v414 = vpop.xlane.xlu0 %413
    %vm415 = vcmp.eq.f32.partialorder %v293, %v354
    %vm416 = vcmp.eq.f32.partialorder %v309, %v354
    %vm417 = vcmp.eq.f32.partialorder %v294, %v358
    %vm418 = vcmp.eq.f32.partialorder %v310, %v358
    %vm419 = vcmp.eq.f32.partialorder %v295, %v362
    %vm420 = vcmp.eq.f32.partialorder %v311, %v362
    %vm421 = vcmp.eq.f32.partialorder %v296, %v366
    %vm422 = vcmp.eq.f32.partialorder %v312, %v366
    %vm423 = vcmp.eq.f32.partialorder %v297, %v370
    %vm424 = vcmp.eq.f32.partialorder %v313, %v370
    %vm425 = vcmp.eq.f32.partialorder %v298, %v374
    %vm426 = vcmp.eq.f32.partialorder %v314, %v374
    %vm427 = vcmp.eq.f32.partialorder %v299, %v378
    %vm428 = vcmp.eq.f32.partialorder %v315, %v378
    %vm429 = vcmp.eq.f32.partialorder %v300, %v382
    %vm430 = vcmp.eq.f32.partialorder %v316, %v382
    %vm431 = vcmp.eq.f32.partialorder %v301, %v386
    %vm432 = vcmp.eq.f32.partialorder %v317, %v386
    %vm433 = vcmp.eq.f32.partialorder %v302, %v390
    %vm434 = vcmp.eq.f32.partialorder %v318, %v390
    %vm435 = vcmp.eq.f32.partialorder %v303, %v394
    %vm436 = vcmp.eq.f32.partialorder %v319, %v394
    %vm437 = vcmp.eq.f32.partialorder %v304, %v398
    %vm438 = vcmp.eq.f32.partialorder %v320, %v398
    %vm439 = vcmp.eq.f32.partialorder %v305, %v402
    %vm440 = vcmp.eq.f32.partialorder %v321, %v402
    %vm441 = vcmp.eq.f32.partialorder %v306, %v406
    %vm442 = vcmp.eq.f32.partialorder %v322, %v406
    %vm443 = vcmp.eq.f32.partialorder %v307, %v410
    %vm444 = vcmp.eq.f32.partialorder %v323, %v410
    %vm445 = vcmp.eq.f32.partialorder %v308, %v414
    %vm446 = vcmp.eq.f32.partialorder %v324, %v414
    %v447 = vsel %vm415, %v348, 133
    %v448 = vsel %vm416, %v349, 133
    %v449 = vsel %vm417, %v348, 133
    %v450 = vsel %vm418, %v349, 133
    %v451 = vsel %vm419, %v348, 133
    %v452 = vsel %vm420, %v349, 133
    %v453 = vsel %vm421, %v348, 133
    %v454 = vsel %vm422, %v349, 133
    %v455 = vsel %vm423, %v348, 133
    %v456 = vsel %vm424, %v349, 133
    %v457 = vsel %vm425, %v348, 133
    %v458 = vsel %vm426, %v349, 133
    %v459 = vsel %vm427, %v348, 133
    %v460 = vsel %vm428, %v349, 133
    %v461 = vsel %vm429, %v348, 133
    %v462 = vsel %vm430, %v349, 133
    %v463 = vsel %vm431, %v348, 133
    %v464 = vsel %vm432, %v349, 133
    %v465 = vsel %vm433, %v348, 133
    %v466 = vsel %vm434, %v349, 133
    %v467 = vsel %vm435, %v348, 133
    %v468 = vsel %vm436, %v349, 133
    %v469 = vsel %vm437, %v348, 133
    %v470 = vsel %vm438, %v349, 133
    %v471 = vsel %vm439, %v348, 133
    %v472 = vsel %vm440, %v349, 133
    %v473 = vsel %vm441, %v348, 133
    %v474 = vsel %vm442, %v349, 133
    %v475 = vsel %vm443, %v348, 133
    %v476 = vsel %vm444, %v349, 133
    %v477 = vsel %vm445, %v348, 133
    %v478 = vsel %vm446, %v349, 133
    %v479 = vsel %vm350, %v448, 2147483647
    %vm480 = vcmp.lt.s32.totalorder %v447, %v479
    %v481 = vsel %vm480, %v447, %v479
    %v482 = vand.u32 %v481, 65535
    %v483 = vshra.s32 %v481, 16
    %v484 = vcvt.s32.f32 %v482
    %v485 = vcvt.s32.f32 %v483
    %486 = vmin.xlane.f32.xlu0 %v485
    %v487 = vpop.xlane.xlu0 %486
    %vm488 = vcmp.eq.f32.partialorder %v485, %v487
    %v489 = vsel %vm488, %v484, inf
    %490 = vmin.xlane.f32.xlu0 %v489
    %v491 = vpop.xlane.xlu0 %490
    %v492 = vcvt.f32.s32 %v491
    %v493 = vcvt.f32.s32 %v487
    %v494 = vshll.u32 %v493, 16
    %v495 = vadd.s32 %v494, %v492
    %v496 = vsel %vm350, %v450, 2147483647
    %vm497 = vcmp.lt.s32.totalorder %v449, %v496
    %v498 = vsel %vm497, %v449, %v496
    %v499 = vand.u32 %v498, 65535
    %v500 = vshra.s32 %v498, 16
    %v501 = vcvt.s32.f32 %v499
    %v502 = vcvt.s32.f32 %v500
    %503 = vmin.xlane.f32.xlu0 %v502
    %v504 = vpop.xlane.xlu0 %503
    %vm505 = vcmp.eq.f32.partialorder %v502, %v504
    %v506 = vsel %vm505, %v501, inf
    %507 = vmin.xlane.f32.xlu0 %v506
    %v508 = vpop.xlane.xlu0 %507
    %v509 = vcvt.f32.s32 %v508
    %v510 = vcvt.f32.s32 %v504
    %v511 = vshll.u32 %v510, 16
    %v512 = vadd.s32 %v511, %v509
    %v513 = vsel %vm350, %v452, 2147483647
    %vm514 = vcmp.lt.s32.totalorder %v451, %v513
    %v515 = vsel %vm514, %v451, %v513
    %v516 = vand.u32 %v515, 65535
    %v517 = vshra.s32 %v515, 16
    %v518 = vcvt.s32.f32 %v516
    %v519 = vcvt.s32.f32 %v517
    %520 = vmin.xlane.f32.xlu0 %v519
    %v521 = vpop.xlane.xlu0 %520
    %vm522 = vcmp.eq.f32.partialorder %v519, %v521
    %v523 = vsel %vm522, %v518, inf
    %524 = vmin.xlane.f32.xlu0 %v523
    %v525 = vpop.xlane.xlu0 %524
    %v526 = vcvt.f32.s32 %v525
    %v527 = vcvt.f32.s32 %v521
    %v528 = vshll.u32 %v527, 16
    %v529 = vadd.s32 %v528, %v526
    %v530 = vsel %vm350, %v454, 2147483647
    %vm531 = vcmp.lt.s32.totalorder %v453, %v530
    %v532 = vsel %vm531, %v453, %v530
    %v533 = vand.u32 %v532, 65535
    %v534 = vshra.s32 %v532, 16
    %v535 = vcvt.s32.f32 %v533
    %v536 = vcvt.s32.f32 %v534
    %537 = vmin.xlane.f32.xlu0 %v536
    %v538 = vpop.xlane.xlu0 %537
    %vm539 = vcmp.eq.f32.partialorder %v536, %v538
    %v540 = vsel %vm539, %v535, inf
    %541 = vmin.xlane.f32.xlu0 %v540
    %v542 = vpop.xlane.xlu0 %541
    %v543 = vcvt.f32.s32 %v542
    %v544 = vcvt.f32.s32 %v538
    %v545 = vshll.u32 %v544, 16
    %v546 = vadd.s32 %v545, %v543
    %v547 = vsel %vm350, %v456, 2147483647
    %vm548 = vcmp.lt.s32.totalorder %v455, %v547
    %v549 = vsel %vm548, %v455, %v547
    %v550 = vand.u32 %v549, 65535
    %v551 = vshra.s32 %v549, 16
    %v552 = vcvt.s32.f32 %v550
    %v553 = vcvt.s32.f32 %v551
    %554 = vmin.xlane.f32.xlu0 %v553
    %v555 = vpop.xlane.xlu0 %554
    %vm556 = vcmp.eq.f32.partialorder %v553, %v555
    %v557 = vsel %vm556, %v552, inf
    %558 = vmin.xlane.f32.xlu0 %v557
    %v559 = vpop.xlane.xlu0 %558
    %v560 = vcvt.f32.s32 %v559
    %v561 = vcvt.f32.s32 %v555
    %v562 = vshll.u32 %v561, 16
    %v563 = vadd.s32 %v562, %v560
    %v564 = vsel %vm350, %v458, 2147483647
    %vm565 = vcmp.lt.s32.totalorder %v457, %v564
    %v566 = vsel %vm565, %v457, %v564
    %v567 = vand.u32 %v566, 65535
    %v568 = vshra.s32 %v566, 16
    %v569 = vcvt.s32.f32 %v567
    %v570 = vcvt.s32.f32 %v568
    %571 = vmin.xlane.f32.xlu0 %v570
    %v572 = vpop.xlane.xlu0 %571
    %vm573 = vcmp.eq.f32.partialorder %v570, %v572
    %v574 = vsel %vm573, %v569, inf
    %575 = vmin.xlane.f32.xlu0 %v574
    %v576 = vpop.xlane.xlu0 %575
    %v577 = vcvt.f32.s32 %v576
    %v578 = vcvt.f32.s32 %v572
    %v579 = vshll.u32 %v578, 16
    %v580 = vadd.s32 %v579, %v577
    %v581 = vsel %vm350, %v460, 2147483647
    %vm582 = vcmp.lt.s32.totalorder %v459, %v581
    %v583 = vsel %vm582, %v459, %v581
    %v584 = vand.u32 %v583, 65535
    %v585 = vshra.s32 %v583, 16
    %v586 = vcvt.s32.f32 %v584
    %v587 = vcvt.s32.f32 %v585
    %588 = vmin.xlane.f32.xlu0 %v587
    %v589 = vpop.xlane.xlu0 %588
    %vm590 = vcmp.eq.f32.partialorder %v587, %v589
    %v591 = vsel %vm590, %v586, inf
    %592 = vmin.xlane.f32.xlu0 %v591
    %v593 = vpop.xlane.xlu0 %592
    %v594 = vcvt.f32.s32 %v593
    %v595 = vcvt.f32.s32 %v589
    %v596 = vshll.u32 %v595, 16
    %v597 = vadd.s32 %v596, %v594
    %v598 = vsel %vm350, %v462, 2147483647
    %vm599 = vcmp.lt.s32.totalorder %v461, %v598
    %v600 = vsel %vm599, %v461, %v598
    %v601 = vand.u32 %v600, 65535
    %v602 = vshra.s32 %v600, 16
    %v603 = vcvt.s32.f32 %v601
    %v604 = vcvt.s32.f32 %v602
    %605 = vmin.xlane.f32.xlu0 %v604
    %v606 = vpop.xlane.xlu0 %605
    %vm607 = vcmp.eq.f32.partialorder %v604, %v606
    %v608 = vsel %vm607, %v603, inf
    %609 = vmin.xlane.f32.xlu0 %v608
    %v610 = vpop.xlane.xlu0 %609
    %v611 = vcvt.f32.s32 %v610
    %v612 = vcvt.f32.s32 %v606
    %v613 = vshll.u32 %v612, 16
    %v614 = vadd.s32 %v613, %v611
    %v615 = vsel %vm350, %v464, 2147483647
    %vm616 = vcmp.lt.s32.totalorder %v463, %v615
    %v617 = vsel %vm616, %v463, %v615
    %v618 = vand.u32 %v617, 65535
    %v619 = vshra.s32 %v617, 16
    %v620 = vcvt.s32.f32 %v618
    %v621 = vcvt.s32.f32 %v619
    %622 = vmin.xlane.f32.xlu0 %v621
    %v623 = vpop.xlane.xlu0 %622
    %vm624 = vcmp.eq.f32.partialorder %v621, %v623
    %v625 = vsel %vm624, %v620, inf
    %626 = vmin.xlane.f32.xlu0 %v625
    %v627 = vpop.xlane.xlu0 %626
    %v628 = vcvt.f32.s32 %v627
    %v629 = vcvt.f32.s32 %v623
    %v630 = vshll.u32 %v629, 16
    %v631 = vadd.s32 %v630, %v628
    %v632 = vsel %vm350, %v466, 2147483647
    %vm633 = vcmp.lt.s32.totalorder %v465, %v632
    %v634 = vsel %vm633, %v465, %v632
    %v635 = vand.u32 %v634, 65535
    %v636 = vshra.s32 %v634, 16
    %v637 = vcvt.s32.f32 %v635
    %v638 = vcvt.s32.f32 %v636
    %639 = vmin.xlane.f32.xlu0 %v638
    %v640 = vpop.xlane.xlu0 %639
    %vm641 = vcmp.eq.f32.partialorder %v638, %v640
    %v642 = vsel %vm641, %v637, inf
    %643 = vmin.xlane.f32.xlu0 %v642
    %v644 = vpop.xlane.xlu0 %643
    %v645 = vcvt.f32.s32 %v644
    %v646 = vcvt.f32.s32 %v640
    %v647 = vshll.u32 %v646, 16
    %v648 = vadd.s32 %v647, %v645
    %v649 = vsel %vm350, %v468, 2147483647
    %vm650 = vcmp.lt.s32.totalorder %v467, %v649
    %v651 = vsel %vm650, %v467, %v649
    %v652 = vand.u32 %v651, 65535
    %v653 = vshra.s32 %v651, 16
    %v654 = vcvt.s32.f32 %v652
    %v655 = vcvt.s32.f32 %v653
    %656 = vmin.xlane.f32.xlu0 %v655
    %v657 = vpop.xlane.xlu0 %656
    %vm658 = vcmp.eq.f32.partialorder %v655, %v657
    %v659 = vsel %vm658, %v654, inf
    %660 = vmin.xlane.f32.xlu0 %v659
    %v661 = vpop.xlane.xlu0 %660
    %v662 = vcvt.f32.s32 %v661
    %v663 = vcvt.f32.s32 %v657
    %v664 = vshll.u32 %v663, 16
    %v665 = vadd.s32 %v664, %v662
    %v666 = vsel %vm350, %v470, 2147483647
    %vm667 = vcmp.lt.s32.totalorder %v469, %v666
    %v668 = vsel %vm667, %v469, %v666
    %v669 = vand.u32 %v668, 65535
    %v670 = vshra.s32 %v668, 16
    %v671 = vcvt.s32.f32 %v669
    %v672 = vcvt.s32.f32 %v670
    %673 = vmin.xlane.f32.xlu0 %v672
    %v674 = vpop.xlane.xlu0 %673
    %vm675 = vcmp.eq.f32.partialorder %v672, %v674
    %v676 = vsel %vm675, %v671, inf
    %677 = vmin.xlane.f32.xlu0 %v676
    %v678 = vpop.xlane.xlu0 %677
    %v679 = vcvt.f32.s32 %v678
    %v680 = vcvt.f32.s32 %v674
    %v681 = vshll.u32 %v680, 16
    %v682 = vadd.s32 %v681, %v679
    %v683 = vsel %vm350, %v472, 2147483647
    %vm684 = vcmp.lt.s32.totalorder %v471, %v683
    %v685 = vsel %vm684, %v471, %v683
    %v686 = vand.u32 %v685, 65535
    %v687 = vshra.s32 %v685, 16
    %v688 = vcvt.s32.f32 %v686
    %v689 = vcvt.s32.f32 %v687
    %690 = vmin.xlane.f32.xlu0 %v689
    %v691 = vpop.xlane.xlu0 %690
    %vm692 = vcmp.eq.f32.partialorder %v689, %v691
    %v693 = vsel %vm692, %v688, inf
    %694 = vmin.xlane.f32.xlu0 %v693
    %v695 = vpop.xlane.xlu0 %694
    %v696 = vcvt.f32.s32 %v695
    %v697 = vcvt.f32.s32 %v691
    %v698 = vshll.u32 %v697, 16
    %v699 = vadd.s32 %v698, %v696
    %v700 = vsel %vm350, %v474, 2147483647
    %vm701 = vcmp.lt.s32.totalorder %v473, %v700
    %v702 = vsel %vm701, %v473, %v700
    %v703 = vand.u32 %v702, 65535
    %v704 = vshra.s32 %v702, 16
    %v705 = vcvt.s32.f32 %v703
    %v706 = vcvt.s32.f32 %v704
    %707 = vmin.xlane.f32.xlu0 %v706
    %v708 = vpop.xlane.xlu0 %707
    %vm709 = vcmp.eq.f32.partialorder %v706, %v708
    %v710 = vsel %vm709, %v705, inf
    %711 = vmin.xlane.f32.xlu0 %v710
    %v712 = vpop.xlane.xlu0 %711
    %v713 = vcvt.f32.s32 %v712
    %v714 = vcvt.f32.s32 %v708
    %v715 = vshll.u32 %v714, 16
    %v716 = vadd.s32 %v715, %v713
    %v717 = vsel %vm350, %v476, 2147483647
    %vm718 = vcmp.lt.s32.totalorder %v475, %v717
    %v719 = vsel %vm718, %v475, %v717
    %v720 = vand.u32 %v719, 65535
    %v721 = vshra.s32 %v719, 16
    %v722 = vcvt.s32.f32 %v720
    %v723 = vcvt.s32.f32 %v721
    %724 = vmin.xlane.f32.xlu0 %v723
    %v725 = vpop.xlane.xlu0 %724
    %vm726 = vcmp.eq.f32.partialorder %v723, %v725
    %v727 = vsel %vm726, %v722, inf
    %728 = vmin.xlane.f32.xlu0 %v727
    %v729 = vpop.xlane.xlu0 %728
    %v730 = vcvt.f32.s32 %v729
    %v731 = vcvt.f32.s32 %v725
    %v732 = vshll.u32 %v731, 16
    %v733 = vadd.s32 %v732, %v730
    %v734 = vsel %vm350, %v478, 2147483647
    %vm735 = vcmp.lt.s32.totalorder %v477, %v734
    %v736 = vsel %vm735, %v477, %v734
    %v737 = vand.u32 %v736, 65535
    %v738 = vshra.s32 %v736, 16
    %v739 = vcvt.s32.f32 %v737
    %v740 = vcvt.s32.f32 %v738
    %741 = vmin.xlane.f32.xlu0 %v740
    %v742 = vpop.xlane.xlu0 %741
    %vm743 = vcmp.eq.f32.partialorder %v740, %v742
    %v744 = vsel %vm743, %v739, inf
    %745 = vmin.xlane.f32.xlu0 %v744
    %v746 = vpop.xlane.xlu0 %745
    %v747 = vcvt.f32.s32 %v746
    %v748 = vcvt.f32.s32 %v742
    %v749 = vshll.u32 %v748, 16
    %v750 = vadd.s32 %v749, %v747
    %vm751 = vcmp.eq.s32.totalorder %v348, %v495
    %vm752 = vcmp.eq.s32.totalorder %v349, %v495
    %vm753 = vcmp.eq.s32.totalorder %v348, %v512
    %vm754 = vcmp.eq.s32.totalorder %v349, %v512
    %vm755 = vcmp.eq.s32.totalorder %v348, %v529
    %vm756 = vcmp.eq.s32.totalorder %v349, %v529
    %vm757 = vcmp.eq.s32.totalorder %v348, %v546
    %vm758 = vcmp.eq.s32.totalorder %v349, %v546
    %vm759 = vcmp.eq.s32.totalorder %v348, %v563
    %vm760 = vcmp.eq.s32.totalorder %v349, %v563
    %vm761 = vcmp.eq.s32.totalorder %v348, %v580
    %vm762 = vcmp.eq.s32.totalorder %v349, %v580
    %vm763 = vcmp.eq.s32.totalorder %v348, %v597
    %vm764 = vcmp.eq.s32.totalorder %v349, %v597
    %vm765 = vcmp.eq.s32.totalorder %v348, %v614
    %vm766 = vcmp.eq.s32.totalorder %v349, %v614
    %vm767 = vcmp.eq.s32.totalorder %v348, %v631
    %vm768 = vcmp.eq.s32.totalorder %v349, %v631
    %vm769 = vcmp.eq.s32.totalorder %v348, %v648
    %vm770 = vcmp.eq.s32.totalorder %v349, %v648
    %vm771 = vcmp.eq.s32.totalorder %v348, %v665
    %vm772 = vcmp.eq.s32.totalorder %v349, %v665
    %vm773 = vcmp.eq.s32.totalorder %v348, %v682
    %vm774 = vcmp.eq.s32.totalorder %v349, %v682
    %vm775 = vcmp.eq.s32.totalorder %v348, %v699
    %vm776 = vcmp.eq.s32.totalorder %v349, %v699
    %vm777 = vcmp.eq.s32.totalorder %v348, %v716
    %vm778 = vcmp.eq.s32.totalorder %v349, %v716
    %vm779 = vcmp.eq.s32.totalorder %v348, %v733
    %vm780 = vcmp.eq.s32.totalorder %v349, %v733
    %vm781 = vcmp.eq.s32.totalorder %v348, %v750
    %vm782 = vcmp.eq.s32.totalorder %v349, %v750
    %v783 = vsel %vm751, %v329, 0.0
    %v784 = vsel %vm752, %v331, 0.0
    %v785 = vsel %vm753, %v329, 0.0
    %v786 = vsel %vm754, %v332, 0.0
    %v787 = vsel %vm755, %v329, 0.0
    %v788 = vsel %vm756, %v333, 0.0
    %v789 = vsel %vm757, %v329, 0.0
    %v790 = vsel %vm758, %v334, 0.0
    %v791 = vsel %vm759, %v329, 0.0
    %v792 = vsel %vm760, %v335, 0.0
    %v793 = vsel %vm761, %v329, 0.0
    %v794 = vsel %vm762, %v336, 0.0
    %v795 = vsel %vm763, %v329, 0.0
    %v796 = vsel %vm764, %v337, 0.0
    %v797 = vsel %vm765, %v329, 0.0
    %v798 = vsel %vm766, %v338, 0.0
    %v799 = vsel %vm767, %v329, 0.0
    %v800 = vsel %vm768, %v339, 0.0
    %v801 = vsel %vm769, %v329, 0.0
    %v802 = vsel %vm770, %v340, 0.0
    %v803 = vsel %vm771, %v329, 0.0
    %v804 = vsel %vm772, %v341, 0.0
    %v805 = vsel %vm773, %v329, 0.0
    %v806 = vsel %vm774, %v342, 0.0
    %v807 = vsel %vm775, %v329, 0.0
    %v808 = vsel %vm776, %v343, 0.0
    %v809 = vsel %vm777, %v329, 0.0
    %v810 = vsel %vm778, %v344, 0.0
    %v811 = vsel %vm779, %v329, 0.0
    %v812 = vsel %vm780, %v345, 0.0
    %v813 = vsel %vm781, %v329, 0.0
    %v814 = vsel %vm782, %v346, 0.0
    %v815 = vsel %vm350, %v784, 0.0
    %v816 = vadd.f32 %v783, %v815
    %817 = vadd.xlane.f32.xlu0 %v816
    %v818 = vpop.xlane.xlu0 %817
    %v819 = vsel %vm350, %v786, 0.0
    %v820 = vadd.f32 %v785, %v819
    %821 = vadd.xlane.f32.xlu0 %v820
    %v822 = vpop.xlane.xlu0 %821
    %v823 = vsel %vm350, %v788, 0.0
    %v824 = vadd.f32 %v787, %v823
    %825 = vadd.xlane.f32.xlu0 %v824
    %v826 = vpop.xlane.xlu0 %825
    %v827 = vsel %vm350, %v790, 0.0
    %v828 = vadd.f32 %v789, %v827
    %829 = vadd.xlane.f32.xlu0 %v828
    %v830 = vpop.xlane.xlu0 %829
    %v831 = vsel %vm350, %v792, 0.0
    %v832 = vadd.f32 %v791, %v831
    %833 = vadd.xlane.f32.xlu0 %v832
    %v834 = vpop.xlane.xlu0 %833
    %v835 = vsel %vm350, %v794, 0.0
    %v836 = vadd.f32 %v793, %v835
    %837 = vadd.xlane.f32.xlu0 %v836
    %v838 = vpop.xlane.xlu0 %837
    %v839 = vsel %vm350, %v796, 0.0
    %v840 = vadd.f32 %v795, %v839
    %841 = vadd.xlane.f32.xlu0 %v840
    %v842 = vpop.xlane.xlu0 %841
    %v843 = vsel %vm350, %v798, 0.0
    %v844 = vadd.f32 %v797, %v843
    %845 = vadd.xlane.f32.xlu0 %v844
    %v846 = vpop.xlane.xlu0 %845
    %v847 = vsel %vm350, %v800, 0.0
    %v848 = vadd.f32 %v799, %v847
    %849 = vadd.xlane.f32.xlu0 %v848
    %v850 = vpop.xlane.xlu0 %849
    %v851 = vsel %vm350, %v802, 0.0
    %v852 = vadd.f32 %v801, %v851
    %853 = vadd.xlane.f32.xlu0 %v852
    %v854 = vpop.xlane.xlu0 %853
    %v855 = vsel %vm350, %v804, 0.0
    %v856 = vadd.f32 %v803, %v855
    %857 = vadd.xlane.f32.xlu0 %v856
    %v858 = vpop.xlane.xlu0 %857
    %v859 = vsel %vm350, %v806, 0.0
    %v860 = vadd.f32 %v805, %v859
    %861 = vadd.xlane.f32.xlu0 %v860
    %v862 = vpop.xlane.xlu0 %861
    %v863 = vsel %vm350, %v808, 0.0
    %v864 = vadd.f32 %v807, %v863
    %865 = vadd.xlane.f32.xlu0 %v864
    %v866 = vpop.xlane.xlu0 %865
    %v867 = vsel %vm350, %v810, 0.0
    %v868 = vadd.f32 %v809, %v867
    %869 = vadd.xlane.f32.xlu0 %v868
    %v870 = vpop.xlane.xlu0 %869
    %v871 = vsel %vm350, %v812, 0.0
    %v872 = vadd.f32 %v811, %v871
    %873 = vadd.xlane.f32.xlu0 %v872
    %v874 = vpop.xlane.xlu0 %873
    %v875 = vsel %vm350, %v814, 0.0
    %v876 = vadd.f32 %v813, %v875
    %877 = vadd.xlane.f32.xlu0 %v876
    %v878 = vpop.xlane.xlu0 %877
    %v879 = vsel %vm751, inf, %v293
    %v880 = vsel %vm752, inf, %v309
    %v881 = vsel %vm753, inf, %v294
    %v882 = vsel %vm754, inf, %v310
    %v883 = vsel %vm755, inf, %v295
    %v884 = vsel %vm756, inf, %v311
    %v885 = vsel %vm757, inf, %v296
    %v886 = vsel %vm758, inf, %v312
    %v887 = vsel %vm759, inf, %v297
    %v888 = vsel %vm760, inf, %v313
    %v889 = vsel %vm761, inf, %v298
    %v890 = vsel %vm762, inf, %v314
    %v891 = vsel %vm763, inf, %v299
    %v892 = vsel %vm764, inf, %v315
    %v893 = vsel %vm765, inf, %v300
    %v894 = vsel %vm766, inf, %v316
    %v895 = vsel %vm767, inf, %v301
    %v896 = vsel %vm768, inf, %v317
    %v897 = vsel %vm769, inf, %v302
    %v898 = vsel %vm770, inf, %v318
    %v899 = vsel %vm771, inf, %v303
    %v900 = vsel %vm772, inf, %v319
    %v901 = vsel %vm773, inf, %v304
    %v902 = vsel %vm774, inf, %v320
    %v903 = vsel %vm775, inf, %v305
    %v904 = vsel %vm776, inf, %v321
    %v905 = vsel %vm777, inf, %v306
    %v906 = vsel %vm778, inf, %v322
    %v907 = vsel %vm779, inf, %v307
    %v908 = vsel %vm780, inf, %v323
    %v909 = vsel %vm781, inf, %v308
    %v910 = vsel %vm782, inf, %v324
    %v911 = vsel %vm350, %v880, inf
    %v912 = vmin.f32 %v879, %v911
    %913 = vmin.xlane.f32.xlu0 %v912
    %v914 = vpop.xlane.xlu0 %913
    %v915 = vsel %vm350, %v882, inf
    %v916 = vmin.f32 %v881, %v915
    %917 = vmin.xlane.f32.xlu0 %v916
    %v918 = vpop.xlane.xlu0 %917
    %v919 = vsel %vm350, %v884, inf
    %v920 = vmin.f32 %v883, %v919
    %921 = vmin.xlane.f32.xlu0 %v920
    %v922 = vpop.xlane.xlu0 %921
    %v923 = vsel %vm350, %v886, inf
    %v924 = vmin.f32 %v885, %v923
    %925 = vmin.xlane.f32.xlu0 %v924
    %v926 = vpop.xlane.xlu0 %925
    %v927 = vsel %vm350, %v888, inf
    %v928 = vmin.f32 %v887, %v927
    %929 = vmin.xlane.f32.xlu0 %v928
    %v930 = vpop.xlane.xlu0 %929
    %v931 = vsel %vm350, %v890, inf
    %v932 = vmin.f32 %v889, %v931
    %933 = vmin.xlane.f32.xlu0 %v932
    %v934 = vpop.xlane.xlu0 %933
    %v935 = vsel %vm350, %v892, inf
    %v936 = vmin.f32 %v891, %v935
    %937 = vmin.xlane.f32.xlu0 %v936
    %v938 = vpop.xlane.xlu0 %937
    %v939 = vsel %vm350, %v894, inf
    %v940 = vmin.f32 %v893, %v939
    %941 = vmin.xlane.f32.xlu0 %v940
    %v942 = vpop.xlane.xlu0 %941
    %v943 = vsel %vm350, %v896, inf
    %v944 = vmin.f32 %v895, %v943
    %945 = vmin.xlane.f32.xlu0 %v944
    %v946 = vpop.xlane.xlu0 %945
    %v947 = vsel %vm350, %v898, inf
    %v948 = vmin.f32 %v897, %v947
    %949 = vmin.xlane.f32.xlu0 %v948
    %v950 = vpop.xlane.xlu0 %949
    %v951 = vsel %vm350, %v900, inf
    %v952 = vmin.f32 %v899, %v951
    %953 = vmin.xlane.f32.xlu0 %v952
    %v954 = vpop.xlane.xlu0 %953
    %v955 = vsel %vm350, %v902, inf
    %v956 = vmin.f32 %v901, %v955
    %957 = vmin.xlane.f32.xlu0 %v956
    %v958 = vpop.xlane.xlu0 %957
    %v959 = vsel %vm350, %v904, inf
    %v960 = vmin.f32 %v903, %v959
    %961 = vmin.xlane.f32.xlu0 %v960
    %v962 = vpop.xlane.xlu0 %961
    %v963 = vsel %vm350, %v906, inf
    %v964 = vmin.f32 %v905, %v963
    %965 = vmin.xlane.f32.xlu0 %v964
    %v966 = vpop.xlane.xlu0 %965
    %v967 = vsel %vm350, %v908, inf
    %v968 = vmin.f32 %v907, %v967
    %969 = vmin.xlane.f32.xlu0 %v968
    %v970 = vpop.xlane.xlu0 %969
    %v971 = vsel %vm350, %v910, inf
    %v972 = vmin.f32 %v909, %v971
    %973 = vmin.xlane.f32.xlu0 %v972
    %v974 = vpop.xlane.xlu0 %973
    %vm975 = vcmp.eq.f32.partialorder %v879, %v914
    %vm976 = vcmp.eq.f32.partialorder %v880, %v914
    %vm977 = vcmp.eq.f32.partialorder %v881, %v918
    %vm978 = vcmp.eq.f32.partialorder %v882, %v918
    %vm979 = vcmp.eq.f32.partialorder %v883, %v922
    %vm980 = vcmp.eq.f32.partialorder %v884, %v922
    %vm981 = vcmp.eq.f32.partialorder %v885, %v926
    %vm982 = vcmp.eq.f32.partialorder %v886, %v926
    %vm983 = vcmp.eq.f32.partialorder %v887, %v930
    %vm984 = vcmp.eq.f32.partialorder %v888, %v930
    %vm985 = vcmp.eq.f32.partialorder %v889, %v934
    %vm986 = vcmp.eq.f32.partialorder %v890, %v934
    %vm987 = vcmp.eq.f32.partialorder %v891, %v938
    %vm988 = vcmp.eq.f32.partialorder %v892, %v938
    %vm989 = vcmp.eq.f32.partialorder %v893, %v942
    %vm990 = vcmp.eq.f32.partialorder %v894, %v942
    %vm991 = vcmp.eq.f32.partialorder %v895, %v946
    %vm992 = vcmp.eq.f32.partialorder %v896, %v946
    %vm993 = vcmp.eq.f32.partialorder %v897, %v950
    %vm994 = vcmp.eq.f32.partialorder %v898, %v950
    %vm995 = vcmp.eq.f32.partialorder %v899, %v954
    %vm996 = vcmp.eq.f32.partialorder %v900, %v954
    %vm997 = vcmp.eq.f32.partialorder %v901, %v958
    %vm998 = vcmp.eq.f32.partialorder %v902, %v958
    %vm999 = vcmp.eq.f32.partialorder %v903, %v962
    %vm1000 = vcmp.eq.f32.partialorder %v904, %v962
    %vm1001 = vcmp.eq.f32.partialorder %v905, %v966
    %vm1002 = vcmp.eq.f32.partialorder %v906, %v966
    %vm1003 = vcmp.eq.f32.partialorder %v907, %v970
    %vm1004 = vcmp.eq.f32.partialorder %v908, %v970
    %vm1005 = vcmp.eq.f32.partialorder %v909, %v974
    %vm1006 = vcmp.eq.f32.partialorder %v910, %v974
    %v1007 = vsel %vm975, %v348, 133
    %v1008 = vsel %vm976, %v349, 133
    %v1009 = vsel %vm977, %v348, 133
    %v1010 = vsel %vm978, %v349, 133
    %v1011 = vsel %vm979, %v348, 133
    %v1012 = vsel %vm980, %v349, 133
    %v1013 = vsel %vm981, %v348, 133
    %v1014 = vsel %vm982, %v349, 133
    %v1015 = vsel %vm983, %v348, 133
    %v1016 = vsel %vm984, %v349, 133
    %v1017 = vsel %vm985, %v348, 133
    %v1018 = vsel %vm986, %v349, 133
    %v1019 = vsel %vm987, %v348, 133
    %v1020 = vsel %vm988, %v349, 133
    %v1021 = vsel %vm989, %v348, 133
    %v1022 = vsel %vm990, %v349, 133
    %v1023 = vsel %vm991, %v348, 133
    %v1024 = vsel %vm992, %v349, 133
    %v1025 = vsel %vm993, %v348, 133
    %v1026 = vsel %vm994, %v349, 133
    %v1027 = vsel %vm995, %v348, 133
    %v1028 = vsel %vm996, %v349, 133
    %v1029 = vsel %vm997, %v348, 133
    %v1030 = vsel %vm998, %v349, 133
    %v1031 = vsel %vm999, %v348, 133
    %v1032 = vsel %vm1000, %v349, 133
    %v1033 = vsel %vm1001, %v348, 133
    %v1034 = vsel %vm1002, %v349, 133
    %v1035 = vsel %vm1003, %v348, 133
    %v1036 = vsel %vm1004, %v349, 133
    %v1037 = vsel %vm1005, %v348, 133
    %v1038 = vsel %vm1006, %v349, 133
    %v1039 = vsel %vm350, %v1008, 2147483647
    %vm1040 = vcmp.lt.s32.totalorder %v1007, %v1039
    %v1041 = vsel %vm1040, %v1007, %v1039
    %v1042 = vand.u32 %v1041, 65535
    %v1043 = vshra.s32 %v1041, 16
    %v1044 = vcvt.s32.f32 %v1042
    %v1045 = vcvt.s32.f32 %v1043
    %1046 = vmin.xlane.f32.xlu0 %v1045
    %v1047 = vpop.xlane.xlu0 %1046
    %vm1048 = vcmp.eq.f32.partialorder %v1045, %v1047
    %v1049 = vsel %vm1048, %v1044, inf
    %1050 = vmin.xlane.f32.xlu0 %v1049
    %v1051 = vpop.xlane.xlu0 %1050
    %v1052 = vcvt.f32.s32 %v1051
    %v1053 = vcvt.f32.s32 %v1047
    %v1054 = vshll.u32 %v1053, 16
    %v1055 = vadd.s32 %v1054, %v1052
    %v1056 = vsel %vm350, %v1010, 2147483647
    %vm1057 = vcmp.lt.s32.totalorder %v1009, %v1056
    %v1058 = vsel %vm1057, %v1009, %v1056
    %v1059 = vand.u32 %v1058, 65535
    %v1060 = vshra.s32 %v1058, 16
    %v1061 = vcvt.s32.f32 %v1059
    %v1062 = vcvt.s32.f32 %v1060
    %1063 = vmin.xlane.f32.xlu0 %v1062
    %v1064 = vpop.xlane.xlu0 %1063
    %vm1065 = vcmp.eq.f32.partialorder %v1062, %v1064
    %v1066 = vsel %vm1065, %v1061, inf
    %1067 = vmin.xlane.f32.xlu0 %v1066
    %v1068 = vpop.xlane.xlu0 %1067
    %v1069 = vcvt.f32.s32 %v1068
    %v1070 = vcvt.f32.s32 %v1064
    %v1071 = vshll.u32 %v1070, 16
    %v1072 = vadd.s32 %v1071, %v1069
    %v1073 = vsel %vm350, %v1012, 2147483647
    %vm1074 = vcmp.lt.s32.totalorder %v1011, %v1073
    %v1075 = vsel %vm1074, %v1011, %v1073
    %v1076 = vand.u32 %v1075, 65535
    %v1077 = vshra.s32 %v1075, 16
    %v1078 = vcvt.s32.f32 %v1076
    %v1079 = vcvt.s32.f32 %v1077
    %1080 = vmin.xlane.f32.xlu0 %v1079
    %v1081 = vpop.xlane.xlu0 %1080
    %vm1082 = vcmp.eq.f32.partialorder %v1079, %v1081
    %v1083 = vsel %vm1082, %v1078, inf
    %1084 = vmin.xlane.f32.xlu0 %v1083
    %v1085 = vpop.xlane.xlu0 %1084
    %v1086 = vcvt.f32.s32 %v1085
    %v1087 = vcvt.f32.s32 %v1081
    %v1088 = vshll.u32 %v1087, 16
    %v1089 = vadd.s32 %v1088, %v1086
    %v1090 = vsel %vm350, %v1014, 2147483647
    %vm1091 = vcmp.lt.s32.totalorder %v1013, %v1090
    %v1092 = vsel %vm1091, %v1013, %v1090
    %v1093 = vand.u32 %v1092, 65535
    %v1094 = vshra.s32 %v1092, 16
    %v1095 = vcvt.s32.f32 %v1093
    %v1096 = vcvt.s32.f32 %v1094
    %1097 = vmin.xlane.f32.xlu0 %v1096
    %v1098 = vpop.xlane.xlu0 %1097
    %vm1099 = vcmp.eq.f32.partialorder %v1096, %v1098
    %v1100 = vsel %vm1099, %v1095, inf
    %1101 = vmin.xlane.f32.xlu0 %v1100
    %v1102 = vpop.xlane.xlu0 %1101
    %v1103 = vcvt.f32.s32 %v1102
    %v1104 = vcvt.f32.s32 %v1098
    %v1105 = vshll.u32 %v1104, 16
    %v1106 = vadd.s32 %v1105, %v1103
    %v1107 = vsel %vm350, %v1016, 2147483647
    %vm1108 = vcmp.lt.s32.totalorder %v1015, %v1107
    %v1109 = vsel %vm1108, %v1015, %v1107
    %v1110 = vand.u32 %v1109, 65535
    %v1111 = vshra.s32 %v1109, 16
    %v1112 = vcvt.s32.f32 %v1110
    %v1113 = vcvt.s32.f32 %v1111
    %1114 = vmin.xlane.f32.xlu0 %v1113
    %v1115 = vpop.xlane.xlu0 %1114
    %vm1116 = vcmp.eq.f32.partialorder %v1113, %v1115
    %v1117 = vsel %vm1116, %v1112, inf
    %1118 = vmin.xlane.f32.xlu0 %v1117
    %v1119 = vpop.xlane.xlu0 %1118
    %v1120 = vcvt.f32.s32 %v1119
    %v1121 = vcvt.f32.s32 %v1115
    %v1122 = vshll.u32 %v1121, 16
    %v1123 = vadd.s32 %v1122, %v1120
    %v1124 = vsel %vm350, %v1018, 2147483647
    %vm1125 = vcmp.lt.s32.totalorder %v1017, %v1124
    %v1126 = vsel %vm1125, %v1017, %v1124
    %v1127 = vand.u32 %v1126, 65535
    %v1128 = vshra.s32 %v1126, 16
    %v1129 = vcvt.s32.f32 %v1127
    %v1130 = vcvt.s32.f32 %v1128
    %1131 = vmin.xlane.f32.xlu0 %v1130
    %v1132 = vpop.xlane.xlu0 %1131
    %vm1133 = vcmp.eq.f32.partialorder %v1130, %v1132
    %v1134 = vsel %vm1133, %v1129, inf
    %1135 = vmin.xlane.f32.xlu0 %v1134
    %v1136 = vpop.xlane.xlu0 %1135
    %v1137 = vcvt.f32.s32 %v1136
    %v1138 = vcvt.f32.s32 %v1132
    %v1139 = vshll.u32 %v1138, 16
    %v1140 = vadd.s32 %v1139, %v1137
    %v1141 = vsel %vm350, %v1020, 2147483647
    %vm1142 = vcmp.lt.s32.totalorder %v1019, %v1141
    %v1143 = vsel %vm1142, %v1019, %v1141
    %v1144 = vand.u32 %v1143, 65535
    %v1145 = vshra.s32 %v1143, 16
    %v1146 = vcvt.s32.f32 %v1144
    %v1147 = vcvt.s32.f32 %v1145
    %1148 = vmin.xlane.f32.xlu0 %v1147
    %v1149 = vpop.xlane.xlu0 %1148
    %vm1150 = vcmp.eq.f32.partialorder %v1147, %v1149
    %v1151 = vsel %vm1150, %v1146, inf
    %1152 = vmin.xlane.f32.xlu0 %v1151
    %v1153 = vpop.xlane.xlu0 %1152
    %v1154 = vcvt.f32.s32 %v1153
    %v1155 = vcvt.f32.s32 %v1149
    %v1156 = vshll.u32 %v1155, 16
    %v1157 = vadd.s32 %v1156, %v1154
    %v1158 = vsel %vm350, %v1022, 2147483647
    %vm1159 = vcmp.lt.s32.totalorder %v1021, %v1158
    %v1160 = vsel %vm1159, %v1021, %v1158
    %v1161 = vand.u32 %v1160, 65535
    %v1162 = vshra.s32 %v1160, 16
    %v1163 = vcvt.s32.f32 %v1161
    %v1164 = vcvt.s32.f32 %v1162
    %1165 = vmin.xlane.f32.xlu0 %v1164
    %v1166 = vpop.xlane.xlu0 %1165
    %vm1167 = vcmp.eq.f32.partialorder %v1164, %v1166
    %v1168 = vsel %vm1167, %v1163, inf
    %1169 = vmin.xlane.f32.xlu0 %v1168
    %v1170 = vpop.xlane.xlu0 %1169
    %v1171 = vcvt.f32.s32 %v1170
    %v1172 = vcvt.f32.s32 %v1166
    %v1173 = vshll.u32 %v1172, 16
    %v1174 = vadd.s32 %v1173, %v1171
    %v1175 = vsel %vm350, %v1024, 2147483647
    %vm1176 = vcmp.lt.s32.totalorder %v1023, %v1175
    %v1177 = vsel %vm1176, %v1023, %v1175
    %v1178 = vand.u32 %v1177, 65535
    %v1179 = vshra.s32 %v1177, 16
    %v1180 = vcvt.s32.f32 %v1178
    %v1181 = vcvt.s32.f32 %v1179
    %1182 = vmin.xlane.f32.xlu0 %v1181
    %v1183 = vpop.xlane.xlu0 %1182
    %vm1184 = vcmp.eq.f32.partialorder %v1181, %v1183
    %v1185 = vsel %vm1184, %v1180, inf
    %1186 = vmin.xlane.f32.xlu0 %v1185
    %v1187 = vpop.xlane.xlu0 %1186
    %v1188 = vcvt.f32.s32 %v1187
    %v1189 = vcvt.f32.s32 %v1183
    %v1190 = vshll.u32 %v1189, 16
    %v1191 = vadd.s32 %v1190, %v1188
    %v1192 = vsel %vm350, %v1026, 2147483647
    %vm1193 = vcmp.lt.s32.totalorder %v1025, %v1192
    %v1194 = vsel %vm1193, %v1025, %v1192
    %v1195 = vand.u32 %v1194, 65535
    %v1196 = vshra.s32 %v1194, 16
    %v1197 = vcvt.s32.f32 %v1195
    %v1198 = vcvt.s32.f32 %v1196
    %1199 = vmin.xlane.f32.xlu0 %v1198
    %v1200 = vpop.xlane.xlu0 %1199
    %vm1201 = vcmp.eq.f32.partialorder %v1198, %v1200
    %v1202 = vsel %vm1201, %v1197, inf
    %1203 = vmin.xlane.f32.xlu0 %v1202
    %v1204 = vpop.xlane.xlu0 %1203
    %v1205 = vcvt.f32.s32 %v1204
    %v1206 = vcvt.f32.s32 %v1200
    %v1207 = vshll.u32 %v1206, 16
    %v1208 = vadd.s32 %v1207, %v1205
    %v1209 = vsel %vm350, %v1028, 2147483647
    %vm1210 = vcmp.lt.s32.totalorder %v1027, %v1209
    %v1211 = vsel %vm1210, %v1027, %v1209
    %v1212 = vand.u32 %v1211, 65535
    %v1213 = vshra.s32 %v1211, 16
    %v1214 = vcvt.s32.f32 %v1212
    %v1215 = vcvt.s32.f32 %v1213
    %1216 = vmin.xlane.f32.xlu0 %v1215
    %v1217 = vpop.xlane.xlu0 %1216
    %vm1218 = vcmp.eq.f32.partialorder %v1215, %v1217
    %v1219 = vsel %vm1218, %v1214, inf
    %1220 = vmin.xlane.f32.xlu0 %v1219
    %v1221 = vpop.xlane.xlu0 %1220
    %v1222 = vcvt.f32.s32 %v1221
    %v1223 = vcvt.f32.s32 %v1217
    %v1224 = vshll.u32 %v1223, 16
    %v1225 = vadd.s32 %v1224, %v1222
    %v1226 = vsel %vm350, %v1030, 2147483647
    %vm1227 = vcmp.lt.s32.totalorder %v1029, %v1226
    %v1228 = vsel %vm1227, %v1029, %v1226
    %v1229 = vand.u32 %v1228, 65535
    %v1230 = vshra.s32 %v1228, 16
    %v1231 = vcvt.s32.f32 %v1229
    %v1232 = vcvt.s32.f32 %v1230
    %1233 = vmin.xlane.f32.xlu0 %v1232
    %v1234 = vpop.xlane.xlu0 %1233
    %vm1235 = vcmp.eq.f32.partialorder %v1232, %v1234
    %v1236 = vsel %vm1235, %v1231, inf
    %1237 = vmin.xlane.f32.xlu0 %v1236
    %v1238 = vpop.xlane.xlu0 %1237
    %v1239 = vcvt.f32.s32 %v1238
    %v1240 = vcvt.f32.s32 %v1234
    %v1241 = vshll.u32 %v1240, 16
    %v1242 = vadd.s32 %v1241, %v1239
    %v1243 = vsel %vm350, %v1032, 2147483647
    %vm1244 = vcmp.lt.s32.totalorder %v1031, %v1243
    %v1245 = vsel %vm1244, %v1031, %v1243
    %v1246 = vand.u32 %v1245, 65535
    %v1247 = vshra.s32 %v1245, 16
    %v1248 = vcvt.s32.f32 %v1246
    %v1249 = vcvt.s32.f32 %v1247
    %1250 = vmin.xlane.f32.xlu0 %v1249
    %v1251 = vpop.xlane.xlu0 %1250
    %vm1252 = vcmp.eq.f32.partialorder %v1249, %v1251
    %v1253 = vsel %vm1252, %v1248, inf
    %1254 = vmin.xlane.f32.xlu0 %v1253
    %v1255 = vpop.xlane.xlu0 %1254
    %v1256 = vcvt.f32.s32 %v1255
    %v1257 = vcvt.f32.s32 %v1251
    %v1258 = vshll.u32 %v1257, 16
    %v1259 = vadd.s32 %v1258, %v1256
    %v1260 = vsel %vm350, %v1034, 2147483647
    %vm1261 = vcmp.lt.s32.totalorder %v1033, %v1260
    %v1262 = vsel %vm1261, %v1033, %v1260
    %v1263 = vand.u32 %v1262, 65535
    %v1264 = vshra.s32 %v1262, 16
    %v1265 = vcvt.s32.f32 %v1263
    %v1266 = vcvt.s32.f32 %v1264
    %1267 = vmin.xlane.f32.xlu0 %v1266
    %v1268 = vpop.xlane.xlu0 %1267
    %vm1269 = vcmp.eq.f32.partialorder %v1266, %v1268
    %v1270 = vsel %vm1269, %v1265, inf
    %1271 = vmin.xlane.f32.xlu0 %v1270
    %v1272 = vpop.xlane.xlu0 %1271
    %v1273 = vcvt.f32.s32 %v1272
    %v1274 = vcvt.f32.s32 %v1268
    %v1275 = vshll.u32 %v1274, 16
    %v1276 = vadd.s32 %v1275, %v1273
    %v1277 = vsel %vm350, %v1036, 2147483647
    %vm1278 = vcmp.lt.s32.totalorder %v1035, %v1277
    %v1279 = vsel %vm1278, %v1035, %v1277
    %v1280 = vand.u32 %v1279, 65535
    %v1281 = vshra.s32 %v1279, 16
    %v1282 = vcvt.s32.f32 %v1280
    %v1283 = vcvt.s32.f32 %v1281
    %1284 = vmin.xlane.f32.xlu0 %v1283
    %v1285 = vpop.xlane.xlu0 %1284
    %vm1286 = vcmp.eq.f32.partialorder %v1283, %v1285
    %v1287 = vsel %vm1286, %v1282, inf
    %1288 = vmin.xlane.f32.xlu0 %v1287
    %v1289 = vpop.xlane.xlu0 %1288
    %v1290 = vcvt.f32.s32 %v1289
    %v1291 = vcvt.f32.s32 %v1285
    %v1292 = vshll.u32 %v1291, 16
    %v1293 = vadd.s32 %v1292, %v1290
    %v1294 = vsel %vm350, %v1038, 2147483647
    %vm1295 = vcmp.lt.s32.totalorder %v1037, %v1294
    %v1296 = vsel %vm1295, %v1037, %v1294
    %v1297 = vand.u32 %v1296, 65535
    %v1298 = vshra.s32 %v1296, 16
    %v1299 = vcvt.s32.f32 %v1297
    %v1300 = vcvt.s32.f32 %v1298
    %1301 = vmin.xlane.f32.xlu0 %v1300
    %v1302 = vpop.xlane.xlu0 %1301
    %vm1303 = vcmp.eq.f32.partialorder %v1300, %v1302
    %v1304 = vsel %vm1303, %v1299, inf
    %1305 = vmin.xlane.f32.xlu0 %v1304
    %v1306 = vpop.xlane.xlu0 %1305
    %v1307 = vcvt.f32.s32 %v1306
    %v1308 = vcvt.f32.s32 %v1302
    %v1309 = vshll.u32 %v1308, 16
    %v1310 = vadd.s32 %v1309, %v1307
    %vm1311 = vcmp.eq.s32.totalorder %v348, %v1055
    %vm1312 = vcmp.eq.s32.totalorder %v349, %v1055
    %vm1313 = vcmp.eq.s32.totalorder %v348, %v1072
    %vm1314 = vcmp.eq.s32.totalorder %v349, %v1072
    %vm1315 = vcmp.eq.s32.totalorder %v348, %v1089
    %vm1316 = vcmp.eq.s32.totalorder %v349, %v1089
    %vm1317 = vcmp.eq.s32.totalorder %v348, %v1106
    %vm1318 = vcmp.eq.s32.totalorder %v349, %v1106
    %vm1319 = vcmp.eq.s32.totalorder %v348, %v1123
    %vm1320 = vcmp.eq.s32.totalorder %v349, %v1123
    %vm1321 = vcmp.eq.s32.totalorder %v348, %v1140
    %vm1322 = vcmp.eq.s32.totalorder %v349, %v1140
    %vm1323 = vcmp.eq.s32.totalorder %v348, %v1157
    %vm1324 = vcmp.eq.s32.totalorder %v349, %v1157
    %vm1325 = vcmp.eq.s32.totalorder %v348, %v1174
    %vm1326 = vcmp.eq.s32.totalorder %v349, %v1174
    %vm1327 = vcmp.eq.s32.totalorder %v348, %v1191
    %vm1328 = vcmp.eq.s32.totalorder %v349, %v1191
    %vm1329 = vcmp.eq.s32.totalorder %v348, %v1208
    %vm1330 = vcmp.eq.s32.totalorder %v349, %v1208
    %vm1331 = vcmp.eq.s32.totalorder %v348, %v1225
    %vm1332 = vcmp.eq.s32.totalorder %v349, %v1225
    %vm1333 = vcmp.eq.s32.totalorder %v348, %v1242
    %vm1334 = vcmp.eq.s32.totalorder %v349, %v1242
    %vm1335 = vcmp.eq.s32.totalorder %v348, %v1259
    %vm1336 = vcmp.eq.s32.totalorder %v349, %v1259
    %vm1337 = vcmp.eq.s32.totalorder %v348, %v1276
    %vm1338 = vcmp.eq.s32.totalorder %v349, %v1276
    %vm1339 = vcmp.eq.s32.totalorder %v348, %v1293
    %vm1340 = vcmp.eq.s32.totalorder %v349, %v1293
    %vm1341 = vcmp.eq.s32.totalorder %v348, %v1310
    %vm1342 = vcmp.eq.s32.totalorder %v349, %v1310
    %v1343 = vsel %vm1311, %v329, 0.0
    %v1344 = vsel %vm1312, %v331, 0.0
    %v1345 = vsel %vm1313, %v329, 0.0
    %v1346 = vsel %vm1314, %v332, 0.0
    %v1347 = vsel %vm1315, %v329, 0.0
    %v1348 = vsel %vm1316, %v333, 0.0
    %v1349 = vsel %vm1317, %v329, 0.0
    %v1350 = vsel %vm1318, %v334, 0.0
    %v1351 = vsel %vm1319, %v329, 0.0
    %v1352 = vsel %vm1320, %v335, 0.0
    %v1353 = vsel %vm1321, %v329, 0.0
    %v1354 = vsel %vm1322, %v336, 0.0
    %v1355 = vsel %vm1323, %v329, 0.0
    %v1356 = vsel %vm1324, %v337, 0.0
    %v1357 = vsel %vm1325, %v329, 0.0
    %v1358 = vsel %vm1326, %v338, 0.0
    %v1359 = vsel %vm1327, %v329, 0.0
    %v1360 = vsel %vm1328, %v339, 0.0
    %v1361 = vsel %vm1329, %v329, 0.0
    %v1362 = vsel %vm1330, %v340, 0.0
    %v1363 = vsel %vm1331, %v329, 0.0
    %v1364 = vsel %vm1332, %v341, 0.0
    %v1365 = vsel %vm1333, %v329, 0.0
    %v1366 = vsel %vm1334, %v342, 0.0
    %v1367 = vsel %vm1335, %v329, 0.0
    %v1368 = vsel %vm1336, %v343, 0.0
    %v1369 = vsel %vm1337, %v329, 0.0
    %v1370 = vsel %vm1338, %v344, 0.0
    %v1371 = vsel %vm1339, %v329, 0.0
    %v1372 = vsel %vm1340, %v345, 0.0
    %v1373 = vsel %vm1341, %v329, 0.0
    %v1374 = vsel %vm1342, %v346, 0.0
    %v1375 = vsel %vm350, %v1344, 0.0
    %v1376 = vadd.f32 %v1343, %v1375
    %1377 = vadd.xlane.f32.xlu0 %v1376
    %v1378 = vpop.xlane.xlu0 %1377
    %v1379 = vsel %vm350, %v1346, 0.0
    %v1380 = vadd.f32 %v1345, %v1379
    %1381 = vadd.xlane.f32.xlu0 %v1380
    %v1382 = vpop.xlane.xlu0 %1381
    %v1383 = vsel %vm350, %v1348, 0.0
    %v1384 = vadd.f32 %v1347, %v1383
    %1385 = vadd.xlane.f32.xlu0 %v1384
    %v1386 = vpop.xlane.xlu0 %1385
    %v1387 = vsel %vm350, %v1350, 0.0
    %v1388 = vadd.f32 %v1349, %v1387
    %1389 = vadd.xlane.f32.xlu0 %v1388
    %v1390 = vpop.xlane.xlu0 %1389
    %v1391 = vsel %vm350, %v1352, 0.0
    %v1392 = vadd.f32 %v1351, %v1391
    %1393 = vadd.xlane.f32.xlu0 %v1392
    %v1394 = vpop.xlane.xlu0 %1393
    %v1395 = vsel %vm350, %v1354, 0.0
    %v1396 = vadd.f32 %v1353, %v1395
    %1397 = vadd.xlane.f32.xlu0 %v1396
    %v1398 = vpop.xlane.xlu0 %1397
    %v1399 = vsel %vm350, %v1356, 0.0
    %v1400 = vadd.f32 %v1355, %v1399
    %1401 = vadd.xlane.f32.xlu0 %v1400
    %v1402 = vpop.xlane.xlu0 %1401
    %v1403 = vsel %vm350, %v1358, 0.0
    %v1404 = vadd.f32 %v1357, %v1403
    %1405 = vadd.xlane.f32.xlu0 %v1404
    %v1406 = vpop.xlane.xlu0 %1405
    %v1407 = vsel %vm350, %v1360, 0.0
    %v1408 = vadd.f32 %v1359, %v1407
    %1409 = vadd.xlane.f32.xlu0 %v1408
    %v1410 = vpop.xlane.xlu0 %1409
    %v1411 = vsel %vm350, %v1362, 0.0
    %v1412 = vadd.f32 %v1361, %v1411
    %1413 = vadd.xlane.f32.xlu0 %v1412
    %v1414 = vpop.xlane.xlu0 %1413
    %v1415 = vsel %vm350, %v1364, 0.0
    %v1416 = vadd.f32 %v1363, %v1415
    %1417 = vadd.xlane.f32.xlu0 %v1416
    %v1418 = vpop.xlane.xlu0 %1417
    %v1419 = vsel %vm350, %v1366, 0.0
    %v1420 = vadd.f32 %v1365, %v1419
    %1421 = vadd.xlane.f32.xlu0 %v1420
    %v1422 = vpop.xlane.xlu0 %1421
    %v1423 = vsel %vm350, %v1368, 0.0
    %v1424 = vadd.f32 %v1367, %v1423
    %1425 = vadd.xlane.f32.xlu0 %v1424
    %v1426 = vpop.xlane.xlu0 %1425
    %v1427 = vsel %vm350, %v1370, 0.0
    %v1428 = vadd.f32 %v1369, %v1427
    %1429 = vadd.xlane.f32.xlu0 %v1428
    %v1430 = vpop.xlane.xlu0 %1429
    %v1431 = vsel %vm350, %v1372, 0.0
    %v1432 = vadd.f32 %v1371, %v1431
    %1433 = vadd.xlane.f32.xlu0 %v1432
    %v1434 = vpop.xlane.xlu0 %1433
    %v1435 = vsel %vm350, %v1374, 0.0
    %v1436 = vadd.f32 %v1373, %v1435
    %1437 = vadd.xlane.f32.xlu0 %v1436
    %v1438 = vpop.xlane.xlu0 %1437
    %v1439 = vsel %vm1311, inf, %v879
    %v1440 = vsel %vm1312, inf, %v880
    %v1441 = vsel %vm1313, inf, %v881
    %v1442 = vsel %vm1314, inf, %v882
    %v1443 = vsel %vm1315, inf, %v883
    %v1444 = vsel %vm1316, inf, %v884
    %v1445 = vsel %vm1317, inf, %v885
    %v1446 = vsel %vm1318, inf, %v886
    %v1447 = vsel %vm1319, inf, %v887
    %v1448 = vsel %vm1320, inf, %v888
    %v1449 = vsel %vm1321, inf, %v889
    %v1450 = vsel %vm1322, inf, %v890
    %v1451 = vsel %vm1323, inf, %v891
    %v1452 = vsel %vm1324, inf, %v892
    %v1453 = vsel %vm1325, inf, %v893
    %v1454 = vsel %vm1326, inf, %v894
    %v1455 = vsel %vm1327, inf, %v895
    %v1456 = vsel %vm1328, inf, %v896
    %v1457 = vsel %vm1329, inf, %v897
    %v1458 = vsel %vm1330, inf, %v898
    %v1459 = vsel %vm1331, inf, %v899
    %v1460 = vsel %vm1332, inf, %v900
    %v1461 = vsel %vm1333, inf, %v901
    %v1462 = vsel %vm1334, inf, %v902
    %v1463 = vsel %vm1335, inf, %v903
    %v1464 = vsel %vm1336, inf, %v904
    %v1465 = vsel %vm1337, inf, %v905
    %v1466 = vsel %vm1338, inf, %v906
    %v1467 = vsel %vm1339, inf, %v907
    %v1468 = vsel %vm1340, inf, %v908
    %v1469 = vsel %vm1341, inf, %v909
    %v1470 = vsel %vm1342, inf, %v910
    %v1471 = vsel %vm350, %v1440, inf
    %v1472 = vmin.f32 %v1439, %v1471
    %1473 = vmin.xlane.f32.xlu0 %v1472
    %v1474 = vpop.xlane.xlu0 %1473
    %v1475 = vsel %vm350, %v1442, inf
    %v1476 = vmin.f32 %v1441, %v1475
    %1477 = vmin.xlane.f32.xlu0 %v1476
    %v1478 = vpop.xlane.xlu0 %1477
    %v1479 = vsel %vm350, %v1444, inf
    %v1480 = vmin.f32 %v1443, %v1479
    %1481 = vmin.xlane.f32.xlu0 %v1480
    %v1482 = vpop.xlane.xlu0 %1481
    %v1483 = vsel %vm350, %v1446, inf
    %v1484 = vmin.f32 %v1445, %v1483
    %1485 = vmin.xlane.f32.xlu0 %v1484
    %v1486 = vpop.xlane.xlu0 %1485
    %v1487 = vsel %vm350, %v1448, inf
    %v1488 = vmin.f32 %v1447, %v1487
    %1489 = vmin.xlane.f32.xlu0 %v1488
    %v1490 = vpop.xlane.xlu0 %1489
    %v1491 = vsel %vm350, %v1450, inf
    %v1492 = vmin.f32 %v1449, %v1491
    %1493 = vmin.xlane.f32.xlu0 %v1492
    %v1494 = vpop.xlane.xlu0 %1493
    %v1495 = vsel %vm350, %v1452, inf
    %v1496 = vmin.f32 %v1451, %v1495
    %1497 = vmin.xlane.f32.xlu0 %v1496
    %v1498 = vpop.xlane.xlu0 %1497
    %v1499 = vsel %vm350, %v1454, inf
    %v1500 = vmin.f32 %v1453, %v1499
    %1501 = vmin.xlane.f32.xlu0 %v1500
    %v1502 = vpop.xlane.xlu0 %1501
    %v1503 = vsel %vm350, %v1456, inf
    %v1504 = vmin.f32 %v1455, %v1503
    %1505 = vmin.xlane.f32.xlu0 %v1504
    %v1506 = vpop.xlane.xlu0 %1505
    %v1507 = vsel %vm350, %v1458, inf
    %v1508 = vmin.f32 %v1457, %v1507
    %1509 = vmin.xlane.f32.xlu0 %v1508
    %v1510 = vpop.xlane.xlu0 %1509
    %v1511 = vsel %vm350, %v1460, inf
    %v1512 = vmin.f32 %v1459, %v1511
    %1513 = vmin.xlane.f32.xlu0 %v1512
    %v1514 = vpop.xlane.xlu0 %1513
    %v1515 = vsel %vm350, %v1462, inf
    %v1516 = vmin.f32 %v1461, %v1515
    %1517 = vmin.xlane.f32.xlu0 %v1516
    %v1518 = vpop.xlane.xlu0 %1517
    %v1519 = vsel %vm350, %v1464, inf
    %v1520 = vmin.f32 %v1463, %v1519
    %1521 = vmin.xlane.f32.xlu0 %v1520
    %v1522 = vpop.xlane.xlu0 %1521
    %v1523 = vsel %vm350, %v1466, inf
    %v1524 = vmin.f32 %v1465, %v1523
    %1525 = vmin.xlane.f32.xlu0 %v1524
    %v1526 = vpop.xlane.xlu0 %1525
    %v1527 = vsel %vm350, %v1468, inf
    %v1528 = vmin.f32 %v1467, %v1527
    %1529 = vmin.xlane.f32.xlu0 %v1528
    %v1530 = vpop.xlane.xlu0 %1529
    %v1531 = vsel %vm350, %v1470, inf
    %v1532 = vmin.f32 %v1469, %v1531
    %1533 = vmin.xlane.f32.xlu0 %v1532
    %v1534 = vpop.xlane.xlu0 %1533
    %vm1535 = vcmp.eq.f32.partialorder %v1439, %v1474
    %vm1536 = vcmp.eq.f32.partialorder %v1440, %v1474
    %vm1537 = vcmp.eq.f32.partialorder %v1441, %v1478
    %vm1538 = vcmp.eq.f32.partialorder %v1442, %v1478
    %vm1539 = vcmp.eq.f32.partialorder %v1443, %v1482
    %vm1540 = vcmp.eq.f32.partialorder %v1444, %v1482
    %vm1541 = vcmp.eq.f32.partialorder %v1445, %v1486
    %vm1542 = vcmp.eq.f32.partialorder %v1446, %v1486
    %vm1543 = vcmp.eq.f32.partialorder %v1447, %v1490
    %vm1544 = vcmp.eq.f32.partialorder %v1448, %v1490
    %vm1545 = vcmp.eq.f32.partialorder %v1449, %v1494
    %vm1546 = vcmp.eq.f32.partialorder %v1450, %v1494
    %vm1547 = vcmp.eq.f32.partialorder %v1451, %v1498
    %vm1548 = vcmp.eq.f32.partialorder %v1452, %v1498
    %vm1549 = vcmp.eq.f32.partialorder %v1453, %v1502
    %vm1550 = vcmp.eq.f32.partialorder %v1454, %v1502
    %vm1551 = vcmp.eq.f32.partialorder %v1455, %v1506
    %vm1552 = vcmp.eq.f32.partialorder %v1456, %v1506
    %vm1553 = vcmp.eq.f32.partialorder %v1457, %v1510
    %vm1554 = vcmp.eq.f32.partialorder %v1458, %v1510
    %vm1555 = vcmp.eq.f32.partialorder %v1459, %v1514
    %vm1556 = vcmp.eq.f32.partialorder %v1460, %v1514
    %vm1557 = vcmp.eq.f32.partialorder %v1461, %v1518
    %vm1558 = vcmp.eq.f32.partialorder %v1462, %v1518
    %vm1559 = vcmp.eq.f32.partialorder %v1463, %v1522
    %vm1560 = vcmp.eq.f32.partialorder %v1464, %v1522
    %vm1561 = vcmp.eq.f32.partialorder %v1465, %v1526
    %vm1562 = vcmp.eq.f32.partialorder %v1466, %v1526
    %vm1563 = vcmp.eq.f32.partialorder %v1467, %v1530
    %vm1564 = vcmp.eq.f32.partialorder %v1468, %v1530
    %vm1565 = vcmp.eq.f32.partialorder %v1469, %v1534
    %vm1566 = vcmp.eq.f32.partialorder %v1470, %v1534
    %v1567 = vsel %vm1535, %v348, 133
    %v1568 = vsel %vm1536, %v349, 133
    %v1569 = vsel %vm1537, %v348, 133
    %v1570 = vsel %vm1538, %v349, 133
    %v1571 = vsel %vm1539, %v348, 133
    %v1572 = vsel %vm1540, %v349, 133
    %v1573 = vsel %vm1541, %v348, 133
    %v1574 = vsel %vm1542, %v349, 133
    %v1575 = vsel %vm1543, %v348, 133
    %v1576 = vsel %vm1544, %v349, 133
    %v1577 = vsel %vm1545, %v348, 133
    %v1578 = vsel %vm1546, %v349, 133
    %v1579 = vsel %vm1547, %v348, 133
    %v1580 = vsel %vm1548, %v349, 133
    %v1581 = vsel %vm1549, %v348, 133
    %v1582 = vsel %vm1550, %v349, 133
    %v1583 = vsel %vm1551, %v348, 133
    %v1584 = vsel %vm1552, %v349, 133
    %v1585 = vsel %vm1553, %v348, 133
    %v1586 = vsel %vm1554, %v349, 133
    %v1587 = vsel %vm1555, %v348, 133
    %v1588 = vsel %vm1556, %v349, 133
    %v1589 = vsel %vm1557, %v348, 133
    %v1590 = vsel %vm1558, %v349, 133
    %v1591 = vsel %vm1559, %v348, 133
    %v1592 = vsel %vm1560, %v349, 133
    %v1593 = vsel %vm1561, %v348, 133
    %v1594 = vsel %vm1562, %v349, 133
    %v1595 = vsel %vm1563, %v348, 133
    %v1596 = vsel %vm1564, %v349, 133
    %v1597 = vsel %vm1565, %v348, 133
    %v1598 = vsel %vm1566, %v349, 133
    %v1599 = vsel %vm350, %v1568, 2147483647
    %vm1600 = vcmp.lt.s32.totalorder %v1567, %v1599
    %v1601 = vsel %vm1600, %v1567, %v1599
    %v1602 = vand.u32 %v1601, 65535
    %v1603 = vshra.s32 %v1601, 16
    %v1604 = vcvt.s32.f32 %v1602
    %v1605 = vcvt.s32.f32 %v1603
    %1606 = vmin.xlane.f32.xlu0 %v1605
    %v1607 = vpop.xlane.xlu0 %1606
    %vm1608 = vcmp.eq.f32.partialorder %v1605, %v1607
    %v1609 = vsel %vm1608, %v1604, inf
    %1610 = vmin.xlane.f32.xlu0 %v1609
    %v1611 = vpop.xlane.xlu0 %1610
    %v1612 = vcvt.f32.s32 %v1611
    %v1613 = vcvt.f32.s32 %v1607
    %v1614 = vshll.u32 %v1613, 16
    %v1615 = vadd.s32 %v1614, %v1612
    %v1616 = vsel %vm350, %v1570, 2147483647
    %vm1617 = vcmp.lt.s32.totalorder %v1569, %v1616
    %v1618 = vsel %vm1617, %v1569, %v1616
    %v1619 = vand.u32 %v1618, 65535
    %v1620 = vshra.s32 %v1618, 16
    %v1621 = vcvt.s32.f32 %v1619
    %v1622 = vcvt.s32.f32 %v1620
    %1623 = vmin.xlane.f32.xlu0 %v1622
    %v1624 = vpop.xlane.xlu0 %1623
    %vm1625 = vcmp.eq.f32.partialorder %v1622, %v1624
    %v1626 = vsel %vm1625, %v1621, inf
    %1627 = vmin.xlane.f32.xlu0 %v1626
    %v1628 = vpop.xlane.xlu0 %1627
    %v1629 = vcvt.f32.s32 %v1628
    %v1630 = vcvt.f32.s32 %v1624
    %v1631 = vshll.u32 %v1630, 16
    %v1632 = vadd.s32 %v1631, %v1629
    %v1633 = vsel %vm350, %v1572, 2147483647
    %vm1634 = vcmp.lt.s32.totalorder %v1571, %v1633
    %v1635 = vsel %vm1634, %v1571, %v1633
    %v1636 = vand.u32 %v1635, 65535
    %v1637 = vshra.s32 %v1635, 16
    %v1638 = vcvt.s32.f32 %v1636
    %v1639 = vcvt.s32.f32 %v1637
    %1640 = vmin.xlane.f32.xlu0 %v1639
    %v1641 = vpop.xlane.xlu0 %1640
    %vm1642 = vcmp.eq.f32.partialorder %v1639, %v1641
    %v1643 = vsel %vm1642, %v1638, inf
    %1644 = vmin.xlane.f32.xlu0 %v1643
    %v1645 = vpop.xlane.xlu0 %1644
    %v1646 = vcvt.f32.s32 %v1645
    %v1647 = vcvt.f32.s32 %v1641
    %v1648 = vshll.u32 %v1647, 16
    %v1649 = vadd.s32 %v1648, %v1646
    %v1650 = vsel %vm350, %v1574, 2147483647
    %vm1651 = vcmp.lt.s32.totalorder %v1573, %v1650
    %v1652 = vsel %vm1651, %v1573, %v1650
    %v1653 = vand.u32 %v1652, 65535
    %v1654 = vshra.s32 %v1652, 16
    %v1655 = vcvt.s32.f32 %v1653
    %v1656 = vcvt.s32.f32 %v1654
    %1657 = vmin.xlane.f32.xlu0 %v1656
    %v1658 = vpop.xlane.xlu0 %1657
    %vm1659 = vcmp.eq.f32.partialorder %v1656, %v1658
    %v1660 = vsel %vm1659, %v1655, inf
    %1661 = vmin.xlane.f32.xlu0 %v1660
    %v1662 = vpop.xlane.xlu0 %1661
    %v1663 = vcvt.f32.s32 %v1662
    %v1664 = vcvt.f32.s32 %v1658
    %v1665 = vshll.u32 %v1664, 16
    %v1666 = vadd.s32 %v1665, %v1663
    %v1667 = vsel %vm350, %v1576, 2147483647
    %vm1668 = vcmp.lt.s32.totalorder %v1575, %v1667
    %v1669 = vsel %vm1668, %v1575, %v1667
    %v1670 = vand.u32 %v1669, 65535
    %v1671 = vshra.s32 %v1669, 16
    %v1672 = vcvt.s32.f32 %v1670
    %v1673 = vcvt.s32.f32 %v1671
    %1674 = vmin.xlane.f32.xlu0 %v1673
    %v1675 = vpop.xlane.xlu0 %1674
    %vm1676 = vcmp.eq.f32.partialorder %v1673, %v1675
    %v1677 = vsel %vm1676, %v1672, inf
    %1678 = vmin.xlane.f32.xlu0 %v1677
    %v1679 = vpop.xlane.xlu0 %1678
    %v1680 = vcvt.f32.s32 %v1679
    %v1681 = vcvt.f32.s32 %v1675
    %v1682 = vshll.u32 %v1681, 16
    %v1683 = vadd.s32 %v1682, %v1680
    %v1684 = vsel %vm350, %v1578, 2147483647
    %vm1685 = vcmp.lt.s32.totalorder %v1577, %v1684
    %v1686 = vsel %vm1685, %v1577, %v1684
    %v1687 = vand.u32 %v1686, 65535
    %v1688 = vshra.s32 %v1686, 16
    %v1689 = vcvt.s32.f32 %v1687
    %v1690 = vcvt.s32.f32 %v1688
    %1691 = vmin.xlane.f32.xlu0 %v1690
    %v1692 = vpop.xlane.xlu0 %1691
    %vm1693 = vcmp.eq.f32.partialorder %v1690, %v1692
    %v1694 = vsel %vm1693, %v1689, inf
    %1695 = vmin.xlane.f32.xlu0 %v1694
    %v1696 = vpop.xlane.xlu0 %1695
    %v1697 = vcvt.f32.s32 %v1696
    %v1698 = vcvt.f32.s32 %v1692
    %v1699 = vshll.u32 %v1698, 16
    %v1700 = vadd.s32 %v1699, %v1697
    %v1701 = vsel %vm350, %v1580, 2147483647
    %vm1702 = vcmp.lt.s32.totalorder %v1579, %v1701
    %v1703 = vsel %vm1702, %v1579, %v1701
    %v1704 = vand.u32 %v1703, 65535
    %v1705 = vshra.s32 %v1703, 16
    %v1706 = vcvt.s32.f32 %v1704
    %v1707 = vcvt.s32.f32 %v1705
    %1708 = vmin.xlane.f32.xlu0 %v1707
    %v1709 = vpop.xlane.xlu0 %1708
    %vm1710 = vcmp.eq.f32.partialorder %v1707, %v1709
    %v1711 = vsel %vm1710, %v1706, inf
    %1712 = vmin.xlane.f32.xlu0 %v1711
    %v1713 = vpop.xlane.xlu0 %1712
    %v1714 = vcvt.f32.s32 %v1713
    %v1715 = vcvt.f32.s32 %v1709
    %v1716 = vshll.u32 %v1715, 16
    %v1717 = vadd.s32 %v1716, %v1714
    %v1718 = vsel %vm350, %v1582, 2147483647
    %vm1719 = vcmp.lt.s32.totalorder %v1581, %v1718
    %v1720 = vsel %vm1719, %v1581, %v1718
    %v1721 = vand.u32 %v1720, 65535
    %v1722 = vshra.s32 %v1720, 16
    %v1723 = vcvt.s32.f32 %v1721
    %v1724 = vcvt.s32.f32 %v1722
    %1725 = vmin.xlane.f32.xlu0 %v1724
    %v1726 = vpop.xlane.xlu0 %1725
    %vm1727 = vcmp.eq.f32.partialorder %v1724, %v1726
    %v1728 = vsel %vm1727, %v1723, inf
    %1729 = vmin.xlane.f32.xlu0 %v1728
    %v1730 = vpop.xlane.xlu0 %1729
    %v1731 = vcvt.f32.s32 %v1730
    %v1732 = vcvt.f32.s32 %v1726
    %v1733 = vshll.u32 %v1732, 16
    %v1734 = vadd.s32 %v1733, %v1731
    %v1735 = vsel %vm350, %v1584, 2147483647
    %vm1736 = vcmp.lt.s32.totalorder %v1583, %v1735
    %v1737 = vsel %vm1736, %v1583, %v1735
    %v1738 = vand.u32 %v1737, 65535
    %v1739 = vshra.s32 %v1737, 16
    %v1740 = vcvt.s32.f32 %v1738
    %v1741 = vcvt.s32.f32 %v1739
    %1742 = vmin.xlane.f32.xlu0 %v1741
    %v1743 = vpop.xlane.xlu0 %1742
    %vm1744 = vcmp.eq.f32.partialorder %v1741, %v1743
    %v1745 = vsel %vm1744, %v1740, inf
    %1746 = vmin.xlane.f32.xlu0 %v1745
    %v1747 = vpop.xlane.xlu0 %1746
    %v1748 = vcvt.f32.s32 %v1747
    %v1749 = vcvt.f32.s32 %v1743
    %v1750 = vshll.u32 %v1749, 16
    %v1751 = vadd.s32 %v1750, %v1748
    %v1752 = vsel %vm350, %v1586, 2147483647
    %vm1753 = vcmp.lt.s32.totalorder %v1585, %v1752
    %v1754 = vsel %vm1753, %v1585, %v1752
    %v1755 = vand.u32 %v1754, 65535
    %v1756 = vshra.s32 %v1754, 16
    %v1757 = vcvt.s32.f32 %v1755
    %v1758 = vcvt.s32.f32 %v1756
    %1759 = vmin.xlane.f32.xlu0 %v1758
    %v1760 = vpop.xlane.xlu0 %1759
    %vm1761 = vcmp.eq.f32.partialorder %v1758, %v1760
    %v1762 = vsel %vm1761, %v1757, inf
    %1763 = vmin.xlane.f32.xlu0 %v1762
    %v1764 = vpop.xlane.xlu0 %1763
    %v1765 = vcvt.f32.s32 %v1764
    %v1766 = vcvt.f32.s32 %v1760
    %v1767 = vshll.u32 %v1766, 16
    %v1768 = vadd.s32 %v1767, %v1765
    %v1769 = vsel %vm350, %v1588, 2147483647
    %vm1770 = vcmp.lt.s32.totalorder %v1587, %v1769
    %v1771 = vsel %vm1770, %v1587, %v1769
    %v1772 = vand.u32 %v1771, 65535
    %v1773 = vshra.s32 %v1771, 16
    %v1774 = vcvt.s32.f32 %v1772
    %v1775 = vcvt.s32.f32 %v1773
    %1776 = vmin.xlane.f32.xlu0 %v1775
    %v1777 = vpop.xlane.xlu0 %1776
    %vm1778 = vcmp.eq.f32.partialorder %v1775, %v1777
    %v1779 = vsel %vm1778, %v1774, inf
    %1780 = vmin.xlane.f32.xlu0 %v1779
    %v1781 = vpop.xlane.xlu0 %1780
    %v1782 = vcvt.f32.s32 %v1781
    %v1783 = vcvt.f32.s32 %v1777
    %v1784 = vshll.u32 %v1783, 16
    %v1785 = vadd.s32 %v1784, %v1782
    %v1786 = vsel %vm350, %v1590, 2147483647
    %vm1787 = vcmp.lt.s32.totalorder %v1589, %v1786
    %v1788 = vsel %vm1787, %v1589, %v1786
    %v1789 = vand.u32 %v1788, 65535
    %v1790 = vshra.s32 %v1788, 16
    %v1791 = vcvt.s32.f32 %v1789
    %v1792 = vcvt.s32.f32 %v1790
    %1793 = vmin.xlane.f32.xlu0 %v1792
    %v1794 = vpop.xlane.xlu0 %1793
    %vm1795 = vcmp.eq.f32.partialorder %v1792, %v1794
    %v1796 = vsel %vm1795, %v1791, inf
    %1797 = vmin.xlane.f32.xlu0 %v1796
    %v1798 = vpop.xlane.xlu0 %1797
    %v1799 = vcvt.f32.s32 %v1798
    %v1800 = vcvt.f32.s32 %v1794
    %v1801 = vshll.u32 %v1800, 16
    %v1802 = vadd.s32 %v1801, %v1799
    %v1803 = vsel %vm350, %v1592, 2147483647
    %vm1804 = vcmp.lt.s32.totalorder %v1591, %v1803
    %v1805 = vsel %vm1804, %v1591, %v1803
    %v1806 = vand.u32 %v1805, 65535
    %v1807 = vshra.s32 %v1805, 16
    %v1808 = vcvt.s32.f32 %v1806
    %v1809 = vcvt.s32.f32 %v1807
    %1810 = vmin.xlane.f32.xlu0 %v1809
    %v1811 = vpop.xlane.xlu0 %1810
    %vm1812 = vcmp.eq.f32.partialorder %v1809, %v1811
    %v1813 = vsel %vm1812, %v1808, inf
    %1814 = vmin.xlane.f32.xlu0 %v1813
    %v1815 = vpop.xlane.xlu0 %1814
    %v1816 = vcvt.f32.s32 %v1815
    %v1817 = vcvt.f32.s32 %v1811
    %v1818 = vshll.u32 %v1817, 16
    %v1819 = vadd.s32 %v1818, %v1816
    %v1820 = vsel %vm350, %v1594, 2147483647
    %vm1821 = vcmp.lt.s32.totalorder %v1593, %v1820
    %v1822 = vsel %vm1821, %v1593, %v1820
    %v1823 = vand.u32 %v1822, 65535
    %v1824 = vshra.s32 %v1822, 16
    %v1825 = vcvt.s32.f32 %v1823
    %v1826 = vcvt.s32.f32 %v1824
    %1827 = vmin.xlane.f32.xlu0 %v1826
    %v1828 = vpop.xlane.xlu0 %1827
    %vm1829 = vcmp.eq.f32.partialorder %v1826, %v1828
    %v1830 = vsel %vm1829, %v1825, inf
    %1831 = vmin.xlane.f32.xlu0 %v1830
    %v1832 = vpop.xlane.xlu0 %1831
    %v1833 = vcvt.f32.s32 %v1832
    %v1834 = vcvt.f32.s32 %v1828
    %v1835 = vshll.u32 %v1834, 16
    %v1836 = vadd.s32 %v1835, %v1833
    %v1837 = vsel %vm350, %v1596, 2147483647
    %vm1838 = vcmp.lt.s32.totalorder %v1595, %v1837
    %v1839 = vsel %vm1838, %v1595, %v1837
    %v1840 = vand.u32 %v1839, 65535
    %v1841 = vshra.s32 %v1839, 16
    %v1842 = vcvt.s32.f32 %v1840
    %v1843 = vcvt.s32.f32 %v1841
    %1844 = vmin.xlane.f32.xlu0 %v1843
    %v1845 = vpop.xlane.xlu0 %1844
    %vm1846 = vcmp.eq.f32.partialorder %v1843, %v1845
    %v1847 = vsel %vm1846, %v1842, inf
    %1848 = vmin.xlane.f32.xlu0 %v1847
    %v1849 = vpop.xlane.xlu0 %1848
    %v1850 = vcvt.f32.s32 %v1849
    %v1851 = vcvt.f32.s32 %v1845
    %v1852 = vshll.u32 %v1851, 16
    %v1853 = vadd.s32 %v1852, %v1850
    %v1854 = vsel %vm350, %v1598, 2147483647
    %vm1855 = vcmp.lt.s32.totalorder %v1597, %v1854
    %v1856 = vsel %vm1855, %v1597, %v1854
    %v1857 = vand.u32 %v1856, 65535
    %v1858 = vshra.s32 %v1856, 16
    %v1859 = vcvt.s32.f32 %v1857
    %v1860 = vcvt.s32.f32 %v1858
    %1861 = vmin.xlane.f32.xlu0 %v1860
    %v1862 = vpop.xlane.xlu0 %1861
    %vm1863 = vcmp.eq.f32.partialorder %v1860, %v1862
    %v1864 = vsel %vm1863, %v1859, inf
    %1865 = vmin.xlane.f32.xlu0 %v1864
    %v1866 = vpop.xlane.xlu0 %1865
    %v1867 = vcvt.f32.s32 %v1866
    %v1868 = vcvt.f32.s32 %v1862
    %v1869 = vshll.u32 %v1868, 16
    %v1870 = vadd.s32 %v1869, %v1867
    %vm1871 = vcmp.eq.s32.totalorder %v348, %v1615
    %vm1872 = vcmp.eq.s32.totalorder %v349, %v1615
    %vm1873 = vcmp.eq.s32.totalorder %v348, %v1632
    %vm1874 = vcmp.eq.s32.totalorder %v349, %v1632
    %vm1875 = vcmp.eq.s32.totalorder %v348, %v1649
    %vm1876 = vcmp.eq.s32.totalorder %v349, %v1649
    %vm1877 = vcmp.eq.s32.totalorder %v348, %v1666
    %vm1878 = vcmp.eq.s32.totalorder %v349, %v1666
    %vm1879 = vcmp.eq.s32.totalorder %v348, %v1683
    %vm1880 = vcmp.eq.s32.totalorder %v349, %v1683
    %vm1881 = vcmp.eq.s32.totalorder %v348, %v1700
    %vm1882 = vcmp.eq.s32.totalorder %v349, %v1700
    %vm1883 = vcmp.eq.s32.totalorder %v348, %v1717
    %vm1884 = vcmp.eq.s32.totalorder %v349, %v1717
    %vm1885 = vcmp.eq.s32.totalorder %v348, %v1734
    %vm1886 = vcmp.eq.s32.totalorder %v349, %v1734
    %vm1887 = vcmp.eq.s32.totalorder %v348, %v1751
    %vm1888 = vcmp.eq.s32.totalorder %v349, %v1751
    %vm1889 = vcmp.eq.s32.totalorder %v348, %v1768
    %vm1890 = vcmp.eq.s32.totalorder %v349, %v1768
    %vm1891 = vcmp.eq.s32.totalorder %v348, %v1785
    %vm1892 = vcmp.eq.s32.totalorder %v349, %v1785
    %vm1893 = vcmp.eq.s32.totalorder %v348, %v1802
    %vm1894 = vcmp.eq.s32.totalorder %v349, %v1802
    %vm1895 = vcmp.eq.s32.totalorder %v348, %v1819
    %vm1896 = vcmp.eq.s32.totalorder %v349, %v1819
    %vm1897 = vcmp.eq.s32.totalorder %v348, %v1836
    %vm1898 = vcmp.eq.s32.totalorder %v349, %v1836
    %vm1899 = vcmp.eq.s32.totalorder %v348, %v1853
    %vm1900 = vcmp.eq.s32.totalorder %v349, %v1853
    %vm1901 = vcmp.eq.s32.totalorder %v348, %v1870
    %vm1902 = vcmp.eq.s32.totalorder %v349, %v1870
    %v1903 = vsel %vm1871, %v329, 0.0
    %v1904 = vsel %vm1872, %v331, 0.0
    %v1905 = vsel %vm1873, %v329, 0.0
    %v1906 = vsel %vm1874, %v332, 0.0
    %v1907 = vsel %vm1875, %v329, 0.0
    %v1908 = vsel %vm1876, %v333, 0.0
    %v1909 = vsel %vm1877, %v329, 0.0
    %v1910 = vsel %vm1878, %v334, 0.0
    %v1911 = vsel %vm1879, %v329, 0.0
    %v1912 = vsel %vm1880, %v335, 0.0
    %v1913 = vsel %vm1881, %v329, 0.0
    %v1914 = vsel %vm1882, %v336, 0.0
    %v1915 = vsel %vm1883, %v329, 0.0
    %v1916 = vsel %vm1884, %v337, 0.0
    %v1917 = vsel %vm1885, %v329, 0.0
    %v1918 = vsel %vm1886, %v338, 0.0
    %v1919 = vsel %vm1887, %v329, 0.0
    %v1920 = vsel %vm1888, %v339, 0.0
    %v1921 = vsel %vm1889, %v329, 0.0
    %v1922 = vsel %vm1890, %v340, 0.0
    %v1923 = vsel %vm1891, %v329, 0.0
    %v1924 = vsel %vm1892, %v341, 0.0
    %v1925 = vsel %vm1893, %v329, 0.0
    %v1926 = vsel %vm1894, %v342, 0.0
    %v1927 = vsel %vm1895, %v329, 0.0
    %v1928 = vsel %vm1896, %v343, 0.0
    %v1929 = vsel %vm1897, %v329, 0.0
    %v1930 = vsel %vm1898, %v344, 0.0
    %v1931 = vsel %vm1899, %v329, 0.0
    %v1932 = vsel %vm1900, %v345, 0.0
    %v1933 = vsel %vm1901, %v329, 0.0
    %v1934 = vsel %vm1902, %v346, 0.0
    %v1935 = vsel %vm350, %v1904, 0.0
    %v1936 = vadd.f32 %v1903, %v1935
    %1937 = vadd.xlane.f32.xlu0 %v1936
    %v1938 = vpop.xlane.xlu0 %1937
    %v1939 = vsel %vm350, %v1906, 0.0
    %v1940 = vadd.f32 %v1905, %v1939
    %1941 = vadd.xlane.f32.xlu0 %v1940
    %v1942 = vpop.xlane.xlu0 %1941
    %v1943 = vsel %vm350, %v1908, 0.0
    %v1944 = vadd.f32 %v1907, %v1943
    %1945 = vadd.xlane.f32.xlu0 %v1944
    %v1946 = vpop.xlane.xlu0 %1945
    %v1947 = vsel %vm350, %v1910, 0.0
    %v1948 = vadd.f32 %v1909, %v1947
    %1949 = vadd.xlane.f32.xlu0 %v1948
    %v1950 = vpop.xlane.xlu0 %1949
    %v1951 = vsel %vm350, %v1912, 0.0
    %v1952 = vadd.f32 %v1911, %v1951
    %1953 = vadd.xlane.f32.xlu0 %v1952
    %v1954 = vpop.xlane.xlu0 %1953
    %v1955 = vsel %vm350, %v1914, 0.0
    %v1956 = vadd.f32 %v1913, %v1955
    %1957 = vadd.xlane.f32.xlu0 %v1956
    %v1958 = vpop.xlane.xlu0 %1957
    %v1959 = vsel %vm350, %v1916, 0.0
    %v1960 = vadd.f32 %v1915, %v1959
    %1961 = vadd.xlane.f32.xlu0 %v1960
    %v1962 = vpop.xlane.xlu0 %1961
    %v1963 = vsel %vm350, %v1918, 0.0
    %v1964 = vadd.f32 %v1917, %v1963
    %1965 = vadd.xlane.f32.xlu0 %v1964
    %v1966 = vpop.xlane.xlu0 %1965
    %v1967 = vsel %vm350, %v1920, 0.0
    %v1968 = vadd.f32 %v1919, %v1967
    %1969 = vadd.xlane.f32.xlu0 %v1968
    %v1970 = vpop.xlane.xlu0 %1969
    %v1971 = vsel %vm350, %v1922, 0.0
    %v1972 = vadd.f32 %v1921, %v1971
    %1973 = vadd.xlane.f32.xlu0 %v1972
    %v1974 = vpop.xlane.xlu0 %1973
    %v1975 = vsel %vm350, %v1924, 0.0
    %v1976 = vadd.f32 %v1923, %v1975
    %1977 = vadd.xlane.f32.xlu0 %v1976
    %v1978 = vpop.xlane.xlu0 %1977
    %v1979 = vsel %vm350, %v1926, 0.0
    %v1980 = vadd.f32 %v1925, %v1979
    %1981 = vadd.xlane.f32.xlu0 %v1980
    %v1982 = vpop.xlane.xlu0 %1981
    %v1983 = vsel %vm350, %v1928, 0.0
    %v1984 = vadd.f32 %v1927, %v1983
    %1985 = vadd.xlane.f32.xlu0 %v1984
    %v1986 = vpop.xlane.xlu0 %1985
    %v1987 = vsel %vm350, %v1930, 0.0
    %v1988 = vadd.f32 %v1929, %v1987
    %1989 = vadd.xlane.f32.xlu0 %v1988
    %v1990 = vpop.xlane.xlu0 %1989
    %v1991 = vsel %vm350, %v1932, 0.0
    %v1992 = vadd.f32 %v1931, %v1991
    %1993 = vadd.xlane.f32.xlu0 %v1992
    %v1994 = vpop.xlane.xlu0 %1993
    %v1995 = vsel %vm350, %v1934, 0.0
    %v1996 = vadd.f32 %v1933, %v1995
    %1997 = vadd.xlane.f32.xlu0 %v1996
    %v1998 = vpop.xlane.xlu0 %1997
    %v1999 = vsel %vm1871, inf, %v1439
    %v2000 = vsel %vm1872, inf, %v1440
    %v2001 = vsel %vm1873, inf, %v1441
    %v2002 = vsel %vm1874, inf, %v1442
    %v2003 = vsel %vm1875, inf, %v1443
    %v2004 = vsel %vm1876, inf, %v1444
    %v2005 = vsel %vm1877, inf, %v1445
    %v2006 = vsel %vm1878, inf, %v1446
    %v2007 = vsel %vm1879, inf, %v1447
    %v2008 = vsel %vm1880, inf, %v1448
    %v2009 = vsel %vm1881, inf, %v1449
    %v2010 = vsel %vm1882, inf, %v1450
    %v2011 = vsel %vm1883, inf, %v1451
    %v2012 = vsel %vm1884, inf, %v1452
    %v2013 = vsel %vm1885, inf, %v1453
    %v2014 = vsel %vm1886, inf, %v1454
    %v2015 = vsel %vm1887, inf, %v1455
    %v2016 = vsel %vm1888, inf, %v1456
    %v2017 = vsel %vm1889, inf, %v1457
    %v2018 = vsel %vm1890, inf, %v1458
    %v2019 = vsel %vm1891, inf, %v1459
    %v2020 = vsel %vm1892, inf, %v1460
    %v2021 = vsel %vm1893, inf, %v1461
    %v2022 = vsel %vm1894, inf, %v1462
    %v2023 = vsel %vm1895, inf, %v1463
    %v2024 = vsel %vm1896, inf, %v1464
    %v2025 = vsel %vm1897, inf, %v1465
    %v2026 = vsel %vm1898, inf, %v1466
    %v2027 = vsel %vm1899, inf, %v1467
    %v2028 = vsel %vm1900, inf, %v1468
    %v2029 = vsel %vm1901, inf, %v1469
    %v2030 = vsel %vm1902, inf, %v1470
    %v2031 = vsel %vm350, %v2000, inf
    %v2032 = vmin.f32 %v1999, %v2031
    %2033 = vmin.xlane.f32.xlu0 %v2032
    %v2034 = vpop.xlane.xlu0 %2033
    %v2035 = vsel %vm350, %v2002, inf
    %v2036 = vmin.f32 %v2001, %v2035
    %2037 = vmin.xlane.f32.xlu0 %v2036
    %v2038 = vpop.xlane.xlu0 %2037
    %v2039 = vsel %vm350, %v2004, inf
    %v2040 = vmin.f32 %v2003, %v2039
    %2041 = vmin.xlane.f32.xlu0 %v2040
    %v2042 = vpop.xlane.xlu0 %2041
    %v2043 = vsel %vm350, %v2006, inf
    %v2044 = vmin.f32 %v2005, %v2043
    %2045 = vmin.xlane.f32.xlu0 %v2044
    %v2046 = vpop.xlane.xlu0 %2045
    %v2047 = vsel %vm350, %v2008, inf
    %v2048 = vmin.f32 %v2007, %v2047
    %2049 = vmin.xlane.f32.xlu0 %v2048
    %v2050 = vpop.xlane.xlu0 %2049
    %v2051 = vsel %vm350, %v2010, inf
    %v2052 = vmin.f32 %v2009, %v2051
    %2053 = vmin.xlane.f32.xlu0 %v2052
    %v2054 = vpop.xlane.xlu0 %2053
    %v2055 = vsel %vm350, %v2012, inf
    %v2056 = vmin.f32 %v2011, %v2055
    %2057 = vmin.xlane.f32.xlu0 %v2056
    %v2058 = vpop.xlane.xlu0 %2057
    %v2059 = vsel %vm350, %v2014, inf
    %v2060 = vmin.f32 %v2013, %v2059
    %2061 = vmin.xlane.f32.xlu0 %v2060
    %v2062 = vpop.xlane.xlu0 %2061
    %v2063 = vsel %vm350, %v2016, inf
    %v2064 = vmin.f32 %v2015, %v2063
    %2065 = vmin.xlane.f32.xlu0 %v2064
    %v2066 = vpop.xlane.xlu0 %2065
    %v2067 = vsel %vm350, %v2018, inf
    %v2068 = vmin.f32 %v2017, %v2067
    %2069 = vmin.xlane.f32.xlu0 %v2068
    %v2070 = vpop.xlane.xlu0 %2069
    %v2071 = vsel %vm350, %v2020, inf
    %v2072 = vmin.f32 %v2019, %v2071
    %2073 = vmin.xlane.f32.xlu0 %v2072
    %v2074 = vpop.xlane.xlu0 %2073
    %v2075 = vsel %vm350, %v2022, inf
    %v2076 = vmin.f32 %v2021, %v2075
    %2077 = vmin.xlane.f32.xlu0 %v2076
    %v2078 = vpop.xlane.xlu0 %2077
    %v2079 = vsel %vm350, %v2024, inf
    %v2080 = vmin.f32 %v2023, %v2079
    %2081 = vmin.xlane.f32.xlu0 %v2080
    %v2082 = vpop.xlane.xlu0 %2081
    %v2083 = vsel %vm350, %v2026, inf
    %v2084 = vmin.f32 %v2025, %v2083
    %2085 = vmin.xlane.f32.xlu0 %v2084
    %v2086 = vpop.xlane.xlu0 %2085
    %v2087 = vsel %vm350, %v2028, inf
    %v2088 = vmin.f32 %v2027, %v2087
    %2089 = vmin.xlane.f32.xlu0 %v2088
    %v2090 = vpop.xlane.xlu0 %2089
    %v2091 = vsel %vm350, %v2030, inf
    %v2092 = vmin.f32 %v2029, %v2091
    %2093 = vmin.xlane.f32.xlu0 %v2092
    %v2094 = vpop.xlane.xlu0 %2093
    %vm2095 = vcmp.eq.f32.partialorder %v1999, %v2034
    %vm2096 = vcmp.eq.f32.partialorder %v2000, %v2034
    %vm2097 = vcmp.eq.f32.partialorder %v2001, %v2038
    %vm2098 = vcmp.eq.f32.partialorder %v2002, %v2038
    %vm2099 = vcmp.eq.f32.partialorder %v2003, %v2042
    %vm2100 = vcmp.eq.f32.partialorder %v2004, %v2042
    %vm2101 = vcmp.eq.f32.partialorder %v2005, %v2046
    %vm2102 = vcmp.eq.f32.partialorder %v2006, %v2046
    %vm2103 = vcmp.eq.f32.partialorder %v2007, %v2050
    %vm2104 = vcmp.eq.f32.partialorder %v2008, %v2050
    %vm2105 = vcmp.eq.f32.partialorder %v2009, %v2054
    %vm2106 = vcmp.eq.f32.partialorder %v2010, %v2054
    %vm2107 = vcmp.eq.f32.partialorder %v2011, %v2058
    %vm2108 = vcmp.eq.f32.partialorder %v2012, %v2058
    %vm2109 = vcmp.eq.f32.partialorder %v2013, %v2062
    %vm2110 = vcmp.eq.f32.partialorder %v2014, %v2062
    %vm2111 = vcmp.eq.f32.partialorder %v2015, %v2066
    %vm2112 = vcmp.eq.f32.partialorder %v2016, %v2066
    %vm2113 = vcmp.eq.f32.partialorder %v2017, %v2070
    %vm2114 = vcmp.eq.f32.partialorder %v2018, %v2070
    %vm2115 = vcmp.eq.f32.partialorder %v2019, %v2074
    %vm2116 = vcmp.eq.f32.partialorder %v2020, %v2074
    %vm2117 = vcmp.eq.f32.partialorder %v2021, %v2078
    %vm2118 = vcmp.eq.f32.partialorder %v2022, %v2078
    %vm2119 = vcmp.eq.f32.partialorder %v2023, %v2082
    %vm2120 = vcmp.eq.f32.partialorder %v2024, %v2082
    %vm2121 = vcmp.eq.f32.partialorder %v2025, %v2086
    %vm2122 = vcmp.eq.f32.partialorder %v2026, %v2086
    %vm2123 = vcmp.eq.f32.partialorder %v2027, %v2090
    %vm2124 = vcmp.eq.f32.partialorder %v2028, %v2090
    %vm2125 = vcmp.eq.f32.partialorder %v2029, %v2094
    %vm2126 = vcmp.eq.f32.partialorder %v2030, %v2094
    %v2127 = vsel %vm2095, %v348, 133
    %v2128 = vsel %vm2096, %v349, 133
    %v2129 = vsel %vm2097, %v348, 133
    %v2130 = vsel %vm2098, %v349, 133
    %v2131 = vsel %vm2099, %v348, 133
    %v2132 = vsel %vm2100, %v349, 133
    %v2133 = vsel %vm2101, %v348, 133
    %v2134 = vsel %vm2102, %v349, 133
    %v2135 = vsel %vm2103, %v348, 133
    %v2136 = vsel %vm2104, %v349, 133
    %v2137 = vsel %vm2105, %v348, 133
    %v2138 = vsel %vm2106, %v349, 133
    %v2139 = vsel %vm2107, %v348, 133
    %v2140 = vsel %vm2108, %v349, 133
    %v2141 = vsel %vm2109, %v348, 133
    %v2142 = vsel %vm2110, %v349, 133
    %v2143 = vsel %vm2111, %v348, 133
    %v2144 = vsel %vm2112, %v349, 133
    %v2145 = vsel %vm2113, %v348, 133
    %v2146 = vsel %vm2114, %v349, 133
    %v2147 = vsel %vm2115, %v348, 133
    %v2148 = vsel %vm2116, %v349, 133
    %v2149 = vsel %vm2117, %v348, 133
    %v2150 = vsel %vm2118, %v349, 133
    %v2151 = vsel %vm2119, %v348, 133
    %v2152 = vsel %vm2120, %v349, 133
    %v2153 = vsel %vm2121, %v348, 133
    %v2154 = vsel %vm2122, %v349, 133
    %v2155 = vsel %vm2123, %v348, 133
    %v2156 = vsel %vm2124, %v349, 133
    %v2157 = vsel %vm2125, %v348, 133
    %v2158 = vsel %vm2126, %v349, 133
    %v2159 = vsel %vm350, %v2128, 2147483647
    %vm2160 = vcmp.lt.s32.totalorder %v2127, %v2159
    %v2161 = vsel %vm2160, %v2127, %v2159
    %v2162 = vand.u32 %v2161, 65535
    %v2163 = vshra.s32 %v2161, 16
    %v2164 = vcvt.s32.f32 %v2162
    %v2165 = vcvt.s32.f32 %v2163
    %2166 = vmin.xlane.f32.xlu0 %v2165
    %v2167 = vpop.xlane.xlu0 %2166
    %vm2168 = vcmp.eq.f32.partialorder %v2165, %v2167
    %v2169 = vsel %vm2168, %v2164, inf
    %2170 = vmin.xlane.f32.xlu0 %v2169
    %v2171 = vpop.xlane.xlu0 %2170
    %v2172 = vcvt.f32.s32 %v2171
    %v2173 = vcvt.f32.s32 %v2167
    %v2174 = vshll.u32 %v2173, 16
    %v2175 = vadd.s32 %v2174, %v2172
    %v2176 = vsel %vm350, %v2130, 2147483647
    %vm2177 = vcmp.lt.s32.totalorder %v2129, %v2176
    %v2178 = vsel %vm2177, %v2129, %v2176
    %v2179 = vand.u32 %v2178, 65535
    %v2180 = vshra.s32 %v2178, 16
    %v2181 = vcvt.s32.f32 %v2179
    %v2182 = vcvt.s32.f32 %v2180
    %2183 = vmin.xlane.f32.xlu0 %v2182
    %v2184 = vpop.xlane.xlu0 %2183
    %vm2185 = vcmp.eq.f32.partialorder %v2182, %v2184
    %v2186 = vsel %vm2185, %v2181, inf
    %2187 = vmin.xlane.f32.xlu0 %v2186
    %v2188 = vpop.xlane.xlu0 %2187
    %v2189 = vcvt.f32.s32 %v2188
    %v2190 = vcvt.f32.s32 %v2184
    %v2191 = vshll.u32 %v2190, 16
    %v2192 = vadd.s32 %v2191, %v2189
    %v2193 = vsel %vm350, %v2132, 2147483647
    %vm2194 = vcmp.lt.s32.totalorder %v2131, %v2193
    %v2195 = vsel %vm2194, %v2131, %v2193
    %v2196 = vand.u32 %v2195, 65535
    %v2197 = vshra.s32 %v2195, 16
    %v2198 = vcvt.s32.f32 %v2196
    %v2199 = vcvt.s32.f32 %v2197
    %2200 = vmin.xlane.f32.xlu0 %v2199
    %v2201 = vpop.xlane.xlu0 %2200
    %vm2202 = vcmp.eq.f32.partialorder %v2199, %v2201
    %v2203 = vsel %vm2202, %v2198, inf
    %2204 = vmin.xlane.f32.xlu0 %v2203
    %v2205 = vpop.xlane.xlu0 %2204
    %v2206 = vcvt.f32.s32 %v2205
    %v2207 = vcvt.f32.s32 %v2201
    %v2208 = vshll.u32 %v2207, 16
    %v2209 = vadd.s32 %v2208, %v2206
    %v2210 = vsel %vm350, %v2134, 2147483647
    %vm2211 = vcmp.lt.s32.totalorder %v2133, %v2210
    %v2212 = vsel %vm2211, %v2133, %v2210
    %v2213 = vand.u32 %v2212, 65535
    %v2214 = vshra.s32 %v2212, 16
    %v2215 = vcvt.s32.f32 %v2213
    %v2216 = vcvt.s32.f32 %v2214
    %2217 = vmin.xlane.f32.xlu0 %v2216
    %v2218 = vpop.xlane.xlu0 %2217
    %vm2219 = vcmp.eq.f32.partialorder %v2216, %v2218
    %v2220 = vsel %vm2219, %v2215, inf
    %2221 = vmin.xlane.f32.xlu0 %v2220
    %v2222 = vpop.xlane.xlu0 %2221
    %v2223 = vcvt.f32.s32 %v2222
    %v2224 = vcvt.f32.s32 %v2218
    %v2225 = vshll.u32 %v2224, 16
    %v2226 = vadd.s32 %v2225, %v2223
    %v2227 = vsel %vm350, %v2136, 2147483647
    %vm2228 = vcmp.lt.s32.totalorder %v2135, %v2227
    %v2229 = vsel %vm2228, %v2135, %v2227
    %v2230 = vand.u32 %v2229, 65535
    %v2231 = vshra.s32 %v2229, 16
    %v2232 = vcvt.s32.f32 %v2230
    %v2233 = vcvt.s32.f32 %v2231
    %2234 = vmin.xlane.f32.xlu0 %v2233
    %v2235 = vpop.xlane.xlu0 %2234
    %vm2236 = vcmp.eq.f32.partialorder %v2233, %v2235
    %v2237 = vsel %vm2236, %v2232, inf
    %2238 = vmin.xlane.f32.xlu0 %v2237
    %v2239 = vpop.xlane.xlu0 %2238
    %v2240 = vcvt.f32.s32 %v2239
    %v2241 = vcvt.f32.s32 %v2235
    %v2242 = vshll.u32 %v2241, 16
    %v2243 = vadd.s32 %v2242, %v2240
    %v2244 = vsel %vm350, %v2138, 2147483647
    %vm2245 = vcmp.lt.s32.totalorder %v2137, %v2244
    %v2246 = vsel %vm2245, %v2137, %v2244
    %v2247 = vand.u32 %v2246, 65535
    %v2248 = vshra.s32 %v2246, 16
    %v2249 = vcvt.s32.f32 %v2247
    %v2250 = vcvt.s32.f32 %v2248
    %2251 = vmin.xlane.f32.xlu0 %v2250
    %v2252 = vpop.xlane.xlu0 %2251
    %vm2253 = vcmp.eq.f32.partialorder %v2250, %v2252
    %v2254 = vsel %vm2253, %v2249, inf
    %2255 = vmin.xlane.f32.xlu0 %v2254
    %v2256 = vpop.xlane.xlu0 %2255
    %v2257 = vcvt.f32.s32 %v2256
    %v2258 = vcvt.f32.s32 %v2252
    %v2259 = vshll.u32 %v2258, 16
    %v2260 = vadd.s32 %v2259, %v2257
    %v2261 = vsel %vm350, %v2140, 2147483647
    %vm2262 = vcmp.lt.s32.totalorder %v2139, %v2261
    %v2263 = vsel %vm2262, %v2139, %v2261
    %v2264 = vand.u32 %v2263, 65535
    %v2265 = vshra.s32 %v2263, 16
    %v2266 = vcvt.s32.f32 %v2264
    %v2267 = vcvt.s32.f32 %v2265
    %2268 = vmin.xlane.f32.xlu0 %v2267
    %v2269 = vpop.xlane.xlu0 %2268
    %vm2270 = vcmp.eq.f32.partialorder %v2267, %v2269
    %v2271 = vsel %vm2270, %v2266, inf
    %2272 = vmin.xlane.f32.xlu0 %v2271
    %v2273 = vpop.xlane.xlu0 %2272
    %v2274 = vcvt.f32.s32 %v2273
    %v2275 = vcvt.f32.s32 %v2269
    %v2276 = vshll.u32 %v2275, 16
    %v2277 = vadd.s32 %v2276, %v2274
    %v2278 = vsel %vm350, %v2142, 2147483647
    %vm2279 = vcmp.lt.s32.totalorder %v2141, %v2278
    %v2280 = vsel %vm2279, %v2141, %v2278
    %v2281 = vand.u32 %v2280, 65535
    %v2282 = vshra.s32 %v2280, 16
    %v2283 = vcvt.s32.f32 %v2281
    %v2284 = vcvt.s32.f32 %v2282
    %2285 = vmin.xlane.f32.xlu0 %v2284
    %v2286 = vpop.xlane.xlu0 %2285
    %vm2287 = vcmp.eq.f32.partialorder %v2284, %v2286
    %v2288 = vsel %vm2287, %v2283, inf
    %2289 = vmin.xlane.f32.xlu0 %v2288
    %v2290 = vpop.xlane.xlu0 %2289
    %v2291 = vcvt.f32.s32 %v2290
    %v2292 = vcvt.f32.s32 %v2286
    %v2293 = vshll.u32 %v2292, 16
    %v2294 = vadd.s32 %v2293, %v2291
    %v2295 = vsel %vm350, %v2144, 2147483647
    %vm2296 = vcmp.lt.s32.totalorder %v2143, %v2295
    %v2297 = vsel %vm2296, %v2143, %v2295
    %v2298 = vand.u32 %v2297, 65535
    %v2299 = vshra.s32 %v2297, 16
    %v2300 = vcvt.s32.f32 %v2298
    %v2301 = vcvt.s32.f32 %v2299
    %2302 = vmin.xlane.f32.xlu0 %v2301
    %v2303 = vpop.xlane.xlu0 %2302
    %vm2304 = vcmp.eq.f32.partialorder %v2301, %v2303
    %v2305 = vsel %vm2304, %v2300, inf
    %2306 = vmin.xlane.f32.xlu0 %v2305
    %v2307 = vpop.xlane.xlu0 %2306
    %v2308 = vcvt.f32.s32 %v2307
    %v2309 = vcvt.f32.s32 %v2303
    %v2310 = vshll.u32 %v2309, 16
    %v2311 = vadd.s32 %v2310, %v2308
    %v2312 = vsel %vm350, %v2146, 2147483647
    %vm2313 = vcmp.lt.s32.totalorder %v2145, %v2312
    %v2314 = vsel %vm2313, %v2145, %v2312
    %v2315 = vand.u32 %v2314, 65535
    %v2316 = vshra.s32 %v2314, 16
    %v2317 = vcvt.s32.f32 %v2315
    %v2318 = vcvt.s32.f32 %v2316
    %2319 = vmin.xlane.f32.xlu0 %v2318
    %v2320 = vpop.xlane.xlu0 %2319
    %vm2321 = vcmp.eq.f32.partialorder %v2318, %v2320
    %v2322 = vsel %vm2321, %v2317, inf
    %2323 = vmin.xlane.f32.xlu0 %v2322
    %v2324 = vpop.xlane.xlu0 %2323
    %v2325 = vcvt.f32.s32 %v2324
    %v2326 = vcvt.f32.s32 %v2320
    %v2327 = vshll.u32 %v2326, 16
    %v2328 = vadd.s32 %v2327, %v2325
    %v2329 = vsel %vm350, %v2148, 2147483647
    %vm2330 = vcmp.lt.s32.totalorder %v2147, %v2329
    %v2331 = vsel %vm2330, %v2147, %v2329
    %v2332 = vand.u32 %v2331, 65535
    %v2333 = vshra.s32 %v2331, 16
    %v2334 = vcvt.s32.f32 %v2332
    %v2335 = vcvt.s32.f32 %v2333
    %2336 = vmin.xlane.f32.xlu0 %v2335
    %v2337 = vpop.xlane.xlu0 %2336
    %vm2338 = vcmp.eq.f32.partialorder %v2335, %v2337
    %v2339 = vsel %vm2338, %v2334, inf
    %2340 = vmin.xlane.f32.xlu0 %v2339
    %v2341 = vpop.xlane.xlu0 %2340
    %v2342 = vcvt.f32.s32 %v2341
    %v2343 = vcvt.f32.s32 %v2337
    %v2344 = vshll.u32 %v2343, 16
    %v2345 = vadd.s32 %v2344, %v2342
    %v2346 = vsel %vm350, %v2150, 2147483647
    %vm2347 = vcmp.lt.s32.totalorder %v2149, %v2346
    %v2348 = vsel %vm2347, %v2149, %v2346
    %v2349 = vand.u32 %v2348, 65535
    %v2350 = vshra.s32 %v2348, 16
    %v2351 = vcvt.s32.f32 %v2349
    %v2352 = vcvt.s32.f32 %v2350
    %2353 = vmin.xlane.f32.xlu0 %v2352
    %v2354 = vpop.xlane.xlu0 %2353
    %vm2355 = vcmp.eq.f32.partialorder %v2352, %v2354
    %v2356 = vsel %vm2355, %v2351, inf
    %2357 = vmin.xlane.f32.xlu0 %v2356
    %v2358 = vpop.xlane.xlu0 %2357
    %v2359 = vcvt.f32.s32 %v2358
    %v2360 = vcvt.f32.s32 %v2354
    %v2361 = vshll.u32 %v2360, 16
    %v2362 = vadd.s32 %v2361, %v2359
    %v2363 = vsel %vm350, %v2152, 2147483647
    %vm2364 = vcmp.lt.s32.totalorder %v2151, %v2363
    %v2365 = vsel %vm2364, %v2151, %v2363
    %v2366 = vand.u32 %v2365, 65535
    %v2367 = vshra.s32 %v2365, 16
    %v2368 = vcvt.s32.f32 %v2366
    %v2369 = vcvt.s32.f32 %v2367
    %2370 = vmin.xlane.f32.xlu0 %v2369
    %v2371 = vpop.xlane.xlu0 %2370
    %vm2372 = vcmp.eq.f32.partialorder %v2369, %v2371
    %v2373 = vsel %vm2372, %v2368, inf
    %2374 = vmin.xlane.f32.xlu0 %v2373
    %v2375 = vpop.xlane.xlu0 %2374
    %v2376 = vcvt.f32.s32 %v2375
    %v2377 = vcvt.f32.s32 %v2371
    %v2378 = vshll.u32 %v2377, 16
    %v2379 = vadd.s32 %v2378, %v2376
    %v2380 = vsel %vm350, %v2154, 2147483647
    %vm2381 = vcmp.lt.s32.totalorder %v2153, %v2380
    %v2382 = vsel %vm2381, %v2153, %v2380
    %v2383 = vand.u32 %v2382, 65535
    %v2384 = vshra.s32 %v2382, 16
    %v2385 = vcvt.s32.f32 %v2383
    %v2386 = vcvt.s32.f32 %v2384
    %2387 = vmin.xlane.f32.xlu0 %v2386
    %v2388 = vpop.xlane.xlu0 %2387
    %vm2389 = vcmp.eq.f32.partialorder %v2386, %v2388
    %v2390 = vsel %vm2389, %v2385, inf
    %2391 = vmin.xlane.f32.xlu0 %v2390
    %v2392 = vpop.xlane.xlu0 %2391
    %v2393 = vcvt.f32.s32 %v2392
    %v2394 = vcvt.f32.s32 %v2388
    %v2395 = vshll.u32 %v2394, 16
    %v2396 = vadd.s32 %v2395, %v2393
    %v2397 = vsel %vm350, %v2156, 2147483647
    %vm2398 = vcmp.lt.s32.totalorder %v2155, %v2397
    %v2399 = vsel %vm2398, %v2155, %v2397
    %v2400 = vand.u32 %v2399, 65535
    %v2401 = vshra.s32 %v2399, 16
    %v2402 = vcvt.s32.f32 %v2400
    %v2403 = vcvt.s32.f32 %v2401
    %2404 = vmin.xlane.f32.xlu0 %v2403
    %v2405 = vpop.xlane.xlu0 %2404
    %vm2406 = vcmp.eq.f32.partialorder %v2403, %v2405
    %v2407 = vsel %vm2406, %v2402, inf
    %2408 = vmin.xlane.f32.xlu0 %v2407
    %v2409 = vpop.xlane.xlu0 %2408
    %v2410 = vcvt.f32.s32 %v2409
    %v2411 = vcvt.f32.s32 %v2405
    %v2412 = vshll.u32 %v2411, 16
    %v2413 = vadd.s32 %v2412, %v2410
    %v2414 = vsel %vm350, %v2158, 2147483647
    %vm2415 = vcmp.lt.s32.totalorder %v2157, %v2414
    %v2416 = vsel %vm2415, %v2157, %v2414
    %v2417 = vand.u32 %v2416, 65535
    %v2418 = vshra.s32 %v2416, 16
    %v2419 = vcvt.s32.f32 %v2417
    %v2420 = vcvt.s32.f32 %v2418
    %2421 = vmin.xlane.f32.xlu0 %v2420
    %v2422 = vpop.xlane.xlu0 %2421
    %vm2423 = vcmp.eq.f32.partialorder %v2420, %v2422
    %v2424 = vsel %vm2423, %v2419, inf
    %2425 = vmin.xlane.f32.xlu0 %v2424
    %v2426 = vpop.xlane.xlu0 %2425
    %v2427 = vcvt.f32.s32 %v2426
    %v2428 = vcvt.f32.s32 %v2422
    %v2429 = vshll.u32 %v2428, 16
    %v2430 = vadd.s32 %v2429, %v2427
    %vm2431 = vcmp.eq.s32.totalorder %v348, %v2175
    %vm2432 = vcmp.eq.s32.totalorder %v349, %v2175
    %vm2433 = vcmp.eq.s32.totalorder %v348, %v2192
    %vm2434 = vcmp.eq.s32.totalorder %v349, %v2192
    %vm2435 = vcmp.eq.s32.totalorder %v348, %v2209
    %vm2436 = vcmp.eq.s32.totalorder %v349, %v2209
    %vm2437 = vcmp.eq.s32.totalorder %v348, %v2226
    %vm2438 = vcmp.eq.s32.totalorder %v349, %v2226
    %vm2439 = vcmp.eq.s32.totalorder %v348, %v2243
    %vm2440 = vcmp.eq.s32.totalorder %v349, %v2243
    %vm2441 = vcmp.eq.s32.totalorder %v348, %v2260
    %vm2442 = vcmp.eq.s32.totalorder %v349, %v2260
    %vm2443 = vcmp.eq.s32.totalorder %v348, %v2277
    %vm2444 = vcmp.eq.s32.totalorder %v349, %v2277
    %vm2445 = vcmp.eq.s32.totalorder %v348, %v2294
    %vm2446 = vcmp.eq.s32.totalorder %v349, %v2294
    %vm2447 = vcmp.eq.s32.totalorder %v348, %v2311
    %vm2448 = vcmp.eq.s32.totalorder %v349, %v2311
    %vm2449 = vcmp.eq.s32.totalorder %v348, %v2328
    %vm2450 = vcmp.eq.s32.totalorder %v349, %v2328
    %vm2451 = vcmp.eq.s32.totalorder %v348, %v2345
    %vm2452 = vcmp.eq.s32.totalorder %v349, %v2345
    %vm2453 = vcmp.eq.s32.totalorder %v348, %v2362
    %vm2454 = vcmp.eq.s32.totalorder %v349, %v2362
    %vm2455 = vcmp.eq.s32.totalorder %v348, %v2379
    %vm2456 = vcmp.eq.s32.totalorder %v349, %v2379
    %vm2457 = vcmp.eq.s32.totalorder %v348, %v2396
    %vm2458 = vcmp.eq.s32.totalorder %v349, %v2396
    %vm2459 = vcmp.eq.s32.totalorder %v348, %v2413
    %vm2460 = vcmp.eq.s32.totalorder %v349, %v2413
    %vm2461 = vcmp.eq.s32.totalorder %v348, %v2430
    %vm2462 = vcmp.eq.s32.totalorder %v349, %v2430
    %v2463 = vsel %vm2431, %v329, 0.0
    %v2464 = vsel %vm2432, %v331, 0.0
    %v2465 = vsel %vm2433, %v329, 0.0
    %v2466 = vsel %vm2434, %v332, 0.0
    %v2467 = vsel %vm2435, %v329, 0.0
    %v2468 = vsel %vm2436, %v333, 0.0
    %v2469 = vsel %vm2437, %v329, 0.0
    %v2470 = vsel %vm2438, %v334, 0.0
    %v2471 = vsel %vm2439, %v329, 0.0
    %v2472 = vsel %vm2440, %v335, 0.0
    %v2473 = vsel %vm2441, %v329, 0.0
    %v2474 = vsel %vm2442, %v336, 0.0
    %v2475 = vsel %vm2443, %v329, 0.0
    %v2476 = vsel %vm2444, %v337, 0.0
    %v2477 = vsel %vm2445, %v329, 0.0
    %v2478 = vsel %vm2446, %v338, 0.0
    %v2479 = vsel %vm2447, %v329, 0.0
    %v2480 = vsel %vm2448, %v339, 0.0
    %v2481 = vsel %vm2449, %v329, 0.0
    %v2482 = vsel %vm2450, %v340, 0.0
    %v2483 = vsel %vm2451, %v329, 0.0
    %v2484 = vsel %vm2452, %v341, 0.0
    %v2485 = vsel %vm2453, %v329, 0.0
    %v2486 = vsel %vm2454, %v342, 0.0
    %v2487 = vsel %vm2455, %v329, 0.0
    %v2488 = vsel %vm2456, %v343, 0.0
    %v2489 = vsel %vm2457, %v329, 0.0
    %v2490 = vsel %vm2458, %v344, 0.0
    %v2491 = vsel %vm2459, %v329, 0.0
    %v2492 = vsel %vm2460, %v345, 0.0
    %v2493 = vsel %vm2461, %v329, 0.0
    %v2494 = vsel %vm2462, %v346, 0.0
    %v2495 = vsel %vm350, %v2464, 0.0
    %v2496 = vadd.f32 %v2463, %v2495
    %2497 = vadd.xlane.f32.xlu0 %v2496
    %v2498 = vpop.xlane.xlu0 %2497
    %v2499 = vsel %vm350, %v2466, 0.0
    %v2500 = vadd.f32 %v2465, %v2499
    %2501 = vadd.xlane.f32.xlu0 %v2500
    %v2502 = vpop.xlane.xlu0 %2501
    %v2503 = vsel %vm350, %v2468, 0.0
    %v2504 = vadd.f32 %v2467, %v2503
    %2505 = vadd.xlane.f32.xlu0 %v2504
    %v2506 = vpop.xlane.xlu0 %2505
    %v2507 = vsel %vm350, %v2470, 0.0
    %v2508 = vadd.f32 %v2469, %v2507
    %2509 = vadd.xlane.f32.xlu0 %v2508
    %v2510 = vpop.xlane.xlu0 %2509
    %v2511 = vsel %vm350, %v2472, 0.0
    %v2512 = vadd.f32 %v2471, %v2511
    %2513 = vadd.xlane.f32.xlu0 %v2512
    %v2514 = vpop.xlane.xlu0 %2513
    %v2515 = vsel %vm350, %v2474, 0.0
    %v2516 = vadd.f32 %v2473, %v2515
    %2517 = vadd.xlane.f32.xlu0 %v2516
    %v2518 = vpop.xlane.xlu0 %2517
    %v2519 = vsel %vm350, %v2476, 0.0
    %v2520 = vadd.f32 %v2475, %v2519
    %2521 = vadd.xlane.f32.xlu0 %v2520
    %v2522 = vpop.xlane.xlu0 %2521
    %v2523 = vsel %vm350, %v2478, 0.0
    %v2524 = vadd.f32 %v2477, %v2523
    %2525 = vadd.xlane.f32.xlu0 %v2524
    %v2526 = vpop.xlane.xlu0 %2525
    %v2527 = vsel %vm350, %v2480, 0.0
    %v2528 = vadd.f32 %v2479, %v2527
    %2529 = vadd.xlane.f32.xlu0 %v2528
    %v2530 = vpop.xlane.xlu0 %2529
    %v2531 = vsel %vm350, %v2482, 0.0
    %v2532 = vadd.f32 %v2481, %v2531
    %2533 = vadd.xlane.f32.xlu0 %v2532
    %v2534 = vpop.xlane.xlu0 %2533
    %v2535 = vsel %vm350, %v2484, 0.0
    %v2536 = vadd.f32 %v2483, %v2535
    %2537 = vadd.xlane.f32.xlu0 %v2536
    %v2538 = vpop.xlane.xlu0 %2537
    %v2539 = vsel %vm350, %v2486, 0.0
    %v2540 = vadd.f32 %v2485, %v2539
    %2541 = vadd.xlane.f32.xlu0 %v2540
    %v2542 = vpop.xlane.xlu0 %2541
    %v2543 = vsel %vm350, %v2488, 0.0
    %v2544 = vadd.f32 %v2487, %v2543
    %2545 = vadd.xlane.f32.xlu0 %v2544
    %v2546 = vpop.xlane.xlu0 %2545
    %v2547 = vsel %vm350, %v2490, 0.0
    %v2548 = vadd.f32 %v2489, %v2547
    %2549 = vadd.xlane.f32.xlu0 %v2548
    %v2550 = vpop.xlane.xlu0 %2549
    %v2551 = vsel %vm350, %v2492, 0.0
    %v2552 = vadd.f32 %v2491, %v2551
    %2553 = vadd.xlane.f32.xlu0 %v2552
    %v2554 = vpop.xlane.xlu0 %2553
    %v2555 = vsel %vm350, %v2494, 0.0
    %v2556 = vadd.f32 %v2493, %v2555
    %2557 = vadd.xlane.f32.xlu0 %v2556
    %v2558 = vpop.xlane.xlu0 %2557
    %v2559 = vsel %vm2431, inf, %v1999
    %v2560 = vsel %vm2432, inf, %v2000
    %v2561 = vsel %vm2433, inf, %v2001
    %v2562 = vsel %vm2434, inf, %v2002
    %v2563 = vsel %vm2435, inf, %v2003
    %v2564 = vsel %vm2436, inf, %v2004
    %v2565 = vsel %vm2437, inf, %v2005
    %v2566 = vsel %vm2438, inf, %v2006
    %v2567 = vsel %vm2439, inf, %v2007
    %v2568 = vsel %vm2440, inf, %v2008
    %v2569 = vsel %vm2441, inf, %v2009
    %v2570 = vsel %vm2442, inf, %v2010
    %v2571 = vsel %vm2443, inf, %v2011
    %v2572 = vsel %vm2444, inf, %v2012
    %v2573 = vsel %vm2445, inf, %v2013
    %v2574 = vsel %vm2446, inf, %v2014
    %v2575 = vsel %vm2447, inf, %v2015
    %v2576 = vsel %vm2448, inf, %v2016
    %v2577 = vsel %vm2449, inf, %v2017
    %v2578 = vsel %vm2450, inf, %v2018
    %v2579 = vsel %vm2451, inf, %v2019
    %v2580 = vsel %vm2452, inf, %v2020
    %v2581 = vsel %vm2453, inf, %v2021
    %v2582 = vsel %vm2454, inf, %v2022
    %v2583 = vsel %vm2455, inf, %v2023
    %v2584 = vsel %vm2456, inf, %v2024
    %v2585 = vsel %vm2457, inf, %v2025
    %v2586 = vsel %vm2458, inf, %v2026
    %v2587 = vsel %vm2459, inf, %v2027
    %v2588 = vsel %vm2460, inf, %v2028
    %v2589 = vsel %vm2461, inf, %v2029
    %v2590 = vsel %vm2462, inf, %v2030
    %v2591 = vsel %vm350, %v2560, inf
    %v2592 = vmin.f32 %v2559, %v2591
    %2593 = vmin.xlane.f32.xlu0 %v2592
    %v2594 = vpop.xlane.xlu0 %2593
    %v2595 = vsel %vm350, %v2562, inf
    %v2596 = vmin.f32 %v2561, %v2595
    %2597 = vmin.xlane.f32.xlu0 %v2596
    %v2598 = vpop.xlane.xlu0 %2597
    %v2599 = vsel %vm350, %v2564, inf
    %v2600 = vmin.f32 %v2563, %v2599
    %2601 = vmin.xlane.f32.xlu0 %v2600
    %v2602 = vpop.xlane.xlu0 %2601
    %v2603 = vsel %vm350, %v2566, inf
    %v2604 = vmin.f32 %v2565, %v2603
    %2605 = vmin.xlane.f32.xlu0 %v2604
    %v2606 = vpop.xlane.xlu0 %2605
    %v2607 = vsel %vm350, %v2568, inf
    %v2608 = vmin.f32 %v2567, %v2607
    %2609 = vmin.xlane.f32.xlu0 %v2608
    %v2610 = vpop.xlane.xlu0 %2609
    %v2611 = vsel %vm350, %v2570, inf
    %v2612 = vmin.f32 %v2569, %v2611
    %2613 = vmin.xlane.f32.xlu0 %v2612
    %v2614 = vpop.xlane.xlu0 %2613
    %v2615 = vsel %vm350, %v2572, inf
    %v2616 = vmin.f32 %v2571, %v2615
    %2617 = vmin.xlane.f32.xlu0 %v2616
    %v2618 = vpop.xlane.xlu0 %2617
    %v2619 = vsel %vm350, %v2574, inf
    %v2620 = vmin.f32 %v2573, %v2619
    %2621 = vmin.xlane.f32.xlu0 %v2620
    %v2622 = vpop.xlane.xlu0 %2621
    %v2623 = vsel %vm350, %v2576, inf
    %v2624 = vmin.f32 %v2575, %v2623
    %2625 = vmin.xlane.f32.xlu0 %v2624
    %v2626 = vpop.xlane.xlu0 %2625
    %v2627 = vsel %vm350, %v2578, inf
    %v2628 = vmin.f32 %v2577, %v2627
    %2629 = vmin.xlane.f32.xlu0 %v2628
    %v2630 = vpop.xlane.xlu0 %2629
    %v2631 = vsel %vm350, %v2580, inf
    %v2632 = vmin.f32 %v2579, %v2631
    %2633 = vmin.xlane.f32.xlu0 %v2632
    %v2634 = vpop.xlane.xlu0 %2633
    %v2635 = vsel %vm350, %v2582, inf
    %v2636 = vmin.f32 %v2581, %v2635
    %2637 = vmin.xlane.f32.xlu0 %v2636
    %v2638 = vpop.xlane.xlu0 %2637
    %v2639 = vsel %vm350, %v2584, inf
    %v2640 = vmin.f32 %v2583, %v2639
    %2641 = vmin.xlane.f32.xlu0 %v2640
    %v2642 = vpop.xlane.xlu0 %2641
    %v2643 = vsel %vm350, %v2586, inf
    %v2644 = vmin.f32 %v2585, %v2643
    %2645 = vmin.xlane.f32.xlu0 %v2644
    %v2646 = vpop.xlane.xlu0 %2645
    %v2647 = vsel %vm350, %v2588, inf
    %v2648 = vmin.f32 %v2587, %v2647
    %2649 = vmin.xlane.f32.xlu0 %v2648
    %v2650 = vpop.xlane.xlu0 %2649
    %v2651 = vsel %vm350, %v2590, inf
    %v2652 = vmin.f32 %v2589, %v2651
    %2653 = vmin.xlane.f32.xlu0 %v2652
    %v2654 = vpop.xlane.xlu0 %2653
    %vm2655 = vcmp.eq.f32.partialorder %v2559, %v2594
    %vm2656 = vcmp.eq.f32.partialorder %v2560, %v2594
    %vm2657 = vcmp.eq.f32.partialorder %v2561, %v2598
    %vm2658 = vcmp.eq.f32.partialorder %v2562, %v2598
    %vm2659 = vcmp.eq.f32.partialorder %v2563, %v2602
    %vm2660 = vcmp.eq.f32.partialorder %v2564, %v2602
    %vm2661 = vcmp.eq.f32.partialorder %v2565, %v2606
    %vm2662 = vcmp.eq.f32.partialorder %v2566, %v2606
    %vm2663 = vcmp.eq.f32.partialorder %v2567, %v2610
    %vm2664 = vcmp.eq.f32.partialorder %v2568, %v2610
    %vm2665 = vcmp.eq.f32.partialorder %v2569, %v2614
    %vm2666 = vcmp.eq.f32.partialorder %v2570, %v2614
    %vm2667 = vcmp.eq.f32.partialorder %v2571, %v2618
    %vm2668 = vcmp.eq.f32.partialorder %v2572, %v2618
    %vm2669 = vcmp.eq.f32.partialorder %v2573, %v2622
    %vm2670 = vcmp.eq.f32.partialorder %v2574, %v2622
    %vm2671 = vcmp.eq.f32.partialorder %v2575, %v2626
    %vm2672 = vcmp.eq.f32.partialorder %v2576, %v2626
    %vm2673 = vcmp.eq.f32.partialorder %v2577, %v2630
    %vm2674 = vcmp.eq.f32.partialorder %v2578, %v2630
    %vm2675 = vcmp.eq.f32.partialorder %v2579, %v2634
    %vm2676 = vcmp.eq.f32.partialorder %v2580, %v2634
    %vm2677 = vcmp.eq.f32.partialorder %v2581, %v2638
    %vm2678 = vcmp.eq.f32.partialorder %v2582, %v2638
    %vm2679 = vcmp.eq.f32.partialorder %v2583, %v2642
    %vm2680 = vcmp.eq.f32.partialorder %v2584, %v2642
    %vm2681 = vcmp.eq.f32.partialorder %v2585, %v2646
    %vm2682 = vcmp.eq.f32.partialorder %v2586, %v2646
    %vm2683 = vcmp.eq.f32.partialorder %v2587, %v2650
    %vm2684 = vcmp.eq.f32.partialorder %v2588, %v2650
    %vm2685 = vcmp.eq.f32.partialorder %v2589, %v2654
    %vm2686 = vcmp.eq.f32.partialorder %v2590, %v2654
    %v2687 = vsel %vm2655, %v348, 133
    %v2688 = vsel %vm2656, %v349, 133
    %v2689 = vsel %vm2657, %v348, 133
    %v2690 = vsel %vm2658, %v349, 133
    %v2691 = vsel %vm2659, %v348, 133
    %v2692 = vsel %vm2660, %v349, 133
    %v2693 = vsel %vm2661, %v348, 133
    %v2694 = vsel %vm2662, %v349, 133
    %v2695 = vsel %vm2663, %v348, 133
    %v2696 = vsel %vm2664, %v349, 133
    %v2697 = vsel %vm2665, %v348, 133
    %v2698 = vsel %vm2666, %v349, 133
    %v2699 = vsel %vm2667, %v348, 133
    %v2700 = vsel %vm2668, %v349, 133
    %v2701 = vsel %vm2669, %v348, 133
    %v2702 = vsel %vm2670, %v349, 133
    %v2703 = vsel %vm2671, %v348, 133
    %v2704 = vsel %vm2672, %v349, 133
    %v2705 = vsel %vm2673, %v348, 133
    %v2706 = vsel %vm2674, %v349, 133
    %v2707 = vsel %vm2675, %v348, 133
    %v2708 = vsel %vm2676, %v349, 133
    %v2709 = vsel %vm2677, %v348, 133
    %v2710 = vsel %vm2678, %v349, 133
    %v2711 = vsel %vm2679, %v348, 133
    %v2712 = vsel %vm2680, %v349, 133
    %v2713 = vsel %vm2681, %v348, 133
    %v2714 = vsel %vm2682, %v349, 133
    %v2715 = vsel %vm2683, %v348, 133
    %v2716 = vsel %vm2684, %v349, 133
    %v2717 = vsel %vm2685, %v348, 133
    %v2718 = vsel %vm2686, %v349, 133
    %v2719 = vsel %vm350, %v2688, 2147483647
    %vm2720 = vcmp.lt.s32.totalorder %v2687, %v2719
    %v2721 = vsel %vm2720, %v2687, %v2719
    %v2722 = vand.u32 %v2721, 65535
    %v2723 = vshra.s32 %v2721, 16
    %v2724 = vcvt.s32.f32 %v2722
    %v2725 = vcvt.s32.f32 %v2723
    %2726 = vmin.xlane.f32.xlu0 %v2725
    %v2727 = vpop.xlane.xlu0 %2726
    %vm2728 = vcmp.eq.f32.partialorder %v2725, %v2727
    %v2729 = vsel %vm2728, %v2724, inf
    %2730 = vmin.xlane.f32.xlu0 %v2729
    %v2731 = vpop.xlane.xlu0 %2730
    %v2732 = vcvt.f32.s32 %v2731
    %v2733 = vcvt.f32.s32 %v2727
    %v2734 = vshll.u32 %v2733, 16
    %v2735 = vadd.s32 %v2734, %v2732
    %v2736 = vsel %vm350, %v2690, 2147483647
    %vm2737 = vcmp.lt.s32.totalorder %v2689, %v2736
    %v2738 = vsel %vm2737, %v2689, %v2736
    %v2739 = vand.u32 %v2738, 65535
    %v2740 = vshra.s32 %v2738, 16
    %v2741 = vcvt.s32.f32 %v2739
    %v2742 = vcvt.s32.f32 %v2740
    %2743 = vmin.xlane.f32.xlu0 %v2742
    %v2744 = vpop.xlane.xlu0 %2743
    %vm2745 = vcmp.eq.f32.partialorder %v2742, %v2744
    %v2746 = vsel %vm2745, %v2741, inf
    %2747 = vmin.xlane.f32.xlu0 %v2746
    %v2748 = vpop.xlane.xlu0 %2747
    %v2749 = vcvt.f32.s32 %v2748
    %v2750 = vcvt.f32.s32 %v2744
    %v2751 = vshll.u32 %v2750, 16
    %v2752 = vadd.s32 %v2751, %v2749
    %v2753 = vsel %vm350, %v2692, 2147483647
    %vm2754 = vcmp.lt.s32.totalorder %v2691, %v2753
    %v2755 = vsel %vm2754, %v2691, %v2753
    %v2756 = vand.u32 %v2755, 65535
    %v2757 = vshra.s32 %v2755, 16
    %v2758 = vcvt.s32.f32 %v2756
    %v2759 = vcvt.s32.f32 %v2757
    %2760 = vmin.xlane.f32.xlu0 %v2759
    %v2761 = vpop.xlane.xlu0 %2760
    %vm2762 = vcmp.eq.f32.partialorder %v2759, %v2761
    %v2763 = vsel %vm2762, %v2758, inf
    %2764 = vmin.xlane.f32.xlu0 %v2763
    %v2765 = vpop.xlane.xlu0 %2764
    %v2766 = vcvt.f32.s32 %v2765
    %v2767 = vcvt.f32.s32 %v2761
    %v2768 = vshll.u32 %v2767, 16
    %v2769 = vadd.s32 %v2768, %v2766
    %v2770 = vsel %vm350, %v2694, 2147483647
    %vm2771 = vcmp.lt.s32.totalorder %v2693, %v2770
    %v2772 = vsel %vm2771, %v2693, %v2770
    %v2773 = vand.u32 %v2772, 65535
    %v2774 = vshra.s32 %v2772, 16
    %v2775 = vcvt.s32.f32 %v2773
    %v2776 = vcvt.s32.f32 %v2774
    %2777 = vmin.xlane.f32.xlu0 %v2776
    %v2778 = vpop.xlane.xlu0 %2777
    %vm2779 = vcmp.eq.f32.partialorder %v2776, %v2778
    %v2780 = vsel %vm2779, %v2775, inf
    %2781 = vmin.xlane.f32.xlu0 %v2780
    %v2782 = vpop.xlane.xlu0 %2781
    %v2783 = vcvt.f32.s32 %v2782
    %v2784 = vcvt.f32.s32 %v2778
    %v2785 = vshll.u32 %v2784, 16
    %v2786 = vadd.s32 %v2785, %v2783
    %v2787 = vsel %vm350, %v2696, 2147483647
    %vm2788 = vcmp.lt.s32.totalorder %v2695, %v2787
    %v2789 = vsel %vm2788, %v2695, %v2787
    %v2790 = vand.u32 %v2789, 65535
    %v2791 = vshra.s32 %v2789, 16
    %v2792 = vcvt.s32.f32 %v2790
    %v2793 = vcvt.s32.f32 %v2791
    %2794 = vmin.xlane.f32.xlu0 %v2793
    %v2795 = vpop.xlane.xlu0 %2794
    %vm2796 = vcmp.eq.f32.partialorder %v2793, %v2795
    %v2797 = vsel %vm2796, %v2792, inf
    %2798 = vmin.xlane.f32.xlu0 %v2797
    %v2799 = vpop.xlane.xlu0 %2798
    %v2800 = vcvt.f32.s32 %v2799
    %v2801 = vcvt.f32.s32 %v2795
    %v2802 = vshll.u32 %v2801, 16
    %v2803 = vadd.s32 %v2802, %v2800
    %v2804 = vsel %vm350, %v2698, 2147483647
    %vm2805 = vcmp.lt.s32.totalorder %v2697, %v2804
    %v2806 = vsel %vm2805, %v2697, %v2804
    %v2807 = vand.u32 %v2806, 65535
    %v2808 = vshra.s32 %v2806, 16
    %v2809 = vcvt.s32.f32 %v2807
    %v2810 = vcvt.s32.f32 %v2808
    %2811 = vmin.xlane.f32.xlu0 %v2810
    %v2812 = vpop.xlane.xlu0 %2811
    %vm2813 = vcmp.eq.f32.partialorder %v2810, %v2812
    %v2814 = vsel %vm2813, %v2809, inf
    %2815 = vmin.xlane.f32.xlu0 %v2814
    %v2816 = vpop.xlane.xlu0 %2815
    %v2817 = vcvt.f32.s32 %v2816
    %v2818 = vcvt.f32.s32 %v2812
    %v2819 = vshll.u32 %v2818, 16
    %v2820 = vadd.s32 %v2819, %v2817
    %v2821 = vsel %vm350, %v2700, 2147483647
    %vm2822 = vcmp.lt.s32.totalorder %v2699, %v2821
    %v2823 = vsel %vm2822, %v2699, %v2821
    %v2824 = vand.u32 %v2823, 65535
    %v2825 = vshra.s32 %v2823, 16
    %v2826 = vcvt.s32.f32 %v2824
    %v2827 = vcvt.s32.f32 %v2825
    %2828 = vmin.xlane.f32.xlu0 %v2827
    %v2829 = vpop.xlane.xlu0 %2828
    %vm2830 = vcmp.eq.f32.partialorder %v2827, %v2829
    %v2831 = vsel %vm2830, %v2826, inf
    %2832 = vmin.xlane.f32.xlu0 %v2831
    %v2833 = vpop.xlane.xlu0 %2832
    %v2834 = vcvt.f32.s32 %v2833
    %v2835 = vcvt.f32.s32 %v2829
    %v2836 = vshll.u32 %v2835, 16
    %v2837 = vadd.s32 %v2836, %v2834
    %v2838 = vsel %vm350, %v2702, 2147483647
    %vm2839 = vcmp.lt.s32.totalorder %v2701, %v2838
    %v2840 = vsel %vm2839, %v2701, %v2838
    %v2841 = vand.u32 %v2840, 65535
    %v2842 = vshra.s32 %v2840, 16
    %v2843 = vcvt.s32.f32 %v2841
    %v2844 = vcvt.s32.f32 %v2842
    %2845 = vmin.xlane.f32.xlu0 %v2844
    %v2846 = vpop.xlane.xlu0 %2845
    %vm2847 = vcmp.eq.f32.partialorder %v2844, %v2846
    %v2848 = vsel %vm2847, %v2843, inf
    %2849 = vmin.xlane.f32.xlu0 %v2848
    %v2850 = vpop.xlane.xlu0 %2849
    %v2851 = vcvt.f32.s32 %v2850
    %v2852 = vcvt.f32.s32 %v2846
    %v2853 = vshll.u32 %v2852, 16
    %v2854 = vadd.s32 %v2853, %v2851
    %v2855 = vsel %vm350, %v2704, 2147483647
    %vm2856 = vcmp.lt.s32.totalorder %v2703, %v2855
    %v2857 = vsel %vm2856, %v2703, %v2855
    %v2858 = vand.u32 %v2857, 65535
    %v2859 = vshra.s32 %v2857, 16
    %v2860 = vcvt.s32.f32 %v2858
    %v2861 = vcvt.s32.f32 %v2859
    %2862 = vmin.xlane.f32.xlu0 %v2861
    %v2863 = vpop.xlane.xlu0 %2862
    %vm2864 = vcmp.eq.f32.partialorder %v2861, %v2863
    %v2865 = vsel %vm2864, %v2860, inf
    %2866 = vmin.xlane.f32.xlu0 %v2865
    %v2867 = vpop.xlane.xlu0 %2866
    %v2868 = vcvt.f32.s32 %v2867
    %v2869 = vcvt.f32.s32 %v2863
    %v2870 = vshll.u32 %v2869, 16
    %v2871 = vadd.s32 %v2870, %v2868
    %v2872 = vsel %vm350, %v2706, 2147483647
    %vm2873 = vcmp.lt.s32.totalorder %v2705, %v2872
    %v2874 = vsel %vm2873, %v2705, %v2872
    %v2875 = vand.u32 %v2874, 65535
    %v2876 = vshra.s32 %v2874, 16
    %v2877 = vcvt.s32.f32 %v2875
    %v2878 = vcvt.s32.f32 %v2876
    %2879 = vmin.xlane.f32.xlu0 %v2878
    %v2880 = vpop.xlane.xlu0 %2879
    %vm2881 = vcmp.eq.f32.partialorder %v2878, %v2880
    %v2882 = vsel %vm2881, %v2877, inf
    %2883 = vmin.xlane.f32.xlu0 %v2882
    %v2884 = vpop.xlane.xlu0 %2883
    %v2885 = vcvt.f32.s32 %v2884
    %v2886 = vcvt.f32.s32 %v2880
    %v2887 = vshll.u32 %v2886, 16
    %v2888 = vadd.s32 %v2887, %v2885
    %v2889 = vsel %vm350, %v2708, 2147483647
    %vm2890 = vcmp.lt.s32.totalorder %v2707, %v2889
    %v2891 = vsel %vm2890, %v2707, %v2889
    %v2892 = vand.u32 %v2891, 65535
    %v2893 = vshra.s32 %v2891, 16
    %v2894 = vcvt.s32.f32 %v2892
    %v2895 = vcvt.s32.f32 %v2893
    %2896 = vmin.xlane.f32.xlu0 %v2895
    %v2897 = vpop.xlane.xlu0 %2896
    %vm2898 = vcmp.eq.f32.partialorder %v2895, %v2897
    %v2899 = vsel %vm2898, %v2894, inf
    %2900 = vmin.xlane.f32.xlu0 %v2899
    %v2901 = vpop.xlane.xlu0 %2900
    %v2902 = vcvt.f32.s32 %v2901
    %v2903 = vcvt.f32.s32 %v2897
    %v2904 = vshll.u32 %v2903, 16
    %v2905 = vadd.s32 %v2904, %v2902
    %v2906 = vsel %vm350, %v2710, 2147483647
    %vm2907 = vcmp.lt.s32.totalorder %v2709, %v2906
    %v2908 = vsel %vm2907, %v2709, %v2906
    %v2909 = vand.u32 %v2908, 65535
    %v2910 = vshra.s32 %v2908, 16
    %v2911 = vcvt.s32.f32 %v2909
    %v2912 = vcvt.s32.f32 %v2910
    %2913 = vmin.xlane.f32.xlu0 %v2912
    %v2914 = vpop.xlane.xlu0 %2913
    %vm2915 = vcmp.eq.f32.partialorder %v2912, %v2914
    %v2916 = vsel %vm2915, %v2911, inf
    %2917 = vmin.xlane.f32.xlu0 %v2916
    %v2918 = vpop.xlane.xlu0 %2917
    %v2919 = vcvt.f32.s32 %v2918
    %v2920 = vcvt.f32.s32 %v2914
    %v2921 = vshll.u32 %v2920, 16
    %v2922 = vadd.s32 %v2921, %v2919
    %v2923 = vsel %vm350, %v2712, 2147483647
    %vm2924 = vcmp.lt.s32.totalorder %v2711, %v2923
    %v2925 = vsel %vm2924, %v2711, %v2923
    %v2926 = vand.u32 %v2925, 65535
    %v2927 = vshra.s32 %v2925, 16
    %v2928 = vcvt.s32.f32 %v2926
    %v2929 = vcvt.s32.f32 %v2927
    %2930 = vmin.xlane.f32.xlu0 %v2929
    %v2931 = vpop.xlane.xlu0 %2930
    %vm2932 = vcmp.eq.f32.partialorder %v2929, %v2931
    %v2933 = vsel %vm2932, %v2928, inf
    %2934 = vmin.xlane.f32.xlu0 %v2933
    %v2935 = vpop.xlane.xlu0 %2934
    %v2936 = vcvt.f32.s32 %v2935
    %v2937 = vcvt.f32.s32 %v2931
    %v2938 = vshll.u32 %v2937, 16
    %v2939 = vadd.s32 %v2938, %v2936
    %v2940 = vsel %vm350, %v2714, 2147483647
    %vm2941 = vcmp.lt.s32.totalorder %v2713, %v2940
    %v2942 = vsel %vm2941, %v2713, %v2940
    %v2943 = vand.u32 %v2942, 65535
    %v2944 = vshra.s32 %v2942, 16
    %v2945 = vcvt.s32.f32 %v2943
    %v2946 = vcvt.s32.f32 %v2944
    %2947 = vmin.xlane.f32.xlu0 %v2946
    %v2948 = vpop.xlane.xlu0 %2947
    %vm2949 = vcmp.eq.f32.partialorder %v2946, %v2948
    %v2950 = vsel %vm2949, %v2945, inf
    %2951 = vmin.xlane.f32.xlu0 %v2950
    %v2952 = vpop.xlane.xlu0 %2951
    %v2953 = vcvt.f32.s32 %v2952
    %v2954 = vcvt.f32.s32 %v2948
    %v2955 = vshll.u32 %v2954, 16
    %v2956 = vadd.s32 %v2955, %v2953
    %v2957 = vsel %vm350, %v2716, 2147483647
    %vm2958 = vcmp.lt.s32.totalorder %v2715, %v2957
    %v2959 = vsel %vm2958, %v2715, %v2957
    %v2960 = vand.u32 %v2959, 65535
    %v2961 = vshra.s32 %v2959, 16
    %v2962 = vcvt.s32.f32 %v2960
    %v2963 = vcvt.s32.f32 %v2961
    %2964 = vmin.xlane.f32.xlu0 %v2963
    %v2965 = vpop.xlane.xlu0 %2964
    %vm2966 = vcmp.eq.f32.partialorder %v2963, %v2965
    %v2967 = vsel %vm2966, %v2962, inf
    %2968 = vmin.xlane.f32.xlu0 %v2967
    %v2969 = vpop.xlane.xlu0 %2968
    %v2970 = vcvt.f32.s32 %v2969
    %v2971 = vcvt.f32.s32 %v2965
    %v2972 = vshll.u32 %v2971, 16
    %v2973 = vadd.s32 %v2972, %v2970
    %v2974 = vsel %vm350, %v2718, 2147483647
    %vm2975 = vcmp.lt.s32.totalorder %v2717, %v2974
    %v2976 = vsel %vm2975, %v2717, %v2974
    %v2977 = vand.u32 %v2976, 65535
    %v2978 = vshra.s32 %v2976, 16
    %v2979 = vcvt.s32.f32 %v2977
    %v2980 = vcvt.s32.f32 %v2978
    %2981 = vmin.xlane.f32.xlu0 %v2980
    %v2982 = vpop.xlane.xlu0 %2981
    %vm2983 = vcmp.eq.f32.partialorder %v2980, %v2982
    %v2984 = vsel %vm2983, %v2979, inf
    %2985 = vmin.xlane.f32.xlu0 %v2984
    %v2986 = vpop.xlane.xlu0 %2985
    %v2987 = vcvt.f32.s32 %v2986
    %v2988 = vcvt.f32.s32 %v2982
    %v2989 = vshll.u32 %v2988, 16
    %v2990 = vadd.s32 %v2989, %v2987
    %vm2991 = vcmp.eq.s32.totalorder %v348, %v2735
    %vm2992 = vcmp.eq.s32.totalorder %v349, %v2735
    %vm2993 = vcmp.eq.s32.totalorder %v348, %v2752
    %vm2994 = vcmp.eq.s32.totalorder %v349, %v2752
    %vm2995 = vcmp.eq.s32.totalorder %v348, %v2769
    %vm2996 = vcmp.eq.s32.totalorder %v349, %v2769
    %vm2997 = vcmp.eq.s32.totalorder %v348, %v2786
    %vm2998 = vcmp.eq.s32.totalorder %v349, %v2786
    %vm2999 = vcmp.eq.s32.totalorder %v348, %v2803
    %vm3000 = vcmp.eq.s32.totalorder %v349, %v2803
    %vm3001 = vcmp.eq.s32.totalorder %v348, %v2820
    %vm3002 = vcmp.eq.s32.totalorder %v349, %v2820
    %vm3003 = vcmp.eq.s32.totalorder %v348, %v2837
    %vm3004 = vcmp.eq.s32.totalorder %v349, %v2837
    %vm3005 = vcmp.eq.s32.totalorder %v348, %v2854
    %vm3006 = vcmp.eq.s32.totalorder %v349, %v2854
    %vm3007 = vcmp.eq.s32.totalorder %v348, %v2871
    %vm3008 = vcmp.eq.s32.totalorder %v349, %v2871
    %vm3009 = vcmp.eq.s32.totalorder %v348, %v2888
    %vm3010 = vcmp.eq.s32.totalorder %v349, %v2888
    %vm3011 = vcmp.eq.s32.totalorder %v348, %v2905
    %vm3012 = vcmp.eq.s32.totalorder %v349, %v2905
    %vm3013 = vcmp.eq.s32.totalorder %v348, %v2922
    %vm3014 = vcmp.eq.s32.totalorder %v349, %v2922
    %vm3015 = vcmp.eq.s32.totalorder %v348, %v2939
    %vm3016 = vcmp.eq.s32.totalorder %v349, %v2939
    %vm3017 = vcmp.eq.s32.totalorder %v348, %v2956
    %vm3018 = vcmp.eq.s32.totalorder %v349, %v2956
    %vm3019 = vcmp.eq.s32.totalorder %v348, %v2973
    %vm3020 = vcmp.eq.s32.totalorder %v349, %v2973
    %vm3021 = vcmp.eq.s32.totalorder %v348, %v2990
    %vm3022 = vcmp.eq.s32.totalorder %v349, %v2990
    %v3023 = vsel %vm2991, %v329, 0.0
    %v3024 = vsel %vm2992, %v331, 0.0
    %v3025 = vsel %vm2993, %v329, 0.0
    %v3026 = vsel %vm2994, %v332, 0.0
    %v3027 = vsel %vm2995, %v329, 0.0
    %v3028 = vsel %vm2996, %v333, 0.0
    %v3029 = vsel %vm2997, %v329, 0.0
    %v3030 = vsel %vm2998, %v334, 0.0
    %v3031 = vsel %vm2999, %v329, 0.0
    %v3032 = vsel %vm3000, %v335, 0.0
    %v3033 = vsel %vm3001, %v329, 0.0
    %v3034 = vsel %vm3002, %v336, 0.0
    %v3035 = vsel %vm3003, %v329, 0.0
    %v3036 = vsel %vm3004, %v337, 0.0
    %v3037 = vsel %vm3005, %v329, 0.0
    %v3038 = vsel %vm3006, %v338, 0.0
    %v3039 = vsel %vm3007, %v329, 0.0
    %v3040 = vsel %vm3008, %v339, 0.0
    %v3041 = vsel %vm3009, %v329, 0.0
    %v3042 = vsel %vm3010, %v340, 0.0
    %v3043 = vsel %vm3011, %v329, 0.0
    %v3044 = vsel %vm3012, %v341, 0.0
    %v3045 = vsel %vm3013, %v329, 0.0
    %v3046 = vsel %vm3014, %v342, 0.0
    %v3047 = vsel %vm3015, %v329, 0.0
    %v3048 = vsel %vm3016, %v343, 0.0
    %v3049 = vsel %vm3017, %v329, 0.0
    %v3050 = vsel %vm3018, %v344, 0.0
    %v3051 = vsel %vm3019, %v329, 0.0
    %v3052 = vsel %vm3020, %v345, 0.0
    %v3053 = vsel %vm3021, %v329, 0.0
    %v3054 = vsel %vm3022, %v346, 0.0
    %v3055 = vsel %vm350, %v3024, 0.0
    %v3056 = vadd.f32 %v3023, %v3055
    %3057 = vadd.xlane.f32.xlu0 %v3056
    %v3058 = vpop.xlane.xlu0 %3057
    %v3059 = vsel %vm350, %v3026, 0.0
    %v3060 = vadd.f32 %v3025, %v3059
    %3061 = vadd.xlane.f32.xlu0 %v3060
    %v3062 = vpop.xlane.xlu0 %3061
    %v3063 = vsel %vm350, %v3028, 0.0
    %v3064 = vadd.f32 %v3027, %v3063
    %3065 = vadd.xlane.f32.xlu0 %v3064
    %v3066 = vpop.xlane.xlu0 %3065
    %v3067 = vsel %vm350, %v3030, 0.0
    %v3068 = vadd.f32 %v3029, %v3067
    %3069 = vadd.xlane.f32.xlu0 %v3068
    %v3070 = vpop.xlane.xlu0 %3069
    %v3071 = vsel %vm350, %v3032, 0.0
    %v3072 = vadd.f32 %v3031, %v3071
    %3073 = vadd.xlane.f32.xlu0 %v3072
    %v3074 = vpop.xlane.xlu0 %3073
    %v3075 = vsel %vm350, %v3034, 0.0
    %v3076 = vadd.f32 %v3033, %v3075
    %3077 = vadd.xlane.f32.xlu0 %v3076
    %v3078 = vpop.xlane.xlu0 %3077
    %v3079 = vsel %vm350, %v3036, 0.0
    %v3080 = vadd.f32 %v3035, %v3079
    %3081 = vadd.xlane.f32.xlu0 %v3080
    %v3082 = vpop.xlane.xlu0 %3081
    %v3083 = vsel %vm350, %v3038, 0.0
    %v3084 = vadd.f32 %v3037, %v3083
    %3085 = vadd.xlane.f32.xlu0 %v3084
    %v3086 = vpop.xlane.xlu0 %3085
    %v3087 = vsel %vm350, %v3040, 0.0
    %v3088 = vadd.f32 %v3039, %v3087
    %3089 = vadd.xlane.f32.xlu0 %v3088
    %v3090 = vpop.xlane.xlu0 %3089
    %v3091 = vsel %vm350, %v3042, 0.0
    %v3092 = vadd.f32 %v3041, %v3091
    %3093 = vadd.xlane.f32.xlu0 %v3092
    %v3094 = vpop.xlane.xlu0 %3093
    %v3095 = vsel %vm350, %v3044, 0.0
    %v3096 = vadd.f32 %v3043, %v3095
    %3097 = vadd.xlane.f32.xlu0 %v3096
    %v3098 = vpop.xlane.xlu0 %3097
    %v3099 = vsel %vm350, %v3046, 0.0
    %v3100 = vadd.f32 %v3045, %v3099
    %3101 = vadd.xlane.f32.xlu0 %v3100
    %v3102 = vpop.xlane.xlu0 %3101
    %v3103 = vsel %vm350, %v3048, 0.0
    %v3104 = vadd.f32 %v3047, %v3103
    %3105 = vadd.xlane.f32.xlu0 %v3104
    %v3106 = vpop.xlane.xlu0 %3105
    %v3107 = vsel %vm350, %v3050, 0.0
    %v3108 = vadd.f32 %v3049, %v3107
    %3109 = vadd.xlane.f32.xlu0 %v3108
    %v3110 = vpop.xlane.xlu0 %3109
    %v3111 = vsel %vm350, %v3052, 0.0
    %v3112 = vadd.f32 %v3051, %v3111
    %3113 = vadd.xlane.f32.xlu0 %v3112
    %v3114 = vpop.xlane.xlu0 %3113
    %v3115 = vsel %vm350, %v3054, 0.0
    %v3116 = vadd.f32 %v3053, %v3115
    %3117 = vadd.xlane.f32.xlu0 %v3116
    %v3118 = vpop.xlane.xlu0 %3117
    %vm3119 = vcmask 7168
    %v3120 = vsel %vm3119, %v354, %v914
    %v3121 = vsel %vm3119, %v358, %v918
    %v3122 = vsel %vm3119, %v362, %v922
    %v3123 = vsel %vm3119, %v366, %v926
    %v3124 = vsel %vm3119, %v370, %v930
    %v3125 = vsel %vm3119, %v374, %v934
    %v3126 = vsel %vm3119, %v378, %v938
    %v3127 = vsel %vm3119, %v382, %v942
    %v3128 = vsel %vm3119, %v386, %v946
    %v3129 = vsel %vm3119, %v390, %v950
    %v3130 = vsel %vm3119, %v394, %v954
    %v3131 = vsel %vm3119, %v398, %v958
    %v3132 = vsel %vm3119, %v402, %v962
    %v3133 = vsel %vm3119, %v406, %v966
    %v3134 = vsel %vm3119, %v410, %v970
    %v3135 = vsel %vm3119, %v414, %v974
    %vm3136 = vcmask 15360
    %v3137 = vsel %vm3136, %v3120, %v1474
    %v3138 = vsel %vm3136, %v3121, %v1478
    %v3139 = vsel %vm3136, %v3122, %v1482
    %v3140 = vsel %vm3136, %v3123, %v1486
    %v3141 = vsel %vm3136, %v3124, %v1490
    %v3142 = vsel %vm3136, %v3125, %v1494
    %v3143 = vsel %vm3136, %v3126, %v1498
    %v3144 = vsel %vm3136, %v3127, %v1502
    %v3145 = vsel %vm3136, %v3128, %v1506
    %v3146 = vsel %vm3136, %v3129, %v1510
    %v3147 = vsel %vm3136, %v3130, %v1514
    %v3148 = vsel %vm3136, %v3131, %v1518
    %v3149 = vsel %vm3136, %v3132, %v1522
    %v3150 = vsel %vm3136, %v3133, %v1526
    %v3151 = vsel %vm3136, %v3134, %v1530
    %v3152 = vsel %vm3136, %v3135, %v1534
    %vm3153 = vcmask 23552
    %v3154 = vsel %vm3153, %v3137, %v2034
    %v3155 = vsel %vm3153, %v3138, %v2038
    %v3156 = vsel %vm3153, %v3139, %v2042
    %v3157 = vsel %vm3153, %v3140, %v2046
    %v3158 = vsel %vm3153, %v3141, %v2050
    %v3159 = vsel %vm3153, %v3142, %v2054
    %v3160 = vsel %vm3153, %v3143, %v2058
    %v3161 = vsel %vm3153, %v3144, %v2062
    %v3162 = vsel %vm3153, %v3145, %v2066
    %v3163 = vsel %vm3153, %v3146, %v2070
    %v3164 = vsel %vm3153, %v3147, %v2074
    %v3165 = vsel %vm3153, %v3148, %v2078
    %v3166 = vsel %vm3153, %v3149, %v2082
    %v3167 = vsel %vm3153, %v3150, %v2086
    %v3168 = vsel %vm3153, %v3151, %v2090
    %v3169 = vsel %vm3153, %v3152, %v2094
    %vm3170 = vcmask 31744
    %v3171 = vsel %vm3170, %v3154, %v2594
    %v3172 = vsel %vm3170, %v3155, %v2598
    %v3173 = vsel %vm3170, %v3156, %v2602
    %v3174 = vsel %vm3170, %v3157, %v2606
    %v3175 = vsel %vm3170, %v3158, %v2610
    %v3176 = vsel %vm3170, %v3159, %v2614
    %v3177 = vsel %vm3170, %v3160, %v2618
    %v3178 = vsel %vm3170, %v3161, %v2622
    %v3179 = vsel %vm3170, %v3162, %v2626
    %v3180 = vsel %vm3170, %v3163, %v2630
    %v3181 = vsel %vm3170, %v3164, %v2634
    %v3182 = vsel %vm3170, %v3165, %v2638
    %v3183 = vsel %vm3170, %v3166, %v2642
    %v3184 = vsel %vm3170, %v3167, %v2646
    %v3185 = vsel %vm3170, %v3168, %v2650
    %v3186 = vsel %vm3170, %v3169, %v2654
    %v3187 = vsel %vm3119, %v818, %v1378
    %v3188 = vsel %vm3119, %v822, %v1382
    %v3189 = vsel %vm3119, %v826, %v1386
    %v3190 = vsel %vm3119, %v830, %v1390
    %v3191 = vsel %vm3119, %v834, %v1394
    %v3192 = vsel %vm3119, %v838, %v1398
    %v3193 = vsel %vm3119, %v842, %v1402
    %v3194 = vsel %vm3119, %v846, %v1406
    %v3195 = vsel %vm3119, %v850, %v1410
    %v3196 = vsel %vm3119, %v854, %v1414
    %v3197 = vsel %vm3119, %v858, %v1418
    %v3198 = vsel %vm3119, %v862, %v1422
    %v3199 = vsel %vm3119, %v866, %v1426
    %v3200 = vsel %vm3119, %v870, %v1430
    %v3201 = vsel %vm3119, %v874, %v1434
    %v3202 = vsel %vm3119, %v878, %v1438
    %v3203 = vsel %vm3136, %v3187, %v1938
    %v3204 = vsel %vm3136, %v3188, %v1942
    %v3205 = vsel %vm3136, %v3189, %v1946
    %v3206 = vsel %vm3136, %v3190, %v1950
    %v3207 = vsel %vm3136, %v3191, %v1954
    %v3208 = vsel %vm3136, %v3192, %v1958
    %v3209 = vsel %vm3136, %v3193, %v1962
    %v3210 = vsel %vm3136, %v3194, %v1966
    %v3211 = vsel %vm3136, %v3195, %v1970
    %v3212 = vsel %vm3136, %v3196, %v1974
    %v3213 = vsel %vm3136, %v3197, %v1978
    %v3214 = vsel %vm3136, %v3198, %v1982
    %v3215 = vsel %vm3136, %v3199, %v1986
    %v3216 = vsel %vm3136, %v3200, %v1990
    %v3217 = vsel %vm3136, %v3201, %v1994
    %v3218 = vsel %vm3136, %v3202, %v1998
    %v3219 = vsel %vm3153, %v3203, %v2498
    %v3220 = vsel %vm3153, %v3204, %v2502
    %v3221 = vsel %vm3153, %v3205, %v2506
    %v3222 = vsel %vm3153, %v3206, %v2510
    %v3223 = vsel %vm3153, %v3207, %v2514
    %v3224 = vsel %vm3153, %v3208, %v2518
    %v3225 = vsel %vm3153, %v3209, %v2522
    %v3226 = vsel %vm3153, %v3210, %v2526
    %v3227 = vsel %vm3153, %v3211, %v2530
    %v3228 = vsel %vm3153, %v3212, %v2534
    %v3229 = vsel %vm3153, %v3213, %v2538
    %v3230 = vsel %vm3153, %v3214, %v2542
    %v3231 = vsel %vm3153, %v3215, %v2546
    %v3232 = vsel %vm3153, %v3216, %v2550
    %v3233 = vsel %vm3153, %v3217, %v2554
    %v3234 = vsel %vm3153, %v3218, %v2558
    %v3235 = vsel %vm3170, %v3219, %v3058
    %v3236 = vsel %vm3170, %v3220, %v3062
    %v3237 = vsel %vm3170, %v3221, %v3066
    %v3238 = vsel %vm3170, %v3222, %v3070
    %v3239 = vsel %vm3170, %v3223, %v3074
    %v3240 = vsel %vm3170, %v3224, %v3078
    %v3241 = vsel %vm3170, %v3225, %v3082
    %v3242 = vsel %vm3170, %v3226, %v3086
    %v3243 = vsel %vm3170, %v3227, %v3090
    %v3244 = vsel %vm3170, %v3228, %v3094
    %v3245 = vsel %vm3170, %v3229, %v3098
    %v3246 = vsel %vm3170, %v3230, %v3102
    %v3247 = vsel %vm3170, %v3231, %v3106
    %v3248 = vsel %vm3170, %v3232, %v3110
    %v3249 = vsel %vm3170, %v3233, %v3114
    %v3250 = vsel %vm3170, %v3234, %v3118
    %3251 = vst.msk [vmem:[#allocation2] sm:$0xff] %vm350, %v3171
    %3252 = vst.msk [vmem:[#allocation2 + $0x8] sm:$0xff] %vm350, %v3172
    %3253 = vst.msk [vmem:[#allocation2 + $0x10] sm:$0xff] %vm350, %v3173
    %3254 = vst.msk [vmem:[#allocation2 + $0x18] sm:$0xff] %vm350, %v3174
    %3255 = vst.msk [vmem:[#allocation2 + $0x20] sm:$0xff] %vm350, %v3175
    %3256 = vst.msk [vmem:[#allocation2 + $0x28] sm:$0xff] %vm350, %v3176
    %3257 = vst.msk [vmem:[#allocation2 + $0x30] sm:$0xff] %vm350, %v3177
    %3258 = vst.msk [vmem:[#allocation2 + $0x38] sm:$0xff] %vm350, %v3178
    %3259 = vst.msk [vmem:[#allocation2 + $0x40] sm:$0xff] %vm350, %v3179
    %3260 = vst.msk [vmem:[#allocation2 + $0x48] sm:$0xff] %vm350, %v3180
    %3261 = vst.msk [vmem:[#allocation2 + $0x50] sm:$0xff] %vm350, %v3181
    %3262 = vst.msk [vmem:[#allocation2 + $0x58] sm:$0xff] %vm350, %v3182
    %3263 = vst.msk [vmem:[#allocation2 + $0x60] sm:$0xff] %vm350, %v3183
    %3264 = vst.msk [vmem:[#allocation2 + $0x68] sm:$0xff] %vm350, %v3184
    %3265 = vst.msk [vmem:[#allocation2 + $0x70] sm:$0xff] %vm350, %v3185
    %3266 = vst.msk [vmem:[#allocation2 + $0x78] sm:$0xff] %vm350, %v3186
    %3267 = vst.msk [vmem:[#allocation3] sm:$0xff] %vm350, %v3235
    %3268 = vst.msk [vmem:[#allocation3 + $0x8] sm:$0xff] %vm350, %v3236
    %3269 = vst.msk [vmem:[#allocation3 + $0x10] sm:$0xff] %vm350, %v3237
    %3270 = vst.msk [vmem:[#allocation3 + $0x18] sm:$0xff] %vm350, %v3238
    %3271 = vst.msk [vmem:[#allocation3 + $0x20] sm:$0xff] %vm350, %v3239
    %3272 = vst.msk [vmem:[#allocation3 + $0x28] sm:$0xff] %vm350, %v3240
    %3273 = vst.msk [vmem:[#allocation3 + $0x30] sm:$0xff] %vm350, %v3241
    %3274 = vst.msk [vmem:[#allocation3 + $0x38] sm:$0xff] %vm350, %v3242
    %3275 = vst.msk [vmem:[#allocation3 + $0x40] sm:$0xff] %vm350, %v3243
    %3276 = vst.msk [vmem:[#allocation3 + $0x48] sm:$0xff] %vm350, %v3244
    %3277 = vst.msk [vmem:[#allocation3 + $0x50] sm:$0xff] %vm350, %v3245
    %3278 = vst.msk [vmem:[#allocation3 + $0x58] sm:$0xff] %vm350, %v3246
    %3279 = vst.msk [vmem:[#allocation3 + $0x60] sm:$0xff] %vm350, %v3247
    %3280 = vst.msk [vmem:[#allocation3 + $0x68] sm:$0xff] %vm350, %v3248
    %3281 = vst.msk [vmem:[#allocation3 + $0x70] sm:$0xff] %vm350, %v3249
    %3282 = vst.msk [vmem:[#allocation3 + $0x78] sm:$0xff] %vm350, %v3250
    // Predicated region
    $region22: #{tpu_custom_call.1} parent=1 // pred_check
      %p3283 = pneg %p18
    $region23: #{tpu_custom_call.1} parent=1 // pred_check_branch
      %3285 = sbr.rel (%p3283) target = $region25
    $region24: #{tpu_custom_call.1} parent=1 // pred_region
      %v3287 = vsel %vm350, 1.0, 0
      %v3290 = vsel %vm350, %v3235, 0
      %v3293 = vsel %vm350, %v3236, 0
      %v3296 = vsel %vm350, %v3237, 0
      %v3299 = vsel %vm350, %v3238, 0
      %v3302 = vsel %vm350, %v3239, 0
      %v3305 = vsel %vm350, %v3240, 0
      %v3308 = vsel %vm350, %v3241, 0
      %v3311 = vsel %vm350, %v3242, 0
      %v3314 = vsel %vm350, %v3243, 0
      %v3317 = vsel %vm350, %v3244, 0
      %v3320 = vsel %vm350, %v3245, 0
      %v3323 = vsel %vm350, %v3246, 0
      %v3326 = vsel %vm350, %v3247, 0
      %v3329 = vsel %vm350, %v3248, 0
      %v3332 = vsel %vm350, %v3249, 0
      %v3335 = vsel %vm350, %v3250, 0
      %3337 = vmatprep.subr.mxu0 0.0
      %3338 = vmatpush1.xpose.msra.mxu0 %v3335
      %3339 = vmatprep.subr.mxu0 0.0
      %3340 = vmatpush1.xpose.msra.mxu0 %v3332
      %3341 = vmatprep.subr.mxu0 0.0
      %3342 = vmatpush1.xpose.msra.mxu0 %v3329
      %3343 = vmatprep.subr.mxu0 0.0
      %3344 = vmatpush1.xpose.msra.mxu0 %v3326
      %3345 = vmatprep.subr.mxu0 0.0
      %3346 = vmatpush1.xpose.msra.mxu0 %v3323
      %3347 = vmatprep.subr.mxu0 0.0
      %3348 = vmatpush1.xpose.msra.mxu0 %v3320
      %3349 = vmatprep.subr.mxu0 0.0
      %3350 = vmatpush1.xpose.msra.mxu0 %v3317
      %3351 = vmatprep.subr.mxu0 0.0
      %3352 = vmatpush1.xpose.msra.mxu0 %v3314
      %3353 = vmatprep.subr.mxu0 0.0
      %3354 = vmatpush1.xpose.msra.mxu0 %v3311
      %3355 = vmatprep.subr.mxu0 0.0
      %3356 = vmatpush1.xpose.msra.mxu0 %v3308
      %3357 = vmatprep.subr.mxu0 0.0
      %3358 = vmatpush1.xpose.msra.mxu0 %v3305
      %3359 = vmatprep.subr.mxu0 0.0
      %3360 = vmatpush1.xpose.msra.mxu0 %v3302
      %3361 = vmatprep.subr.mxu0 0.0
      %3362 = vmatpush1.xpose.msra.mxu0 %v3299
      %3363 = vmatprep.subr.mxu0 0.0
      %3364 = vmatpush1.xpose.msra.mxu0 %v3296
      %3365 = vmatprep.subr.mxu0 0.0
      %3366 = vmatpush1.xpose.msra.mxu0 %v3293
      %3367 = vmatprep.subr.mxu0 0.0
      %3368 = vmatpush1.xpose.msra.mxu0 %v3290
      %3369 = vmatprep.subr.mxu0 0.0
      %3370 = vmatpush2.xpose.msra.mxu0 0.0
      %3371 = vmatprep.subr.mxu0 0.0
      %3372 = vmatpush2.xpose.msra.mxu0 0.0
      %3373 = vmatprep.subr.mxu0 0.0
      %3374 = vmatpush2.xpose.msra.mxu0 0.0
      %3375 = vmatprep.subr.mxu0 0.0
      %3376 = vmatpush2.xpose.msra.mxu0 0.0
      %3377 = vmatprep.subr.mxu0 0.0
      %3378 = vmatpush2.xpose.msra.mxu0 0.0
      %3379 = vmatprep.subr.mxu0 0.0
      %3380 = vmatpush2.xpose.msra.mxu0 0.0
      %3381 = vmatprep.subr.mxu0 0.0
      %3382 = vmatpush2.xpose.msra.mxu0 0.0
      %3383 = vmatprep.subr.mxu0 0.0
      %3384 = vmatpush2.xpose.msra.mxu0 0.0
      %3385 = vmatprep.subr.mxu0 0.0
      %3386 = vmatpush2.xpose.msra.mxu0 0.0
      %3387 = vmatprep.subr.mxu0 0.0
      %3388 = vmatpush2.xpose.msra.mxu0 0.0
      %3389 = vmatprep.subr.mxu0 0.0
      %3390 = vmatpush2.xpose.msra.mxu0 0.0
      %3391 = vmatprep.subr.mxu0 0.0
      %3392 = vmatpush2.xpose.msra.mxu0 0.0
      %3393 = vmatprep.subr.mxu0 0.0
      %3394 = vmatpush2.xpose.msra.mxu0 0.0
      %3395 = vmatprep.subr.mxu0 0.0
      %3396 = vmatpush2.xpose.msra.mxu0 0.0
      %3397 = vmatprep.subr.mxu0 0.0
      %3398 = vmatpush2.xpose.msra.mxu0 0.0
      %3399 = vmatprep.subr.mxu0 0.0
      %3400 = vmatpush2.xpose.msra.mxu0 0.0
      %3401 = vmatprep.mubr.f32.mxu0 0.0
      %3402 = vmatmul.mubr.f32.gmra.mxu0 %v3287
      %v3403 = vpop.f32.mrf.mxu0
      %v3404 = vadd.f32 0.0, %v3403
      %v3405 = vpop.f32.mrf.mxu0
      %3406 = vdwg.mxu0
      %v3407 = vmul.f32 %v3404, 0.2
      %3408 = vst [vmem:[#allocation4] sm:$0x1] %v3407
    $region25: #{tpu_custom_call.1} parent=1 // pred_fallthru
      _
    // Predicated region
    $region26: #{tpu_custom_call.1} parent=1 // pred_check
      _
    $region27: #{tpu_custom_call.1} parent=1 // pred_check_branch
      %3410 = sbr.rel (0) target = $region29
    $region28: #{tpu_custom_call.1} parent=1 // pred_region
      %s3412 = ssub.s32 16, 16
      %3413 = vsyncadd [#allocation5], %s3412
      %s3415 = sshll.u32 [#allocation4], 4
      %s3416 = int_to_ptr.vmem [resolvable:$true] %s3415
      %3418 = dma.vmem_to_hbm [thread:$0]  %s3416, 16, %s4, [#allocation5]
    $region29: #{tpu_custom_call.1} parent=1 // pred_fallthru
      _
    // Predicated region
    $region30: #{tpu_custom_call.1} parent=1 // pred_check
      _
    $region31: #{tpu_custom_call.1} parent=1 // pred_check_branch
      %3420 = sbr.rel (0) target = $region33
    $region32: #{tpu_custom_call.1} parent=1 // pred_region
      %3421 = dma.done [#allocation5], 16
    $region33: #{tpu_custom_call.1} parent=1 // pred_fallthru
      _
    %3422 = vsyncpa [#allocation5], 1

</llo_original>
